<compile_context>
chip_gen: v7x
topology: tpu7x:2x2x1
jax: 0.10.0
libtpu: 0.0.40
codegen_flags: <defaults>
</compile_context>

<pallas_src>
import math
import jax
import jax.numpy as jnp
from jax.experimental import pallas as pl
from jax.experimental.pallas import tpu as pltpu

DIM = 64
NUM_HEADS = 16
HEAD_DIM = DIM // NUM_HEADS          # 4
SCALE = HEAD_DIM ** (-0.5)           # qk_scale=None -> head_dim**-0.5
EPS = 1e-5                           # nn.LayerNorm default eps


def _layernorm(x, gamma, beta):
    mean = jnp.mean(x, axis=-1, keepdims=True)
    var = jnp.mean((x - mean) ** 2, axis=-1, keepdims=True)
    return (x - mean) * jax.lax.rsqrt(var + EPS) * gamma + beta


def _gelu_exact(x):
    # nn.GELU default = exact erf-based GELU.
    return 0.5 * x * (1.0 + jax.lax.erf(x * (1.0 / math.sqrt(2.0))))


def block_kernel(x_ref, wqkv_h_ref, wproj_h_ref, bproj_ref,
                 g1_ref, b1_ref, g2_ref, b2_ref,
                 wfc1_ref, bfc1_ref, wfc2_ref, bfc2_ref,
                 o_ref):
    x = x_ref[0]                                  # (N, C)
    N = x.shape[0]
    H, D = NUM_HEADS, HEAD_DIM

    # ---------------- attention branch (norm1 + GAU), head-batched ----------------
    y = _layernorm(x, g1_ref[...], b1_ref[...])   # norm1(x), (N, C)

    # One head-batched projection: (H, N, C) x (H, C, 3D) -> (H, N, 3D).
    y_b = jnp.broadcast_to(y, (H, N, DIM))
    qkv = jnp.einsum('hnc,hcd->hnd', y_b, wqkv_h_ref[...],
                     preferred_element_type=jnp.float32)               # (H, N, 3D)
    q = qkv[:, :, 0 * D:1 * D]                                         # (H, N, D)
    k = qkv[:, :, 1 * D:2 * D]
    v = qkv[:, :, 2 * D:3 * D]

    # Scores + softmax for all heads in one shot.
    s = jnp.einsum('hnd,hmd->hnm', q, k,
                   preferred_element_type=jnp.float32) * SCALE          # (H, N, N)
    s = s - jnp.max(s, axis=-1, keepdims=True)
    p = jnp.exp(s)
    p = p / jnp.sum(p, axis=-1, keepdims=True)                          # exact softmax

    ctx = jnp.einsum('hnm,hmd->hnd', p, v,
                     preferred_element_type=jnp.float32)                # (H, N, D)

    # Per-head slice of the proj weight, then reduce over heads: equivalent to
    # reshaping ctx to (N, C) and doing ctx @ wproj, but with no lane shuffles.
    attn_h = jnp.einsum('hnd,hdc->hnc', ctx, wproj_h_ref[...],
                        preferred_element_type=jnp.float32)             # (H, N, C)
    attn = jnp.sum(attn_h, axis=0) + bproj_ref[...]                     # (N, C)

    # GAU returns norm1(x) + attn; Block adds x on top (DropPath == identity).
    x1 = x + y + attn

    # ---------------- MLP branch (norm2 + GluLayer: a * gelu(b)) ----------------
    y2 = _layernorm(x1, g2_ref[...], b2_ref[...])
    a = jnp.dot(y2, wfc1_ref[...], preferred_element_type=jnp.float32) + bfc1_ref[...]
    b = jnp.dot(y2, wfc2_ref[...], preferred_element_type=jnp.float32) + bfc2_ref[...]
    o_ref[0] = x1 + a * _gelu_exact(b)


def block_forward(x, params):
    B, N, C = x.shape
    (wqkv, wproj, bproj, g1, b1, g2, b2, wfc1, bfc1, wfc2, bfc2) = params
    H, D = NUM_HEADS, HEAD_DIM

    # Host-side re-layout of attention weights into per-head form so the kernel
    # never slices 4-lane-wide columns out of VMEM:
    #   wqkv_h[h, c_in, part*D + d] = wqkv[c_in, part*C + h*D + d]
    wqkv_h = wqkv.reshape(C, 3, H, D).transpose(2, 0, 1, 3).reshape(H, C, 3 * D)
    #   wproj_h[h, d, c_out] = wproj[h*D + d, c_out]
    wproj_h = wproj.reshape(H, D, C)

    kernel_params = (wqkv_h, wproj_h, bproj, g1, b1, g2, b2,
                     wfc1, bfc1, wfc2, bfc2)

    def full_spec(arr):
        nd = arr.ndim
        return pl.BlockSpec(arr.shape, lambda b, _nd=nd: (0,) * _nd)

    in_specs = [pl.BlockSpec((1, N, C), lambda b: (b, 0, 0))] + [
        full_spec(p) for p in kernel_params
    ]
    out_spec = pl.BlockSpec((1, N, C), lambda b: (b, 0, 0))

    return pl.pallas_call(
        block_kernel,
        out_shape=jax.ShapeDtypeStruct((B, N, C), x.dtype),
        grid=(B,),
        in_specs=in_specs,
        out_specs=out_spec,
        compiler_params=pltpu.CompilerParams(
            dimension_semantics=("parallel",)),      # batch axis -> megacore on v7x
    )(x, *kernel_params)


# ---------------- pure-JAX reference (for correctness check only) ----------------
def block_ref(x, params):
    (wqkv, wproj, bproj, g1, b1, g2, b2, wfc1, bfc1, wfc2, bfc2) = params
    B, N, C = x.shape
    H, D = NUM_HEADS, HEAD_DIM

    def ln(v, g, b):
        m = v.mean(-1, keepdims=True)
        var = ((v - m) ** 2).mean(-1, keepdims=True)
        return (v - m) * jax.lax.rsqrt(var + EPS) * g + b

    y = ln(x, g1, b1)
    qkv = (y @ wqkv).reshape(B, N, 3, H, D).transpose(2, 0, 3, 1, 4)
    q, k, v = qkv[0], qkv[1], qkv[2]                       # (B, H, N, D)
    s = jnp.einsum('bhnd,bhmd->bhnm', q, k) * SCALE
    p = jax.nn.softmax(s, axis=-1)
    ctx = jnp.einsum('bhnm,bhmd->bhnd', p, v).transpose(0, 2, 1, 3).reshape(B, N, C)
    x1 = x + y + (ctx @ wproj + bproj)
    y2 = ln(x1, g2, b2)
    a = y2 @ wfc1 + bfc1
    b = y2 @ wfc2 + bfc2
    return x1 + a * _gelu_exact(b)


if __name__ == "__main__":
    B, N, C = 2, 8, DIM
    key = jax.random.PRNGKey(0)
    ks = jax.random.split(key, 12)
    s = 0.05
    params = (
        s * jax.random.normal(ks[0], (C, 3 * C), jnp.float32),    # qkv weight (qkv_bias=False)
        s * jax.random.normal(ks[1], (C, C), jnp.float32),        # proj weight
        s * jax.random.normal(ks[2], (1, C), jnp.float32),        # proj bias
        1.0 + s * jax.random.normal(ks[3], (1, C), jnp.float32),  # norm1 gamma
        s * jax.random.normal(ks[4], (1, C), jnp.float32),        # norm1 beta
        1.0 + s * jax.random.normal(ks[5], (1, C), jnp.float32),  # norm2 gamma
        s * jax.random.normal(ks[6], (1, C), jnp.float32),        # norm2 beta
        s * jax.random.normal(ks[7], (C, C), jnp.float32),        # fc1 weight
        s * jax.random.normal(ks[8], (1, C), jnp.float32),        # fc1 bias
        s * jax.random.normal(ks[9], (C, C), jnp.float32),        # fc2 weight
        s * jax.random.normal(ks[10], (1, C), jnp.float32),       # fc2 bias
    )
    x = jax.random.normal(ks[11], (B, N, C), jnp.float32)

    out = jax.block_until_ready(block_forward(x, params))
    ref = block_ref(x, params)
    assert out.shape == (B, N, C) and out.dtype == jnp.float32
    assert jnp.allclose(out, ref, atol=1e-4, rtol=1e-4), float(jnp.max(jnp.abs(out - ref)))
    print("KERNEL_OK")
</pallas_src>

<mosaic_0001>
module attributes {stable_mosaic.version = 11 : i64} {
  func.func @block_kernel(%arg0: i32, %arg1: memref<1x8x64xf32, #tpu.memory_space<vmem>>, %arg2: memref<16x64x12xf32, #tpu.memory_space<vmem>>, %arg3: memref<16x4x64xf32, #tpu.memory_space<vmem>>, %arg4: memref<1x64xf32, #tpu.memory_space<vmem>>, %arg5: memref<1x64xf32, #tpu.memory_space<vmem>>, %arg6: memref<1x64xf32, #tpu.memory_space<vmem>>, %arg7: memref<1x64xf32, #tpu.memory_space<vmem>>, %arg8: memref<1x64xf32, #tpu.memory_space<vmem>>, %arg9: memref<64x64xf32, #tpu.memory_space<vmem>>, %arg10: memref<1x64xf32, #tpu.memory_space<vmem>>, %arg11: memref<64x64xf32, #tpu.memory_space<vmem>>, %arg12: memref<1x64xf32, #tpu.memory_space<vmem>>, %arg13: memref<1x8x64xf32, #tpu.memory_space<vmem>>) attributes {dimension_semantics = [#tpu.dimension_semantics<parallel>], iteration_bounds = array<i64: 2>, scalar_prefetch = 0 : i64, scratch_operands = 0 : i64, tpu.core_type = #tpu.core_type<tc>, window_params = [{transform_indices = @transform_0, window_bounds = array<i64: 1, 8, 64>}, {pipeline_mode = #tpu.pipeline_mode<synchronous>, transform_indices = @transform_1, window_bounds = array<i64: 16, 64, 12>}, {pipeline_mode = #tpu.pipeline_mode<synchronous>, transform_indices = @transform_2, window_bounds = array<i64: 16, 4, 64>}, {pipeline_mode = #tpu.pipeline_mode<synchronous>, transform_indices = @transform_3, window_bounds = array<i64: 1, 64>}, {pipeline_mode = #tpu.pipeline_mode<synchronous>, transform_indices = @transform_4, window_bounds = array<i64: 1, 64>}, {pipeline_mode = #tpu.pipeline_mode<synchronous>, transform_indices = @transform_5, window_bounds = array<i64: 1, 64>}, {pipeline_mode = #tpu.pipeline_mode<synchronous>, transform_indices = @transform_6, window_bounds = array<i64: 1, 64>}, {pipeline_mode = #tpu.pipeline_mode<synchronous>, transform_indices = @transform_7, window_bounds = array<i64: 1, 64>}, {pipeline_mode = #tpu.pipeline_mode<synchronous>, transform_indices = @transform_8, window_bounds = array<i64: 64, 64>}, {pipeline_mode = #tpu.pipeline_mode<synchronous>, transform_indices = @transform_9, window_bounds = array<i64: 1, 64>}, {pipeline_mode = #tpu.pipeline_mode<synchronous>, transform_indices = @transform_10, window_bounds = array<i64: 64, 64>}, {pipeline_mode = #tpu.pipeline_mode<synchronous>, transform_indices = @transform_11, window_bounds = array<i64: 1, 64>}, {transform_indices = @transform_12, window_bounds = array<i64: 1, 8, 64>}]} {
    %c0 = arith.constant 0 : index
    %c0_0 = arith.constant 0 : index
    %c0_1 = arith.constant 0 : index
    %0 = vector.load %arg1[%c0, %c0_0, %c0_1] : memref<1x8x64xf32, #tpu.memory_space<vmem>>, vector<1x8x64xf32>
    %1 = vector.shape_cast %0 : vector<1x8x64xf32> to vector<8x64xf32>
    %c0_2 = arith.constant 0 : index
    %c0_3 = arith.constant 0 : index
    %2 = vector.load %arg5[%c0_2, %c0_3] : memref<1x64xf32, #tpu.memory_space<vmem>>, vector<1x64xf32>
    %c0_4 = arith.constant 0 : index
    %c0_5 = arith.constant 0 : index
    %3 = vector.load %arg6[%c0_4, %c0_5] : memref<1x64xf32, #tpu.memory_space<vmem>>, vector<1x64xf32>
    %cst = arith.constant dense<0.000000e+00> : vector<8xf32>
    %4 = vector.multi_reduction <add>, %1, %cst [1] : vector<8x64xf32> to vector<8xf32>
    %5 = vector.shape_cast %4 : vector<8xf32> to vector<8x1xf32>
    %cst_6 = arith.constant 6.400000e+01 : f32
    %6 = vector.broadcast %cst_6 : f32 to vector<8x1xf32>
    %7 = arith.divf %5, %6 : vector<8x1xf32>
    %8 = vector.broadcast %7 : vector<8x1xf32> to vector<8x64xf32>
    %9 = arith.subf %1, %8 : vector<8x64xf32>
    %10 = arith.mulf %9, %9 : vector<8x64xf32>
    %cst_7 = arith.constant dense<0.000000e+00> : vector<8xf32>
    %11 = vector.multi_reduction <add>, %10, %cst_7 [1] : vector<8x64xf32> to vector<8xf32>
    %12 = vector.shape_cast %11 : vector<8xf32> to vector<8x1xf32>
    %cst_8 = arith.constant 6.400000e+01 : f32
    %13 = vector.broadcast %cst_8 : f32 to vector<8x1xf32>
    %14 = arith.divf %12, %13 : vector<8x1xf32>
    %15 = vector.broadcast %7 : vector<8x1xf32> to vector<8x64xf32>
    %16 = arith.subf %1, %15 : vector<8x64xf32>
    %cst_9 = arith.constant 9.99999974E-6 : f32
    %17 = vector.broadcast %cst_9 : f32 to vector<8x1xf32>
    %18 = arith.addf %14, %17 : vector<8x1xf32>
    %19 = math.rsqrt %18 : vector<8x1xf32>
    %20 = vector.broadcast %19 : vector<8x1xf32> to vector<8x64xf32>
    %21 = arith.mulf %16, %20 : vector<8x64xf32>
    %22 = vector.broadcast %2 : vector<1x64xf32> to vector<8x64xf32>
    %23 = arith.mulf %21, %22 : vector<8x64xf32>
    %24 = vector.broadcast %3 : vector<1x64xf32> to vector<8x64xf32>
    %25 = arith.addf %23, %24 : vector<8x64xf32>
    %26 = vector.shape_cast %25 : vector<8x64xf32> to vector<1x8x64xf32>
    %27 = vector.broadcast %26 : vector<1x8x64xf32> to vector<16x8x64xf32>
    %c0_10 = arith.constant 0 : index
    %c0_11 = arith.constant 0 : index
    %c0_12 = arith.constant 0 : index
    %28 = vector.load %arg2[%c0_10, %c0_11, %c0_12] : memref<16x64x12xf32, #tpu.memory_space<vmem>>, vector<16x64x12xf32>
    "tpu.trace_start"() <{level = 10 : i32, message = "hnc,hcd->hnd"}> : () -> ()
    %cst_13 = arith.constant dense<0.000000e+00> : vector<16x8x12xf32>
    %29 = tpu.matmul %27, %28, %cst_13 {dimension_numbers = #tpu.dot_dimension_numbers<[2], [1], [1], [2], [0, 0, 0, 1, 1, 2], [0], [0]>} : vector<16x8x64xf32>, vector<16x64x12xf32>, vector<16x8x12xf32> -> vector<16x8x12xf32>
    "tpu.trace_stop"() : () -> ()
    %30 = vector.extract_strided_slice %29 {offsets = [0, 0, 0], sizes = [16, 8, 4], strides = [1, 1, 1]} : vector<16x8x12xf32> to vector<16x8x4xf32>
    %31 = vector.extract_strided_slice %29 {offsets = [0, 0, 4], sizes = [16, 8, 4], strides = [1, 1, 1]} : vector<16x8x12xf32> to vector<16x8x4xf32>
    %32 = vector.extract_strided_slice %29 {offsets = [0, 0, 8], sizes = [16, 8, 4], strides = [1, 1, 1]} : vector<16x8x12xf32> to vector<16x8x4xf32>
    "tpu.trace_start"() <{level = 10 : i32, message = "hnd,hmd->hnm"}> : () -> ()
    %cst_14 = arith.constant dense<0.000000e+00> : vector<16x8x8xf32>
    %33 = tpu.matmul %30, %31, %cst_14 {dimension_numbers = #tpu.dot_dimension_numbers<[2], [2], [1], [1], [0, 0, 0, 1, 1, 1], [0], [0]>} : vector<16x8x4xf32>, vector<16x8x4xf32>, vector<16x8x8xf32> -> vector<16x8x8xf32>
    "tpu.trace_stop"() : () -> ()
    %cst_15 = arith.constant 5.000000e-01 : f32
    %34 = vector.broadcast %cst_15 : f32 to vector<16x8x8xf32>
    %35 = arith.mulf %33, %34 : vector<16x8x8xf32>
    %cst_16 = arith.constant dense<0xFF800000> : vector<16x8xf32>
    %36 = vector.multi_reduction <maximumf>, %35, %cst_16 [2] : vector<16x8x8xf32> to vector<16x8xf32>
    %37 = vector.shape_cast %36 : vector<16x8xf32> to vector<16x8x1xf32>
    %38 = vector.broadcast %37 : vector<16x8x1xf32> to vector<16x8x8xf32>
    %39 = arith.subf %35, %38 : vector<16x8x8xf32>
    %40 = math.exp %39 : vector<16x8x8xf32>
    %cst_17 = arith.constant dense<0.000000e+00> : vector<16x8xf32>
    %41 = vector.multi_reduction <add>, %40, %cst_17 [2] : vector<16x8x8xf32> to vector<16x8xf32>
    %42 = vector.shape_cast %41 : vector<16x8xf32> to vector<16x8x1xf32>
    %43 = vector.broadcast %42 : vector<16x8x1xf32> to vector<16x8x8xf32>
    %44 = arith.divf %40, %43 : vector<16x8x8xf32>
    "tpu.trace_start"() <{level = 10 : i32, message = "hnm,hmd->hnd"}> : () -> ()
    %cst_18 = arith.constant dense<0.000000e+00> : vector<16x8x4xf32>
    %45 = tpu.matmul %44, %32, %cst_18 {dimension_numbers = #tpu.dot_dimension_numbers<[2], [1], [1], [2], [0, 0, 0, 1, 1, 2], [0], [0]>} : vector<16x8x8xf32>, vector<16x8x4xf32>, vector<16x8x4xf32> -> vector<16x8x4xf32>
    "tpu.trace_stop"() : () -> ()
    %c0_19 = arith.constant 0 : index
    %c0_20 = arith.constant 0 : index
    %c0_21 = arith.constant 0 : index
    %46 = vector.load %arg3[%c0_19, %c0_20, %c0_21] : memref<16x4x64xf32, #tpu.memory_space<vmem>>, vector<16x4x64xf32>
    "tpu.trace_start"() <{level = 10 : i32, message = "hnd,hdc->hnc"}> : () -> ()
    %cst_22 = arith.constant dense<0.000000e+00> : vector<16x8x64xf32>
    %47 = tpu.matmul %45, %46, %cst_22 {dimension_numbers = #tpu.dot_dimension_numbers<[2], [1], [1], [2], [0, 0, 0, 1, 1, 2], [0], [0]>} : vector<16x8x4xf32>, vector<16x4x64xf32>, vector<16x8x64xf32> -> vector<16x8x64xf32>
    "tpu.trace_stop"() : () -> ()
    %cst_23 = arith.constant dense<0.000000e+00> : vector<8x64xf32>
    %48 = vector.multi_reduction <add>, %47, %cst_23 [0] : vector<16x8x64xf32> to vector<8x64xf32>
    %c0_24 = arith.constant 0 : index
    %c0_25 = arith.constant 0 : index
    %49 = vector.load %arg4[%c0_24, %c0_25] : memref<1x64xf32, #tpu.memory_space<vmem>>, vector<1x64xf32>
    %50 = vector.broadcast %49 : vector<1x64xf32> to vector<8x64xf32>
    %51 = arith.addf %48, %50 : vector<8x64xf32>
    %52 = arith.addf %1, %25 : vector<8x64xf32>
    %53 = arith.addf %52, %51 : vector<8x64xf32>
    %c0_26 = arith.constant 0 : index
    %c0_27 = arith.constant 0 : index
    %54 = vector.load %arg7[%c0_26, %c0_27] : memref<1x64xf32, #tpu.memory_space<vmem>>, vector<1x64xf32>
    %c0_28 = arith.constant 0 : index
    %c0_29 = arith.constant 0 : index
    %55 = vector.load %arg8[%c0_28, %c0_29] : memref<1x64xf32, #tpu.memory_space<vmem>>, vector<1x64xf32>
    %cst_30 = arith.constant dense<0.000000e+00> : vector<8xf32>
    %56 = vector.multi_reduction <add>, %53, %cst_30 [1] : vector<8x64xf32> to vector<8xf32>
    %57 = vector.shape_cast %56 : vector<8xf32> to vector<8x1xf32>
    %cst_31 = arith.constant 6.400000e+01 : f32
    %58 = vector.broadcast %cst_31 : f32 to vector<8x1xf32>
    %59 = arith.divf %57, %58 : vector<8x1xf32>
    %60 = vector.broadcast %59 : vector<8x1xf32> to vector<8x64xf32>
    %61 = arith.subf %53, %60 : vector<8x64xf32>
    %62 = arith.mulf %61, %61 : vector<8x64xf32>
    %cst_32 = arith.constant dense<0.000000e+00> : vector<8xf32>
    %63 = vector.multi_reduction <add>, %62, %cst_32 [1] : vector<8x64xf32> to vector<8xf32>
    %64 = vector.shape_cast %63 : vector<8xf32> to vector<8x1xf32>
    %cst_33 = arith.constant 6.400000e+01 : f32
    %65 = vector.broadcast %cst_33 : f32 to vector<8x1xf32>
    %66 = arith.divf %64, %65 : vector<8x1xf32>
    %67 = vector.broadcast %59 : vector<8x1xf32> to vector<8x64xf32>
    %68 = arith.subf %53, %67 : vector<8x64xf32>
    %cst_34 = arith.constant 9.99999974E-6 : f32
    %69 = vector.broadcast %cst_34 : f32 to vector<8x1xf32>
    %70 = arith.addf %66, %69 : vector<8x1xf32>
    %71 = math.rsqrt %70 : vector<8x1xf32>
    %72 = vector.broadcast %71 : vector<8x1xf32> to vector<8x64xf32>
    %73 = arith.mulf %68, %72 : vector<8x64xf32>
    %74 = vector.broadcast %54 : vector<1x64xf32> to vector<8x64xf32>
    %75 = arith.mulf %73, %74 : vector<8x64xf32>
    %76 = vector.broadcast %55 : vector<1x64xf32> to vector<8x64xf32>
    %77 = arith.addf %75, %76 : vector<8x64xf32>
    %c0_35 = arith.constant 0 : index
    %c0_36 = arith.constant 0 : index
    %78 = vector.load %arg9[%c0_35, %c0_36] : memref<64x64xf32, #tpu.memory_space<vmem>>, vector<64x64xf32>
    %cst_37 = arith.constant dense<0.000000e+00> : vector<8x64xf32>
    %79 = tpu.matmul %77, %78, %cst_37 {dimension_numbers = #tpu.dot_dimension_numbers<[1], [0], [0], [1], [0, 0, 1, 1], [], []>} : vector<8x64xf32>, vector<64x64xf32>, vector<8x64xf32> -> vector<8x64xf32>
    %c0_38 = arith.constant 0 : index
    %c0_39 = arith.constant 0 : index
    %80 = vector.load %arg10[%c0_38, %c0_39] : memref<1x64xf32, #tpu.memory_space<vmem>>, vector<1x64xf32>
    %81 = vector.broadcast %80 : vector<1x64xf32> to vector<8x64xf32>
    %82 = arith.addf %79, %81 : vector<8x64xf32>
    %c0_40 = arith.constant 0 : index
    %c0_41 = arith.constant 0 : index
    %83 = vector.load %arg11[%c0_40, %c0_41] : memref<64x64xf32, #tpu.memory_space<vmem>>, vector<64x64xf32>
    %cst_42 = arith.constant dense<0.000000e+00> : vector<8x64xf32>
    %84 = tpu.matmul %77, %83, %cst_42 {dimension_numbers = #tpu.dot_dimension_numbers<[1], [0], [0], [1], [0, 0, 1, 1], [], []>} : vector<8x64xf32>, vector<64x64xf32>, vector<8x64xf32> -> vector<8x64xf32>
    %c0_43 = arith.constant 0 : index
    %c0_44 = arith.constant 0 : index
    %85 = vector.load %arg12[%c0_43, %c0_44] : memref<1x64xf32, #tpu.memory_space<vmem>>, vector<1x64xf32>
    %86 = vector.broadcast %85 : vector<1x64xf32> to vector<8x64xf32>
    %87 = arith.addf %84, %86 : vector<8x64xf32>
    %cst_45 = arith.constant 5.000000e-01 : f32
    %88 = vector.broadcast %cst_45 : f32 to vector<8x64xf32>
    %89 = arith.mulf %88, %87 : vector<8x64xf32>
    %cst_46 = arith.constant 0.707106769 : f32
    %90 = vector.broadcast %cst_46 : f32 to vector<8x64xf32>
    %91 = arith.mulf %87, %90 : vector<8x64xf32>
    %92 = math.erf %91 : vector<8x64xf32>
    %cst_47 = arith.constant 1.000000e+00 : f32
    %93 = vector.broadcast %cst_47 : f32 to vector<8x64xf32>
    %94 = arith.addf %93, %92 : vector<8x64xf32>
    %95 = arith.mulf %89, %94 : vector<8x64xf32>
    %96 = arith.mulf %82, %95 : vector<8x64xf32>
    %97 = arith.addf %53, %96 : vector<8x64xf32>
    %c0_48 = arith.constant 0 : index
    %c0_49 = arith.constant 0 : index
    %c0_50 = arith.constant 0 : index
    %98 = vector.load %arg13[%c0_48, %c0_49, %c0_50] : memref<1x8x64xf32, #tpu.memory_space<vmem>>, vector<1x8x64xf32>
    %99 = vector.shape_cast %98 : vector<1x8x64xf32> to vector<8x64xf32>
    %100 = vector.shape_cast %97 : vector<8x64xf32> to vector<1x8x64xf32>
    tpu.vector_store %arg13[%c0_48, %c0_49, %c0_50], %100 {strides = array<i32>} : memref<1x8x64xf32, #tpu.memory_space<vmem>>, vector<1x8x64xf32>,
    return
  }
  func.func @transform_0(%arg0: i32) -> (i32, i32, i32) {
    %c0_i32 = arith.constant 0 : i32
    %c0_i32_0 = arith.constant 0 : i32
    %c0_i32_1 = arith.constant 0 : i32
    return %arg0, %c0_i32, %c0_i32_0 : i32, i32, i32
  }
  func.func @transform_1(%arg0: i32) -> (i32, i32, i32) {
    %c0_i32 = arith.constant 0 : i32
    %c0_i32_0 = arith.constant 0 : i32
    %c0_i32_1 = arith.constant 0 : i32
    %c0_i32_2 = arith.constant 0 : i32
    return %c0_i32, %c0_i32_0, %c0_i32_1 : i32, i32, i32
  }
  func.func @transform_2(%arg0: i32) -> (i32, i32, i32) {
    %c0_i32 = arith.constant 0 : i32
    %c0_i32_0 = arith.constant 0 : i32
    %c0_i32_1 = arith.constant 0 : i32
    %c0_i32_2 = arith.constant 0 : i32
    return %c0_i32, %c0_i32_0, %c0_i32_1 : i32, i32, i32
  }
  func.func @transform_3(%arg0: i32) -> (i32, i32) {
    %c0_i32 = arith.constant 0 : i32
    %c0_i32_0 = arith.constant 0 : i32
    %c0_i32_1 = arith.constant 0 : i32
    return %c0_i32, %c0_i32_0 : i32, i32
  }
  func.func @transform_4(%arg0: i32) -> (i32, i32) {
    %c0_i32 = arith.constant 0 : i32
    %c0_i32_0 = arith.constant 0 : i32
    %c0_i32_1 = arith.constant 0 : i32
    return %c0_i32, %c0_i32_0 : i32, i32
  }
  func.func @transform_5(%arg0: i32) -> (i32, i32) {
    %c0_i32 = arith.constant 0 : i32
    %c0_i32_0 = arith.constant 0 : i32
    %c0_i32_1 = arith.constant 0 : i32
    return %c0_i32, %c0_i32_0 : i32, i32
  }
  func.func @transform_6(%arg0: i32) -> (i32, i32) {
    %c0_i32 = arith.constant 0 : i32
    %c0_i32_0 = arith.constant 0 : i32
    %c0_i32_1 = arith.constant 0 : i32
    return %c0_i32, %c0_i32_0 : i32, i32
  }
  func.func @transform_7(%arg0: i32) -> (i32, i32) {
    %c0_i32 = arith.constant 0 : i32
    %c0_i32_0 = arith.constant 0 : i32
    %c0_i32_1 = arith.constant 0 : i32
    return %c0_i32, %c0_i32_0 : i32, i32
  }
  func.func @transform_8(%arg0: i32) -> (i32, i32) {
    %c0_i32 = arith.constant 0 : i32
    %c0_i32_0 = arith.constant 0 : i32
    %c0_i32_1 = arith.constant 0 : i32
    return %c0_i32, %c0_i32_0 : i32, i32
  }
  func.func @transform_9(%arg0: i32) -> (i32, i32) {
    %c0_i32 = arith.constant 0 : i32
    %c0_i32_0 = arith.constant 0 : i32
    %c0_i32_1 = arith.constant 0 : i32
    return %c0_i32, %c0_i32_0 : i32, i32
  }
  func.func @transform_10(%arg0: i32) -> (i32, i32) {
    %c0_i32 = arith.constant 0 : i32
    %c0_i32_0 = arith.constant 0 : i32
    %c0_i32_1 = arith.constant 0 : i32
    return %c0_i32, %c0_i32_0 : i32, i32
  }
  func.func @transform_11(%arg0: i32) -> (i32, i32) {
    %c0_i32 = arith.constant 0 : i32
    %c0_i32_0 = arith.constant 0 : i32
    %c0_i32_1 = arith.constant 0 : i32
    return %c0_i32, %c0_i32_0 : i32, i32
  }
  func.func @transform_12(%arg0: i32) -> (i32, i32, i32) {
    %c0_i32 = arith.constant 0 : i32
    %c0_i32_0 = arith.constant 0 : i32
    %c0_i32_1 = arith.constant 0 : i32
    return %arg0, %c0_i32, %c0_i32_0 : i32, i32, i32
  }
}

</mosaic_0001>

<llo_original>
// kernel: tpu_custom_call.1
$region0: #{tpu_custom_call.1}
  #allocation0 [shape = 'u32[]', space=smem, size = 0x4, offset = 0x4, fixed_abs, tag = 'smem constant byte address 0x4 - core index']
  #allocation1 [shape = 'u32[144,128]{1,0:T(1,128)}', space=vmem, size = 0x12000, scoped, tag = 'internal scratch']
  %s0 = inlined_call_operand.vmem [shape: f32[2,8,64], index: 0, kind: input, shape index: {}]
  %s1 = inlined_call_operand.vmem [shape: f32[16,64,12], index: 1, kind: input, shape index: {}]
  %s2 = inlined_call_operand.vmem [shape: f32[16,4,64], index: 2, kind: input, shape index: {}]
  %s3 = inlined_call_operand.vmem [shape: f32[1,64], index: 3, kind: input, shape index: {}]
  %s4 = inlined_call_operand.vmem [shape: f32[1,64], index: 4, kind: input, shape index: {}]
  %s5 = inlined_call_operand.vmem [shape: f32[1,64], index: 5, kind: input, shape index: {}]
  %s6 = inlined_call_operand.vmem [shape: f32[1,64], index: 6, kind: input, shape index: {}]
  %s7 = inlined_call_operand.vmem [shape: f32[1,64], index: 7, kind: input, shape index: {}]
  %s8 = inlined_call_operand.vmem [shape: f32[64,64], index: 8, kind: input, shape index: {}]
  %s9 = inlined_call_operand.vmem [shape: f32[1,64], index: 9, kind: input, shape index: {}]
  %s10 = inlined_call_operand.vmem [shape: f32[64,64], index: 10, kind: input, shape index: {}]
  %s11 = inlined_call_operand.vmem [shape: f32[1,64], index: 11, kind: input, shape index: {}]
  %s12 = inlined_call_operand.hbm [shape: f32[2,8,64], index: 12, kind: output, shape index: {}]
  %s13 = sld [smem:[#allocation0]]
  $region81: #{tpu_custom_call.1} parent=0
    _
  %s15 = ssub.s32 1, %s13
  %s16 = scalar_select 0, %s15, %s13
  $region1: #{tpu_custom_call.1} parent=0
    #allocation2 [shape = 'u8[8192]{0}', space=vmem, size = 0x2000, scoped, tag = 'output window, operand 0']
    #allocation3 [shape = 's32[2]{0}', space=sflag, size = 0x8, scoped, tag = 'scoped memory for tpu_custom_call.1']
    %17 = vsyncpa [#allocation3], 0
    %s18 = scalar_lea.sflag [#allocation3], 1
    %19 = vsyncpa %s18, 0
    loop: start=0, step=1, limit=4
    $region2: #{tpu_custom_call.1} parent=1 // loop_pre_header
      _
    $region3: #{tpu_custom_call.1} parent=1 // loop_header
      %s21 = sphi 0, %s25
      %p22 = scmp.ge.s32.totalorder %s21, 4
      %s31 = sphi 0, %s33
      %s34 = sphi 0, %s31
      %s35 = sphi 0, %s34
      %s51 = sphi 0, %s35
      %s55 = sphi 0, %s55
      %s57 = sphi 0, %s55
      %s58 = sphi 0, %s57
      %s72 = sphi 0, %s58
      %s76 = sphi 0, %s76
      %s78 = sphi 0, %s76
      %s79 = sphi 0, %s78
      %s93 = sphi 0, %s79
      %s97 = sphi 0, %s97
      %s99 = sphi 0, %s97
      %s100 = sphi 0, %s99
      %s114 = sphi 0, %s100
      %s118 = sphi 0, %s118
      %s120 = sphi 0, %s118
      %s121 = sphi 0, %s120
      %s135 = sphi 0, %s121
      %s139 = sphi 0, %s139
      %s141 = sphi 0, %s139
      %s142 = sphi 0, %s141
      %s156 = sphi 0, %s142
      %s160 = sphi 0, %s160
      %s162 = sphi 0, %s160
      %s163 = sphi 0, %s162
      %s177 = sphi 0, %s163
      %s181 = sphi 0, %s181
      %s183 = sphi 0, %s181
      %s184 = sphi 0, %s183
      %s198 = sphi 0, %s184
      %s202 = sphi 0, %s202
      %s204 = sphi 0, %s202
      %s205 = sphi 0, %s204
      %s219 = sphi 0, %s205
      %s223 = sphi 0, %s223
      %s225 = sphi 0, %s223
      %s226 = sphi 0, %s225
      %s240 = sphi 0, %s226
      %s244 = sphi 0, %s244
      %s246 = sphi 0, %s244
      %s247 = sphi 0, %s246
      %s261 = sphi 0, %s247
      %s265 = sphi 0, %s265
      %s267 = sphi 0, %s265
      %s268 = sphi 0, %s267
      %s282 = sphi 0, %s268
      %s288 = sphi 0, %s290
      %s291 = sphi 0, %s288
      %s292 = sphi 0, %s291
      %s308 = sphi 0, %s292
    $region4: #{tpu_custom_call.1} parent=1 // loop_header_branch
      %24 = sbr.rel (%p22) target = $region8
    $region5: #{tpu_custom_call.1} parent=1 // loop_body
      %s26 = ssub.s32 %s21, 1
      %s27 = ssub.s32 %s21, 2
      %s28 = sadd.s32 %s21, 1
      %s29 = ssub.s32 %s21, %s28
      %p30 = scmp.eq.s32.totalorder %s29, 0
      %s32 = sadd.s32 %s31, 1
      %s33 = scalar_select %p30, %s31, %s32
      %p36 = pneg %p30
      %p37 = scmp.eq.s32.totalorder %s21, 1
      %p38 = por %p36, %p37
      %p39 = scmp.ne.s32.totalorder %s31, %s34
      %p40 = scmp.eq.s32.totalorder %s21, 0
      %p41 = por %p39, %p40
      %p42 = scmp.ne.s32.totalorder %s31, %s34
      %p43 = scmp.eq.s32.totalorder %s26, 1
      %p44 = por %p42, %p43
      %p45 = scmp.ne.s32.totalorder %s34, %s35
      %p46 = scmp.eq.s32.totalorder %s26, 0
      %p47 = por %p45, %p46
      %p48 = scmp.ne.s32.totalorder %s34, %s35
      %p49 = scmp.eq.s32.totalorder %s27, 1
      %p50 = por %p48, %p49
      %p52 = scmp.ne.s32.totalorder %s35, %s51
      %p53 = scmp.eq.s32.totalorder %s27, 0
      %p54 = por %p52, %p53
      %s56 = sadd.s32 %s55, 1
      %p59 = scmp.eq.s32.totalorder %s21, 1
      %p60 = scmp.ne.s32.totalorder %s55, %s57
      %p61 = scmp.eq.s32.totalorder %s21, 0
      %p62 = por %p60, %p61
      %p63 = scmp.ne.s32.totalorder %s55, %s57
      %p64 = scmp.eq.s32.totalorder %s26, 1
      %p65 = por %p63, %p64
      %p66 = scmp.ne.s32.totalorder %s57, %s58
      %p67 = scmp.eq.s32.totalorder %s26, 0
      %p68 = por %p66, %p67
      %p69 = scmp.ne.s32.totalorder %s57, %s58
      %p70 = scmp.eq.s32.totalorder %s27, 1
      %p71 = por %p69, %p70
      %p73 = scmp.ne.s32.totalorder %s58, %s72
      %p74 = scmp.eq.s32.totalorder %s27, 0
      %p75 = por %p73, %p74
      %s77 = sadd.s32 %s76, 1
      %p80 = scmp.eq.s32.totalorder %s21, 1
      %p81 = scmp.ne.s32.totalorder %s76, %s78
      %p82 = scmp.eq.s32.totalorder %s21, 0
      %p83 = por %p81, %p82
      %p84 = scmp.ne.s32.totalorder %s76, %s78
      %p85 = scmp.eq.s32.totalorder %s26, 1
      %p86 = por %p84, %p85
      %p87 = scmp.ne.s32.totalorder %s78, %s79
      %p88 = scmp.eq.s32.totalorder %s26, 0
      %p89 = por %p87, %p88
      %p90 = scmp.ne.s32.totalorder %s78, %s79
      %p91 = scmp.eq.s32.totalorder %s27, 1
      %p92 = por %p90, %p91
      %p94 = scmp.ne.s32.totalorder %s79, %s93
      %p95 = scmp.eq.s32.totalorder %s27, 0
      %p96 = por %p94, %p95
      %s98 = sadd.s32 %s97, 1
      %p101 = scmp.eq.s32.totalorder %s21, 1
      %p102 = scmp.ne.s32.totalorder %s97, %s99
      %p103 = scmp.eq.s32.totalorder %s21, 0
      %p104 = por %p102, %p103
      %p105 = scmp.ne.s32.totalorder %s97, %s99
      %p106 = scmp.eq.s32.totalorder %s26, 1
      %p107 = por %p105, %p106
      %p108 = scmp.ne.s32.totalorder %s99, %s100
      %p109 = scmp.eq.s32.totalorder %s26, 0
      %p110 = por %p108, %p109
      %p111 = scmp.ne.s32.totalorder %s99, %s100
      %p112 = scmp.eq.s32.totalorder %s27, 1
      %p113 = por %p111, %p112
      %p115 = scmp.ne.s32.totalorder %s100, %s114
      %p116 = scmp.eq.s32.totalorder %s27, 0
      %p117 = por %p115, %p116
      %s119 = sadd.s32 %s118, 1
      %p122 = scmp.eq.s32.totalorder %s21, 1
      %p123 = scmp.ne.s32.totalorder %s118, %s120
      %p124 = scmp.eq.s32.totalorder %s21, 0
      %p125 = por %p123, %p124
      %p126 = scmp.ne.s32.totalorder %s118, %s120
      %p127 = scmp.eq.s32.totalorder %s26, 1
      %p128 = por %p126, %p127
      %p129 = scmp.ne.s32.totalorder %s120, %s121
      %p130 = scmp.eq.s32.totalorder %s26, 0
      %p131 = por %p129, %p130
      %p132 = scmp.ne.s32.totalorder %s120, %s121
      %p133 = scmp.eq.s32.totalorder %s27, 1
      %p134 = por %p132, %p133
      %p136 = scmp.ne.s32.totalorder %s121, %s135
      %p137 = scmp.eq.s32.totalorder %s27, 0
      %p138 = por %p136, %p137
      %s140 = sadd.s32 %s139, 1
      %p143 = scmp.eq.s32.totalorder %s21, 1
      %p144 = scmp.ne.s32.totalorder %s139, %s141
      %p145 = scmp.eq.s32.totalorder %s21, 0
      %p146 = por %p144, %p145
      %p147 = scmp.ne.s32.totalorder %s139, %s141
      %p148 = scmp.eq.s32.totalorder %s26, 1
      %p149 = por %p147, %p148
      %p150 = scmp.ne.s32.totalorder %s141, %s142
      %p151 = scmp.eq.s32.totalorder %s26, 0
      %p152 = por %p150, %p151
      %p153 = scmp.ne.s32.totalorder %s141, %s142
      %p154 = scmp.eq.s32.totalorder %s27, 1
      %p155 = por %p153, %p154
      %p157 = scmp.ne.s32.totalorder %s142, %s156
      %p158 = scmp.eq.s32.totalorder %s27, 0
      %p159 = por %p157, %p158
      %s161 = sadd.s32 %s160, 1
      %p164 = scmp.eq.s32.totalorder %s21, 1
      %p165 = scmp.ne.s32.totalorder %s160, %s162
      %p166 = scmp.eq.s32.totalorder %s21, 0
      %p167 = por %p165, %p166
      %p168 = scmp.ne.s32.totalorder %s160, %s162
      %p169 = scmp.eq.s32.totalorder %s26, 1
      %p170 = por %p168, %p169
      %p171 = scmp.ne.s32.totalorder %s162, %s163
      %p172 = scmp.eq.s32.totalorder %s26, 0
      %p173 = por %p171, %p172
      %p174 = scmp.ne.s32.totalorder %s162, %s163
      %p175 = scmp.eq.s32.totalorder %s27, 1
      %p176 = por %p174, %p175
      %p178 = scmp.ne.s32.totalorder %s163, %s177
      %p179 = scmp.eq.s32.totalorder %s27, 0
      %p180 = por %p178, %p179
      %s182 = sadd.s32 %s181, 1
      %p185 = scmp.eq.s32.totalorder %s21, 1
      %p186 = scmp.ne.s32.totalorder %s181, %s183
      %p187 = scmp.eq.s32.totalorder %s21, 0
      %p188 = por %p186, %p187
      %p189 = scmp.ne.s32.totalorder %s181, %s183
      %p190 = scmp.eq.s32.totalorder %s26, 1
      %p191 = por %p189, %p190
      %p192 = scmp.ne.s32.totalorder %s183, %s184
      %p193 = scmp.eq.s32.totalorder %s26, 0
      %p194 = por %p192, %p193
      %p195 = scmp.ne.s32.totalorder %s183, %s184
      %p196 = scmp.eq.s32.totalorder %s27, 1
      %p197 = por %p195, %p196
      %p199 = scmp.ne.s32.totalorder %s184, %s198
      %p200 = scmp.eq.s32.totalorder %s27, 0
      %p201 = por %p199, %p200
      %s203 = sadd.s32 %s202, 1
      %p206 = scmp.eq.s32.totalorder %s21, 1
      %p207 = scmp.ne.s32.totalorder %s202, %s204
      %p208 = scmp.eq.s32.totalorder %s21, 0
      %p209 = por %p207, %p208
      %p210 = scmp.ne.s32.totalorder %s202, %s204
      %p211 = scmp.eq.s32.totalorder %s26, 1
      %p212 = por %p210, %p211
      %p213 = scmp.ne.s32.totalorder %s204, %s205
      %p214 = scmp.eq.s32.totalorder %s26, 0
      %p215 = por %p213, %p214
      %p216 = scmp.ne.s32.totalorder %s204, %s205
      %p217 = scmp.eq.s32.totalorder %s27, 1
      %p218 = por %p216, %p217
      %p220 = scmp.ne.s32.totalorder %s205, %s219
      %p221 = scmp.eq.s32.totalorder %s27, 0
      %p222 = por %p220, %p221
      %s224 = sadd.s32 %s223, 1
      %p227 = scmp.eq.s32.totalorder %s21, 1
      %p228 = scmp.ne.s32.totalorder %s223, %s225
      %p229 = scmp.eq.s32.totalorder %s21, 0
      %p230 = por %p228, %p229
      %p231 = scmp.ne.s32.totalorder %s223, %s225
      %p232 = scmp.eq.s32.totalorder %s26, 1
      %p233 = por %p231, %p232
      %p234 = scmp.ne.s32.totalorder %s225, %s226
      %p235 = scmp.eq.s32.totalorder %s26, 0
      %p236 = por %p234, %p235
      %p237 = scmp.ne.s32.totalorder %s225, %s226
      %p238 = scmp.eq.s32.totalorder %s27, 1
      %p239 = por %p237, %p238
      %p241 = scmp.ne.s32.totalorder %s226, %s240
      %p242 = scmp.eq.s32.totalorder %s27, 0
      %p243 = por %p241, %p242
      %s245 = sadd.s32 %s244, 1
      %p248 = scmp.eq.s32.totalorder %s21, 1
      %p249 = scmp.ne.s32.totalorder %s244, %s246
      %p250 = scmp.eq.s32.totalorder %s21, 0
      %p251 = por %p249, %p250
      %p252 = scmp.ne.s32.totalorder %s244, %s246
      %p253 = scmp.eq.s32.totalorder %s26, 1
      %p254 = por %p252, %p253
      %p255 = scmp.ne.s32.totalorder %s246, %s247
      %p256 = scmp.eq.s32.totalorder %s26, 0
      %p257 = por %p255, %p256
      %p258 = scmp.ne.s32.totalorder %s246, %s247
      %p259 = scmp.eq.s32.totalorder %s27, 1
      %p260 = por %p258, %p259
      %p262 = scmp.ne.s32.totalorder %s247, %s261
      %p263 = scmp.eq.s32.totalorder %s27, 0
      %p264 = por %p262, %p263
      %s266 = sadd.s32 %s265, 1
      %p269 = scmp.eq.s32.totalorder %s21, 1
      %p270 = scmp.ne.s32.totalorder %s265, %s267
      %p271 = scmp.eq.s32.totalorder %s21, 0
      %p272 = por %p270, %p271
      %p273 = scmp.ne.s32.totalorder %s265, %s267
      %p274 = scmp.eq.s32.totalorder %s26, 1
      %p275 = por %p273, %p274
      %p276 = scmp.ne.s32.totalorder %s267, %s268
      %p277 = scmp.eq.s32.totalorder %s26, 0
      %p278 = por %p276, %p277
      %p279 = scmp.ne.s32.totalorder %s267, %s268
      %p280 = scmp.eq.s32.totalorder %s27, 1
      %p281 = por %p279, %p280
      %p283 = scmp.ne.s32.totalorder %s268, %s282
      %p284 = scmp.eq.s32.totalorder %s27, 0
      %p285 = por %p283, %p284
      %s286 = ssub.s32 %s21, %s28
      %p287 = scmp.eq.s32.totalorder %s286, 0
      %s289 = sadd.s32 %s288, 1
      %s290 = scalar_select %p287, %s288, %s289
      %p293 = pneg %p287
      %p294 = scmp.eq.s32.totalorder %s21, 1
      %p295 = por %p293, %p294
      %p296 = scmp.ne.s32.totalorder %s288, %s291
      %p297 = scmp.eq.s32.totalorder %s21, 0
      %p298 = por %p296, %p297
      %p299 = scmp.ne.s32.totalorder %s288, %s291
      %p300 = scmp.eq.s32.totalorder %s26, 1
      %p301 = por %p299, %p300
      %p302 = scmp.ne.s32.totalorder %s291, %s292
      %p303 = scmp.eq.s32.totalorder %s26, 0
      %p304 = por %p302, %p303
      %p305 = scmp.ne.s32.totalorder %s291, %s292
      %p306 = scmp.eq.s32.totalorder %s27, 1
      %p307 = por %p305, %p306
      %p309 = scmp.ne.s32.totalorder %s292, %s308
      %p310 = scmp.eq.s32.totalorder %s27, 0
      %p311 = por %p309, %p310
      %p312 = scmp.le.s32.totalorder 1, %s21
      %p313 = scmp.lt.s32.totalorder %s21, 3
      %p314 = pnand %p312, %p313
      %p315 = pneg %p314
      // Predicated region
      $region9: #{tpu_custom_call.1} parent=5 // pred_check
        _
      $region10: #{tpu_custom_call.1} parent=5 // pred_check_branch
        %317 = sbr.rel (%p314) target = $region12
      $region11: #{tpu_custom_call.1} parent=5 // pred_region
        %s318 = ssub.s32 %s21, 1
        // Predicated region
        $region13: #{tpu_custom_call.1} parent=11 // pred_check
          %p319 = pneg %p68
        $region14: #{tpu_custom_call.1} parent=11 // pred_check_branch
          %321 = sbr.rel (%p319) target = $region16
        $region15: #{tpu_custom_call.1} parent=11 // pred_region
          _
        $region16: #{tpu_custom_call.1} parent=11 // pred_fallthru
          _
        // Predicated region
        $region17: #{tpu_custom_call.1} parent=11 // pred_check
          %p322 = pneg %p89
        $region18: #{tpu_custom_call.1} parent=11 // pred_check_branch
          %324 = sbr.rel (%p322) target = $region20
        $region19: #{tpu_custom_call.1} parent=11 // pred_region
          _
        $region20: #{tpu_custom_call.1} parent=11 // pred_fallthru
          _
        // Predicated region
        $region21: #{tpu_custom_call.1} parent=11 // pred_check
          %p325 = pneg %p110
        $region22: #{tpu_custom_call.1} parent=11 // pred_check_branch
          %327 = sbr.rel (%p325) target = $region24
        $region23: #{tpu_custom_call.1} parent=11 // pred_region
          _
        $region24: #{tpu_custom_call.1} parent=11 // pred_fallthru
          _
        // Predicated region
        $region25: #{tpu_custom_call.1} parent=11 // pred_check
          %p328 = pneg %p131
        $region26: #{tpu_custom_call.1} parent=11 // pred_check_branch
          %330 = sbr.rel (%p328) target = $region28
        $region27: #{tpu_custom_call.1} parent=11 // pred_region
          _
        $region28: #{tpu_custom_call.1} parent=11 // pred_fallthru
          _
        // Predicated region
        $region29: #{tpu_custom_call.1} parent=11 // pred_check
          %p331 = pneg %p152
        $region30: #{tpu_custom_call.1} parent=11 // pred_check_branch
          %333 = sbr.rel (%p331) target = $region32
        $region31: #{tpu_custom_call.1} parent=11 // pred_region
          _
        $region32: #{tpu_custom_call.1} parent=11 // pred_fallthru
          _
        // Predicated region
        $region33: #{tpu_custom_call.1} parent=11 // pred_check
          %p334 = pneg %p173
        $region34: #{tpu_custom_call.1} parent=11 // pred_check_branch
          %336 = sbr.rel (%p334) target = $region36
        $region35: #{tpu_custom_call.1} parent=11 // pred_region
          _
        $region36: #{tpu_custom_call.1} parent=11 // pred_fallthru
          _
        // Predicated region
        $region37: #{tpu_custom_call.1} parent=11 // pred_check
          %p337 = pneg %p194
        $region38: #{tpu_custom_call.1} parent=11 // pred_check_branch
          %339 = sbr.rel (%p337) target = $region40
        $region39: #{tpu_custom_call.1} parent=11 // pred_region
          _
        $region40: #{tpu_custom_call.1} parent=11 // pred_fallthru
          _
        // Predicated region
        $region41: #{tpu_custom_call.1} parent=11 // pred_check
          %p340 = pneg %p215
        $region42: #{tpu_custom_call.1} parent=11 // pred_check_branch
          %342 = sbr.rel (%p340) target = $region44
        $region43: #{tpu_custom_call.1} parent=11 // pred_region
          _
        $region44: #{tpu_custom_call.1} parent=11 // pred_fallthru
          _
        // Predicated region
        $region45: #{tpu_custom_call.1} parent=11 // pred_check
          %p343 = pneg %p236
        $region46: #{tpu_custom_call.1} parent=11 // pred_check_branch
          %345 = sbr.rel (%p343) target = $region48
        $region47: #{tpu_custom_call.1} parent=11 // pred_region
          _
        $region48: #{tpu_custom_call.1} parent=11 // pred_fallthru
          _
        // Predicated region
        $region49: #{tpu_custom_call.1} parent=11 // pred_check
          %p346 = pneg %p257
        $region50: #{tpu_custom_call.1} parent=11 // pred_check_branch
          %348 = sbr.rel (%p346) target = $region52
        $region51: #{tpu_custom_call.1} parent=11 // pred_region
          _
        $region52: #{tpu_custom_call.1} parent=11 // pred_fallthru
          _
        // Predicated region
        $region53: #{tpu_custom_call.1} parent=11 // pred_check
          %p349 = pneg %p278
        $region54: #{tpu_custom_call.1} parent=11 // pred_check_branch
          %351 = sbr.rel (%p349) target = $region56
        $region55: #{tpu_custom_call.1} parent=11 // pred_region
          _
        $region56: #{tpu_custom_call.1} parent=11 // pred_fallthru
          _
      $region12: #{tpu_custom_call.1} parent=5 // pred_fallthru
        _
      %p352 = scmp.lt.s32.totalorder %s21, 2
      // Predicated region
      $region57: #{tpu_custom_call.1} parent=5 // pred_check
        %p353 = pneg %p352
      $region58: #{tpu_custom_call.1} parent=5 // pred_check_branch
        %355 = sbr.rel (%p353) target = $region60
      $region59: #{tpu_custom_call.1} parent=5 // pred_region
        // Predicated region
        $region61: #{tpu_custom_call.1} parent=59 // pred_check
          %p356 = pneg %p41
        $region62: #{tpu_custom_call.1} parent=59 // pred_check_branch
          %358 = sbr.rel (%p356) target = $region64
        $region63: #{tpu_custom_call.1} parent=59 // pred_region
          %p359 = scmp.lt.s32.totalorder %s21, 1
          %s360 = scalar_select %p359, %s21, 1
          %s361 = smul.addr %s360, 8
          %s362 = scalar_lea.vmem %s0, %s361
        $region64: #{tpu_custom_call.1} parent=59 // pred_fallthru
          _
      $region60: #{tpu_custom_call.1} parent=5 // pred_fallthru
        _
      %p363 = scmp.le.s32.totalorder 1, %s21
      %p364 = scmp.lt.s32.totalorder %s21, 3
      %p365 = pnand %p363, %p364
      %p366 = pneg %p365
      // Predicated region
      $region65: #{tpu_custom_call.1} parent=5 // pred_check
        _
      $region66: #{tpu_custom_call.1} parent=5 // pred_check_branch
        %368 = sbr.rel (%p365) target = $region68
      $region67: #{tpu_custom_call.1} parent=5 // pred_region
        %s369 = ssub.s32 %s21, 1
        %p370 = scmp.lt.s32.totalorder %s26, 1
        %s371 = scalar_select %p370, %s26, 1
        %s372 = smul.addr %s371, 8
        %s373 = scalar_lea.vmem %s0, %s372
        %p374 = pneg %p47
        %p375 = pneg %p44
        %p376 = pneg %p68
        %p377 = pneg %p65
        %p378 = pneg %p89
        %p379 = pneg %p86
        %p380 = pneg %p110
        %p381 = pneg %p107
        %p382 = pneg %p131
        %p383 = pneg %p128
        %p384 = pneg %p152
        %p385 = pneg %p149
        %p386 = pneg %p173
        %p387 = pneg %p170
        %p388 = pneg %p194
        %p389 = pneg %p191
        %p390 = pneg %p215
        %p391 = pneg %p212
        %p392 = pneg %p236
        %p393 = pneg %p233
        %p394 = pneg %p257
        %p395 = pneg %p254
        %p396 = pneg %p278
        %p397 = pneg %p275
        %p398 = pneg %p304
        %p399 = pneg %p301
        %s400 = sand.u32 %s291, 1
        %s401 = scalar_lea.sflag [#allocation3], %s400
        %s402 = sand.u32 %s291, 1
        %s403 = smul.addr %s402, 8
        %s404 = scalar_lea.vmem [#allocation2], %s403
        %p405 = scmp.lt.s32.totalorder %s26, 1
        %s406 = scalar_select %p405, %s26, 1
        %s407 = smul.addr %s406, 8
        %s408 = scalar_lea.vmem %s0, %s407
        %v409 = vld [vmem:[%s408] sm:$0xff]
        %v410 = vld [vmem:[%s4] sm:$0x1]
        %v411 = vld [vmem:[%s5] sm:$0x1]
        %vm412 = vcmask 523264
        %v413 = vsel %vm412, %v409, 0.0
        %414 = vadd.xlane.f32.xlu0 %v413
        %v415 = vpop.xlane.xlu0 %414
        %v416 = vrcp.pop 64.0
        %v417 = vmul.f32 %v415, %v416
        %v418 = vsub.f32 %v409, %v417
        %v419 = vmul.f32 %v418, %v418
        %v420 = vsel %vm412, %v419, 0.0
        %421 = vadd.xlane.f32.xlu0 %v420
        %v422 = vpop.xlane.xlu0 %421
        %v423 = vmul.f32 %v422, %v416
        %v424 = vadd.f32 %v423, 1e-05
        %v425 = vrsqrt.pop %v424
        %v426 = vmul.f32 %v418, %v425
        %v428 = vlaneseq
        %v429 = vshrl.u32 %v428, 7
        %v430 = vsub.s32 0, %v429
        %v431 = vrot.slane %v410, %v430
        %v433 = vmul.f32 %v426, %v431
        %v435 = vlaneseq
        %v436 = vshrl.u32 %v435, 7
        %v437 = vsub.s32 0, %v436
        %v438 = vrot.slane %v411, %v437
        %v440 = vadd.f32 %v433, %v438
        %v441 = vld [vmem:[%s1] sm:$0xff]
        %v442 = vld [vmem:[%s1 + $0x8] sm:$0xff]
        %v443 = vld [vmem:[%s1 + $0x10] sm:$0xff]
        %v444 = vld [vmem:[%s1 + $0x18] sm:$0xff]
        %v445 = vld [vmem:[%s1 + $0x20] sm:$0xff]
        %v446 = vld [vmem:[%s1 + $0x28] sm:$0xff]
        %v447 = vld [vmem:[%s1 + $0x30] sm:$0xff]
        %v448 = vld [vmem:[%s1 + $0x38] sm:$0xff]
        %v449 = vld [vmem:[%s1 + $0x40] sm:$0xff]
        %v450 = vld [vmem:[%s1 + $0x48] sm:$0xff]
        %v451 = vld [vmem:[%s1 + $0x50] sm:$0xff]
        %v452 = vld [vmem:[%s1 + $0x58] sm:$0xff]
        %v453 = vld [vmem:[%s1 + $0x60] sm:$0xff]
        %v454 = vld [vmem:[%s1 + $0x68] sm:$0xff]
        %v455 = vld [vmem:[%s1 + $0x70] sm:$0xff]
        %v456 = vld [vmem:[%s1 + $0x78] sm:$0xff]
        %v457 = vld [vmem:[%s1 + $0x80] sm:$0xff]
        %v458 = vld [vmem:[%s1 + $0x88] sm:$0xff]
        %v459 = vld [vmem:[%s1 + $0x90] sm:$0xff]
        %v460 = vld [vmem:[%s1 + $0x98] sm:$0xff]
        %v461 = vld [vmem:[%s1 + $0xa0] sm:$0xff]
        %v462 = vld [vmem:[%s1 + $0xa8] sm:$0xff]
        %v463 = vld [vmem:[%s1 + $0xb0] sm:$0xff]
        %v464 = vld [vmem:[%s1 + $0xb8] sm:$0xff]
        %v465 = vld [vmem:[%s1 + $0xc0] sm:$0xff]
        %v466 = vld [vmem:[%s1 + $0xc8] sm:$0xff]
        %v467 = vld [vmem:[%s1 + $0xd0] sm:$0xff]
        %v468 = vld [vmem:[%s1 + $0xd8] sm:$0xff]
        %v469 = vld [vmem:[%s1 + $0xe0] sm:$0xff]
        %v470 = vld [vmem:[%s1 + $0xe8] sm:$0xff]
        %v471 = vld [vmem:[%s1 + $0xf0] sm:$0xff]
        %v472 = vld [vmem:[%s1 + $0xf8] sm:$0xff]
        %v473 = vld [vmem:[%s1 + $0x100] sm:$0xff]
        %v474 = vld [vmem:[%s1 + $0x108] sm:$0xff]
        %v475 = vld [vmem:[%s1 + $0x110] sm:$0xff]
        %v476 = vld [vmem:[%s1 + $0x118] sm:$0xff]
        %v477 = vld [vmem:[%s1 + $0x120] sm:$0xff]
        %v478 = vld [vmem:[%s1 + $0x128] sm:$0xff]
        %v479 = vld [vmem:[%s1 + $0x130] sm:$0xff]
        %v480 = vld [vmem:[%s1 + $0x138] sm:$0xff]
        %v481 = vld [vmem:[%s1 + $0x140] sm:$0xff]
        %v482 = vld [vmem:[%s1 + $0x148] sm:$0xff]
        %v483 = vld [vmem:[%s1 + $0x150] sm:$0xff]
        %v484 = vld [vmem:[%s1 + $0x158] sm:$0xff]
        %v485 = vld [vmem:[%s1 + $0x160] sm:$0xff]
        %v486 = vld [vmem:[%s1 + $0x168] sm:$0xff]
        %v487 = vld [vmem:[%s1 + $0x170] sm:$0xff]
        %v488 = vld [vmem:[%s1 + $0x178] sm:$0xff]
        %v489 = vld [vmem:[%s1 + $0x180] sm:$0xff]
        %v490 = vld [vmem:[%s1 + $0x188] sm:$0xff]
        %v491 = vld [vmem:[%s1 + $0x190] sm:$0xff]
        %v492 = vld [vmem:[%s1 + $0x198] sm:$0xff]
        %v493 = vld [vmem:[%s1 + $0x1a0] sm:$0xff]
        %v494 = vld [vmem:[%s1 + $0x1a8] sm:$0xff]
        %v495 = vld [vmem:[%s1 + $0x1b0] sm:$0xff]
        %v496 = vld [vmem:[%s1 + $0x1b8] sm:$0xff]
        %v497 = vld [vmem:[%s1 + $0x1c0] sm:$0xff]
        %v498 = vld [vmem:[%s1 + $0x1c8] sm:$0xff]
        %v499 = vld [vmem:[%s1 + $0x1d0] sm:$0xff]
        %v500 = vld [vmem:[%s1 + $0x1d8] sm:$0xff]
        %v501 = vld [vmem:[%s1 + $0x1e0] sm:$0xff]
        %v502 = vld [vmem:[%s1 + $0x1e8] sm:$0xff]
        %v503 = vld [vmem:[%s1 + $0x1f0] sm:$0xff]
        %v504 = vld [vmem:[%s1 + $0x1f8] sm:$0xff]
        %v505 = vld [vmem:[%s1 + $0x200] sm:$0xff]
        %v506 = vld [vmem:[%s1 + $0x208] sm:$0xff]
        %v507 = vld [vmem:[%s1 + $0x210] sm:$0xff]
        %v508 = vld [vmem:[%s1 + $0x218] sm:$0xff]
        %v509 = vld [vmem:[%s1 + $0x220] sm:$0xff]
        %v510 = vld [vmem:[%s1 + $0x228] sm:$0xff]
        %v511 = vld [vmem:[%s1 + $0x230] sm:$0xff]
        %v512 = vld [vmem:[%s1 + $0x238] sm:$0xff]
        %v513 = vld [vmem:[%s1 + $0x240] sm:$0xff]
        %v514 = vld [vmem:[%s1 + $0x248] sm:$0xff]
        %v515 = vld [vmem:[%s1 + $0x250] sm:$0xff]
        %v516 = vld [vmem:[%s1 + $0x258] sm:$0xff]
        %v517 = vld [vmem:[%s1 + $0x260] sm:$0xff]
        %v518 = vld [vmem:[%s1 + $0x268] sm:$0xff]
        %v519 = vld [vmem:[%s1 + $0x270] sm:$0xff]
        %v520 = vld [vmem:[%s1 + $0x278] sm:$0xff]
        %v521 = vld [vmem:[%s1 + $0x280] sm:$0xff]
        %v522 = vld [vmem:[%s1 + $0x288] sm:$0xff]
        %v523 = vld [vmem:[%s1 + $0x290] sm:$0xff]
        %v524 = vld [vmem:[%s1 + $0x298] sm:$0xff]
        %v525 = vld [vmem:[%s1 + $0x2a0] sm:$0xff]
        %v526 = vld [vmem:[%s1 + $0x2a8] sm:$0xff]
        %v527 = vld [vmem:[%s1 + $0x2b0] sm:$0xff]
        %v528 = vld [vmem:[%s1 + $0x2b8] sm:$0xff]
        %v529 = vld [vmem:[%s1 + $0x2c0] sm:$0xff]
        %v530 = vld [vmem:[%s1 + $0x2c8] sm:$0xff]
        %v531 = vld [vmem:[%s1 + $0x2d0] sm:$0xff]
        %v532 = vld [vmem:[%s1 + $0x2d8] sm:$0xff]
        %v533 = vld [vmem:[%s1 + $0x2e0] sm:$0xff]
        %v534 = vld [vmem:[%s1 + $0x2e8] sm:$0xff]
        %v535 = vld [vmem:[%s1 + $0x2f0] sm:$0xff]
        %v536 = vld [vmem:[%s1 + $0x2f8] sm:$0xff]
        %v537 = vld [vmem:[%s1 + $0x300] sm:$0xff]
        %v538 = vld [vmem:[%s1 + $0x308] sm:$0xff]
        %v539 = vld [vmem:[%s1 + $0x310] sm:$0xff]
        %v540 = vld [vmem:[%s1 + $0x318] sm:$0xff]
        %v541 = vld [vmem:[%s1 + $0x320] sm:$0xff]
        %v542 = vld [vmem:[%s1 + $0x328] sm:$0xff]
        %v543 = vld [vmem:[%s1 + $0x330] sm:$0xff]
        %v544 = vld [vmem:[%s1 + $0x338] sm:$0xff]
        %v545 = vld [vmem:[%s1 + $0x340] sm:$0xff]
        %v546 = vld [vmem:[%s1 + $0x348] sm:$0xff]
        %v547 = vld [vmem:[%s1 + $0x350] sm:$0xff]
        %v548 = vld [vmem:[%s1 + $0x358] sm:$0xff]
        %v549 = vld [vmem:[%s1 + $0x360] sm:$0xff]
        %v550 = vld [vmem:[%s1 + $0x368] sm:$0xff]
        %v551 = vld [vmem:[%s1 + $0x370] sm:$0xff]
        %v552 = vld [vmem:[%s1 + $0x378] sm:$0xff]
        %v553 = vld [vmem:[%s1 + $0x380] sm:$0xff]
        %v554 = vld [vmem:[%s1 + $0x388] sm:$0xff]
        %v555 = vld [vmem:[%s1 + $0x390] sm:$0xff]
        %v556 = vld [vmem:[%s1 + $0x398] sm:$0xff]
        %v557 = vld [vmem:[%s1 + $0x3a0] sm:$0xff]
        %v558 = vld [vmem:[%s1 + $0x3a8] sm:$0xff]
        %v559 = vld [vmem:[%s1 + $0x3b0] sm:$0xff]
        %v560 = vld [vmem:[%s1 + $0x3b8] sm:$0xff]
        %v561 = vld [vmem:[%s1 + $0x3c0] sm:$0xff]
        %v562 = vld [vmem:[%s1 + $0x3c8] sm:$0xff]
        %v563 = vld [vmem:[%s1 + $0x3d0] sm:$0xff]
        %v564 = vld [vmem:[%s1 + $0x3d8] sm:$0xff]
        %v565 = vld [vmem:[%s1 + $0x3e0] sm:$0xff]
        %v566 = vld [vmem:[%s1 + $0x3e8] sm:$0xff]
        %v567 = vld [vmem:[%s1 + $0x3f0] sm:$0xff]
        %v568 = vld [vmem:[%s1 + $0x3f8] sm:$0xff]
        %v570 = vsel %vm412, %v440, 0
        %572 = vmatprep.subr.mxu0 0.0
        %573 = vmatpush1.msra.mxu0 %v441
        %574 = vmatprep.subr.mxu0 0.0
        %575 = vmatpush1.msra.mxu0 %v442
        %576 = vmatprep.subr.mxu0 0.0
        %577 = vmatpush1.msra.mxu0 %v443
        %578 = vmatprep.subr.mxu0 0.0
        %579 = vmatpush1.msra.mxu0 %v444
        %580 = vmatprep.subr.mxu0 0.0
        %581 = vmatpush1.msra.mxu0 %v445
        %582 = vmatprep.subr.mxu0 0.0
        %583 = vmatpush1.msra.mxu0 %v446
        %584 = vmatprep.subr.mxu0 0.0
        %585 = vmatpush1.msra.mxu0 %v447
        %586 = vmatprep.subr.mxu0 0.0
        %587 = vmatpush1.msra.mxu0 %v448
        %588 = vmatprep.subr.mxu0 0.0
        %589 = vmatpush1.msra.mxu0 0.0
        %590 = vmatprep.subr.mxu0 0.0
        %591 = vmatpush1.msra.mxu0 0.0
        %592 = vmatprep.subr.mxu0 0.0
        %593 = vmatpush1.msra.mxu0 0.0
        %594 = vmatprep.subr.mxu0 0.0
        %595 = vmatpush1.msra.mxu0 0.0
        %596 = vmatprep.subr.mxu0 0.0
        %597 = vmatpush1.msra.mxu0 0.0
        %598 = vmatprep.subr.mxu0 0.0
        %599 = vmatpush1.msra.mxu0 0.0
        %600 = vmatprep.subr.mxu0 0.0
        %601 = vmatpush1.msra.mxu0 0.0
        %602 = vmatprep.subr.mxu0 0.0
        %603 = vmatpush1.msra.mxu0 0.0
        %604 = vmatprep.subr.mxu0 0.0
        %605 = vmatpush1.msra.mxu0 0.0
        %606 = vmatprep.subr.mxu0 0.0
        %607 = vmatpush1.msra.mxu0 0.0
        %608 = vmatprep.subr.mxu0 0.0
        %609 = vmatpush1.msra.mxu0 0.0
        %610 = vmatprep.subr.mxu0 0.0
        %611 = vmatpush1.msra.mxu0 0.0
        %612 = vmatprep.subr.mxu0 0.0
        %613 = vmatpush1.msra.mxu0 0.0
        %614 = vmatprep.subr.mxu0 0.0
        %615 = vmatpush1.msra.mxu0 0.0
        %616 = vmatprep.subr.mxu0 0.0
        %617 = vmatpush1.msra.mxu0 0.0
        %618 = vmatprep.subr.mxu0 0.0
        %619 = vmatpush1.msra.mxu0 0.0
        %620 = vmatprep.subr.mxu0 0.0
        %621 = vmatpush1.msra.mxu0 0.0
        %622 = vmatprep.subr.mxu0 0.0
        %623 = vmatpush1.msra.mxu0 0.0
        %624 = vmatprep.subr.mxu0 0.0
        %625 = vmatpush1.msra.mxu0 0.0
        %626 = vmatprep.subr.mxu0 0.0
        %627 = vmatpush1.msra.mxu0 0.0
        %628 = vmatprep.subr.mxu0 0.0
        %629 = vmatpush1.msra.mxu0 0.0
        %630 = vmatprep.subr.mxu0 0.0
        %631 = vmatpush1.msra.mxu0 0.0
        %632 = vmatprep.subr.mxu0 0.0
        %633 = vmatpush1.msra.mxu0 0.0
        %634 = vmatprep.subr.mxu0 0.0
        %635 = vmatpush1.msra.mxu0 0.0
        %636 = vmatprep.mubr.f32.mxu0 0.0
        %637 = vmatmul.mubr.f32.gmra.mrb[0].mxu0 %v570
        %v638 = vpop.f32.mrb[0].mxu0
        %v639 = vadd.f32 0.0, %v638
        %v640 = vpop.f32.mrb[0].mxu0
        %641 = vdwg.mxu0
        %642 = vmatprep.subr.mxu0 0.0
        %643 = vmatpush1.msra.mxu0 %v449
        %644 = vmatprep.subr.mxu0 0.0
        %645 = vmatpush1.msra.mxu0 %v450
        %646 = vmatprep.subr.mxu0 0.0
        %647 = vmatpush1.msra.mxu0 %v451
        %648 = vmatprep.subr.mxu0 0.0
        %649 = vmatpush1.msra.mxu0 %v452
        %650 = vmatprep.subr.mxu0 0.0
        %651 = vmatpush1.msra.mxu0 %v453
        %652 = vmatprep.subr.mxu0 0.0
        %653 = vmatpush1.msra.mxu0 %v454
        %654 = vmatprep.subr.mxu0 0.0
        %655 = vmatpush1.msra.mxu0 %v455
        %656 = vmatprep.subr.mxu0 0.0
        %657 = vmatpush1.msra.mxu0 %v456
        %658 = vmatprep.subr.mxu0 0.0
        %659 = vmatpush1.msra.mxu0 0.0
        %660 = vmatprep.subr.mxu0 0.0
        %661 = vmatpush1.msra.mxu0 0.0
        %662 = vmatprep.subr.mxu0 0.0
        %663 = vmatpush1.msra.mxu0 0.0
        %664 = vmatprep.subr.mxu0 0.0
        %665 = vmatpush1.msra.mxu0 0.0
        %666 = vmatprep.subr.mxu0 0.0
        %667 = vmatpush1.msra.mxu0 0.0
        %668 = vmatprep.subr.mxu0 0.0
        %669 = vmatpush1.msra.mxu0 0.0
        %670 = vmatprep.subr.mxu0 0.0
        %671 = vmatpush1.msra.mxu0 0.0
        %672 = vmatprep.subr.mxu0 0.0
        %673 = vmatpush1.msra.mxu0 0.0
        %674 = vmatprep.subr.mxu0 0.0
        %675 = vmatpush1.msra.mxu0 0.0
        %676 = vmatprep.subr.mxu0 0.0
        %677 = vmatpush1.msra.mxu0 0.0
        %678 = vmatprep.subr.mxu0 0.0
        %679 = vmatpush1.msra.mxu0 0.0
        %680 = vmatprep.subr.mxu0 0.0
        %681 = vmatpush1.msra.mxu0 0.0
        %682 = vmatprep.subr.mxu0 0.0
        %683 = vmatpush1.msra.mxu0 0.0
        %684 = vmatprep.subr.mxu0 0.0
        %685 = vmatpush1.msra.mxu0 0.0
        %686 = vmatprep.subr.mxu0 0.0
        %687 = vmatpush1.msra.mxu0 0.0
        %688 = vmatprep.subr.mxu0 0.0
        %689 = vmatpush1.msra.mxu0 0.0
        %690 = vmatprep.subr.mxu0 0.0
        %691 = vmatpush1.msra.mxu0 0.0
        %692 = vmatprep.subr.mxu0 0.0
        %693 = vmatpush1.msra.mxu0 0.0
        %694 = vmatprep.subr.mxu0 0.0
        %695 = vmatpush1.msra.mxu0 0.0
        %696 = vmatprep.subr.mxu0 0.0
        %697 = vmatpush1.msra.mxu0 0.0
        %698 = vmatprep.subr.mxu0 0.0
        %699 = vmatpush1.msra.mxu0 0.0
        %700 = vmatprep.subr.mxu0 0.0
        %701 = vmatpush1.msra.mxu0 0.0
        %702 = vmatprep.subr.mxu0 0.0
        %703 = vmatpush1.msra.mxu0 0.0
        %704 = vmatprep.subr.mxu0 0.0
        %705 = vmatpush1.msra.mxu0 0.0
        %706 = vmatprep.mubr.f32.mxu0 0.0
        %707 = vmatmul.mubr.f32.gmra.mrb[0].mxu0 %v570
        %v708 = vpop.f32.mrb[0].mxu0
        %v709 = vadd.f32 0.0, %v708
        %v710 = vpop.f32.mrb[0].mxu0
        %711 = vdwg.mxu0
        %712 = vmatprep.subr.mxu0 0.0
        %713 = vmatpush1.msra.mxu0 %v457
        %714 = vmatprep.subr.mxu0 0.0
        %715 = vmatpush1.msra.mxu0 %v458
        %716 = vmatprep.subr.mxu0 0.0
        %717 = vmatpush1.msra.mxu0 %v459
        %718 = vmatprep.subr.mxu0 0.0
        %719 = vmatpush1.msra.mxu0 %v460
        %720 = vmatprep.subr.mxu0 0.0
        %721 = vmatpush1.msra.mxu0 %v461
        %722 = vmatprep.subr.mxu0 0.0
        %723 = vmatpush1.msra.mxu0 %v462
        %724 = vmatprep.subr.mxu0 0.0
        %725 = vmatpush1.msra.mxu0 %v463
        %726 = vmatprep.subr.mxu0 0.0
        %727 = vmatpush1.msra.mxu0 %v464
        %728 = vmatprep.subr.mxu0 0.0
        %729 = vmatpush1.msra.mxu0 0.0
        %730 = vmatprep.subr.mxu0 0.0
        %731 = vmatpush1.msra.mxu0 0.0
        %732 = vmatprep.subr.mxu0 0.0
        %733 = vmatpush1.msra.mxu0 0.0
        %734 = vmatprep.subr.mxu0 0.0
        %735 = vmatpush1.msra.mxu0 0.0
        %736 = vmatprep.subr.mxu0 0.0
        %737 = vmatpush1.msra.mxu0 0.0
        %738 = vmatprep.subr.mxu0 0.0
        %739 = vmatpush1.msra.mxu0 0.0
        %740 = vmatprep.subr.mxu0 0.0
        %741 = vmatpush1.msra.mxu0 0.0
        %742 = vmatprep.subr.mxu0 0.0
        %743 = vmatpush1.msra.mxu0 0.0
        %744 = vmatprep.subr.mxu0 0.0
        %745 = vmatpush1.msra.mxu0 0.0
        %746 = vmatprep.subr.mxu0 0.0
        %747 = vmatpush1.msra.mxu0 0.0
        %748 = vmatprep.subr.mxu0 0.0
        %749 = vmatpush1.msra.mxu0 0.0
        %750 = vmatprep.subr.mxu0 0.0
        %751 = vmatpush1.msra.mxu0 0.0
        %752 = vmatprep.subr.mxu0 0.0
        %753 = vmatpush1.msra.mxu0 0.0
        %754 = vmatprep.subr.mxu0 0.0
        %755 = vmatpush1.msra.mxu0 0.0
        %756 = vmatprep.subr.mxu0 0.0
        %757 = vmatpush1.msra.mxu0 0.0
        %758 = vmatprep.subr.mxu0 0.0
        %759 = vmatpush1.msra.mxu0 0.0
        %760 = vmatprep.subr.mxu0 0.0
        %761 = vmatpush1.msra.mxu0 0.0
        %762 = vmatprep.subr.mxu0 0.0
        %763 = vmatpush1.msra.mxu0 0.0
        %764 = vmatprep.subr.mxu0 0.0
        %765 = vmatpush1.msra.mxu0 0.0
        %766 = vmatprep.subr.mxu0 0.0
        %767 = vmatpush1.msra.mxu0 0.0
        %768 = vmatprep.subr.mxu0 0.0
        %769 = vmatpush1.msra.mxu0 0.0
        %770 = vmatprep.subr.mxu0 0.0
        %771 = vmatpush1.msra.mxu0 0.0
        %772 = vmatprep.subr.mxu0 0.0
        %773 = vmatpush1.msra.mxu0 0.0
        %774 = vmatprep.subr.mxu0 0.0
        %775 = vmatpush1.msra.mxu0 0.0
        %776 = vmatprep.mubr.f32.mxu0 0.0
        %777 = vmatmul.mubr.f32.gmra.mrb[0].mxu0 %v570
        %v778 = vpop.f32.mrb[0].mxu0
        %v779 = vadd.f32 0.0, %v778
        %v780 = vpop.f32.mrb[0].mxu0
        %781 = vdwg.mxu0
        %782 = vmatprep.subr.mxu0 0.0
        %783 = vmatpush1.msra.mxu0 %v465
        %784 = vmatprep.subr.mxu0 0.0
        %785 = vmatpush1.msra.mxu0 %v466
        %786 = vmatprep.subr.mxu0 0.0
        %787 = vmatpush1.msra.mxu0 %v467
        %788 = vmatprep.subr.mxu0 0.0
        %789 = vmatpush1.msra.mxu0 %v468
        %790 = vmatprep.subr.mxu0 0.0
        %791 = vmatpush1.msra.mxu0 %v469
        %792 = vmatprep.subr.mxu0 0.0
        %793 = vmatpush1.msra.mxu0 %v470
        %794 = vmatprep.subr.mxu0 0.0
        %795 = vmatpush1.msra.mxu0 %v471
        %796 = vmatprep.subr.mxu0 0.0
        %797 = vmatpush1.msra.mxu0 %v472
        %798 = vmatprep.subr.mxu0 0.0
        %799 = vmatpush1.msra.mxu0 0.0
        %800 = vmatprep.subr.mxu0 0.0
        %801 = vmatpush1.msra.mxu0 0.0
        %802 = vmatprep.subr.mxu0 0.0
        %803 = vmatpush1.msra.mxu0 0.0
        %804 = vmatprep.subr.mxu0 0.0
        %805 = vmatpush1.msra.mxu0 0.0
        %806 = vmatprep.subr.mxu0 0.0
        %807 = vmatpush1.msra.mxu0 0.0
        %808 = vmatprep.subr.mxu0 0.0
        %809 = vmatpush1.msra.mxu0 0.0
        %810 = vmatprep.subr.mxu0 0.0
        %811 = vmatpush1.msra.mxu0 0.0
        %812 = vmatprep.subr.mxu0 0.0
        %813 = vmatpush1.msra.mxu0 0.0
        %814 = vmatprep.subr.mxu0 0.0
        %815 = vmatpush1.msra.mxu0 0.0
        %816 = vmatprep.subr.mxu0 0.0
        %817 = vmatpush1.msra.mxu0 0.0
        %818 = vmatprep.subr.mxu0 0.0
        %819 = vmatpush1.msra.mxu0 0.0
        %820 = vmatprep.subr.mxu0 0.0
        %821 = vmatpush1.msra.mxu0 0.0
        %822 = vmatprep.subr.mxu0 0.0
        %823 = vmatpush1.msra.mxu0 0.0
        %824 = vmatprep.subr.mxu0 0.0
        %825 = vmatpush1.msra.mxu0 0.0
        %826 = vmatprep.subr.mxu0 0.0
        %827 = vmatpush1.msra.mxu0 0.0
        %828 = vmatprep.subr.mxu0 0.0
        %829 = vmatpush1.msra.mxu0 0.0
        %830 = vmatprep.subr.mxu0 0.0
        %831 = vmatpush1.msra.mxu0 0.0
        %832 = vmatprep.subr.mxu0 0.0
        %833 = vmatpush1.msra.mxu0 0.0
        %834 = vmatprep.subr.mxu0 0.0
        %835 = vmatpush1.msra.mxu0 0.0
        %836 = vmatprep.subr.mxu0 0.0
        %837 = vmatpush1.msra.mxu0 0.0
        %838 = vmatprep.subr.mxu0 0.0
        %839 = vmatpush1.msra.mxu0 0.0
        %840 = vmatprep.subr.mxu0 0.0
        %841 = vmatpush1.msra.mxu0 0.0
        %842 = vmatprep.subr.mxu0 0.0
        %843 = vmatpush1.msra.mxu0 0.0
        %844 = vmatprep.subr.mxu0 0.0
        %845 = vmatpush1.msra.mxu0 0.0
        %846 = vmatprep.mubr.f32.mxu0 0.0
        %847 = vmatmul.mubr.f32.gmra.mrb[0].mxu0 %v570
        %v848 = vpop.f32.mrb[0].mxu0
        %v849 = vadd.f32 0.0, %v848
        %v850 = vpop.f32.mrb[0].mxu0
        %851 = vdwg.mxu0
        %852 = vmatprep.subr.mxu0 0.0
        %853 = vmatpush1.msra.mxu0 %v473
        %854 = vmatprep.subr.mxu0 0.0
        %855 = vmatpush1.msra.mxu0 %v474
        %856 = vmatprep.subr.mxu0 0.0
        %857 = vmatpush1.msra.mxu0 %v475
        %858 = vmatprep.subr.mxu0 0.0
        %859 = vmatpush1.msra.mxu0 %v476
        %860 = vmatprep.subr.mxu0 0.0
        %861 = vmatpush1.msra.mxu0 %v477
        %862 = vmatprep.subr.mxu0 0.0
        %863 = vmatpush1.msra.mxu0 %v478
        %864 = vmatprep.subr.mxu0 0.0
        %865 = vmatpush1.msra.mxu0 %v479
        %866 = vmatprep.subr.mxu0 0.0
        %867 = vmatpush1.msra.mxu0 %v480
        %868 = vmatprep.subr.mxu0 0.0
        %869 = vmatpush1.msra.mxu0 0.0
        %870 = vmatprep.subr.mxu0 0.0
        %871 = vmatpush1.msra.mxu0 0.0
        %872 = vmatprep.subr.mxu0 0.0
        %873 = vmatpush1.msra.mxu0 0.0
        %874 = vmatprep.subr.mxu0 0.0
        %875 = vmatpush1.msra.mxu0 0.0
        %876 = vmatprep.subr.mxu0 0.0
        %877 = vmatpush1.msra.mxu0 0.0
        %878 = vmatprep.subr.mxu0 0.0
        %879 = vmatpush1.msra.mxu0 0.0
        %880 = vmatprep.subr.mxu0 0.0
        %881 = vmatpush1.msra.mxu0 0.0
        %882 = vmatprep.subr.mxu0 0.0
        %883 = vmatpush1.msra.mxu0 0.0
        %884 = vmatprep.subr.mxu0 0.0
        %885 = vmatpush1.msra.mxu0 0.0
        %886 = vmatprep.subr.mxu0 0.0
        %887 = vmatpush1.msra.mxu0 0.0
        %888 = vmatprep.subr.mxu0 0.0
        %889 = vmatpush1.msra.mxu0 0.0
        %890 = vmatprep.subr.mxu0 0.0
        %891 = vmatpush1.msra.mxu0 0.0
        %892 = vmatprep.subr.mxu0 0.0
        %893 = vmatpush1.msra.mxu0 0.0
        %894 = vmatprep.subr.mxu0 0.0
        %895 = vmatpush1.msra.mxu0 0.0
        %896 = vmatprep.subr.mxu0 0.0
        %897 = vmatpush1.msra.mxu0 0.0
        %898 = vmatprep.subr.mxu0 0.0
        %899 = vmatpush1.msra.mxu0 0.0
        %900 = vmatprep.subr.mxu0 0.0
        %901 = vmatpush1.msra.mxu0 0.0
        %902 = vmatprep.subr.mxu0 0.0
        %903 = vmatpush1.msra.mxu0 0.0
        %904 = vmatprep.subr.mxu0 0.0
        %905 = vmatpush1.msra.mxu0 0.0
        %906 = vmatprep.subr.mxu0 0.0
        %907 = vmatpush1.msra.mxu0 0.0
        %908 = vmatprep.subr.mxu0 0.0
        %909 = vmatpush1.msra.mxu0 0.0
        %910 = vmatprep.subr.mxu0 0.0
        %911 = vmatpush1.msra.mxu0 0.0
        %912 = vmatprep.subr.mxu0 0.0
        %913 = vmatpush1.msra.mxu0 0.0
        %914 = vmatprep.subr.mxu0 0.0
        %915 = vmatpush1.msra.mxu0 0.0
        %916 = vmatprep.mubr.f32.mxu0 0.0
        %917 = vmatmul.mubr.f32.gmra.mrb[0].mxu0 %v570
        %v918 = vpop.f32.mrb[0].mxu0
        %v919 = vadd.f32 0.0, %v918
        %v920 = vpop.f32.mrb[0].mxu0
        %921 = vdwg.mxu0
        %922 = vmatprep.subr.mxu0 0.0
        %923 = vmatpush1.msra.mxu0 %v481
        %924 = vmatprep.subr.mxu0 0.0
        %925 = vmatpush1.msra.mxu0 %v482
        %926 = vmatprep.subr.mxu0 0.0
        %927 = vmatpush1.msra.mxu0 %v483
        %928 = vmatprep.subr.mxu0 0.0
        %929 = vmatpush1.msra.mxu0 %v484
        %930 = vmatprep.subr.mxu0 0.0
        %931 = vmatpush1.msra.mxu0 %v485
        %932 = vmatprep.subr.mxu0 0.0
        %933 = vmatpush1.msra.mxu0 %v486
        %934 = vmatprep.subr.mxu0 0.0
        %935 = vmatpush1.msra.mxu0 %v487
        %936 = vmatprep.subr.mxu0 0.0
        %937 = vmatpush1.msra.mxu0 %v488
        %938 = vmatprep.subr.mxu0 0.0
        %939 = vmatpush1.msra.mxu0 0.0
        %940 = vmatprep.subr.mxu0 0.0
        %941 = vmatpush1.msra.mxu0 0.0
        %942 = vmatprep.subr.mxu0 0.0
        %943 = vmatpush1.msra.mxu0 0.0
        %944 = vmatprep.subr.mxu0 0.0
        %945 = vmatpush1.msra.mxu0 0.0
        %946 = vmatprep.subr.mxu0 0.0
        %947 = vmatpush1.msra.mxu0 0.0
        %948 = vmatprep.subr.mxu0 0.0
        %949 = vmatpush1.msra.mxu0 0.0
        %950 = vmatprep.subr.mxu0 0.0
        %951 = vmatpush1.msra.mxu0 0.0
        %952 = vmatprep.subr.mxu0 0.0
        %953 = vmatpush1.msra.mxu0 0.0
        %954 = vmatprep.subr.mxu0 0.0
        %955 = vmatpush1.msra.mxu0 0.0
        %956 = vmatprep.subr.mxu0 0.0
        %957 = vmatpush1.msra.mxu0 0.0
        %958 = vmatprep.subr.mxu0 0.0
        %959 = vmatpush1.msra.mxu0 0.0
        %960 = vmatprep.subr.mxu0 0.0
        %961 = vmatpush1.msra.mxu0 0.0
        %962 = vmatprep.subr.mxu0 0.0
        %963 = vmatpush1.msra.mxu0 0.0
        %964 = vmatprep.subr.mxu0 0.0
        %965 = vmatpush1.msra.mxu0 0.0
        %966 = vmatprep.subr.mxu0 0.0
        %967 = vmatpush1.msra.mxu0 0.0
        %968 = vmatprep.subr.mxu0 0.0
        %969 = vmatpush1.msra.mxu0 0.0
        %970 = vmatprep.subr.mxu0 0.0
        %971 = vmatpush1.msra.mxu0 0.0
        %972 = vmatprep.subr.mxu0 0.0
        %973 = vmatpush1.msra.mxu0 0.0
        %974 = vmatprep.subr.mxu0 0.0
        %975 = vmatpush1.msra.mxu0 0.0
        %976 = vmatprep.subr.mxu0 0.0
        %977 = vmatpush1.msra.mxu0 0.0
        %978 = vmatprep.subr.mxu0 0.0
        %979 = vmatpush1.msra.mxu0 0.0
        %980 = vmatprep.subr.mxu0 0.0
        %981 = vmatpush1.msra.mxu0 0.0
        %982 = vmatprep.subr.mxu0 0.0
        %983 = vmatpush1.msra.mxu0 0.0
        %984 = vmatprep.subr.mxu0 0.0
        %985 = vmatpush1.msra.mxu0 0.0
        %986 = vmatprep.mubr.f32.mxu0 0.0
        %987 = vmatmul.mubr.f32.gmra.mrb[0].mxu0 %v570
        %v988 = vpop.f32.mrb[0].mxu0
        %v989 = vadd.f32 0.0, %v988
        %v990 = vpop.f32.mrb[0].mxu0
        %991 = vdwg.mxu0
        %992 = vmatprep.subr.mxu0 0.0
        %993 = vmatpush1.msra.mxu0 %v489
        %994 = vmatprep.subr.mxu0 0.0
        %995 = vmatpush1.msra.mxu0 %v490
        %996 = vmatprep.subr.mxu0 0.0
        %997 = vmatpush1.msra.mxu0 %v491
        %998 = vmatprep.subr.mxu0 0.0
        %999 = vmatpush1.msra.mxu0 %v492
        %1000 = vmatprep.subr.mxu0 0.0
        %1001 = vmatpush1.msra.mxu0 %v493
        %1002 = vmatprep.subr.mxu0 0.0
        %1003 = vmatpush1.msra.mxu0 %v494
        %1004 = vmatprep.subr.mxu0 0.0
        %1005 = vmatpush1.msra.mxu0 %v495
        %1006 = vmatprep.subr.mxu0 0.0
        %1007 = vmatpush1.msra.mxu0 %v496
        %1008 = vmatprep.subr.mxu0 0.0
        %1009 = vmatpush1.msra.mxu0 0.0
        %1010 = vmatprep.subr.mxu0 0.0
        %1011 = vmatpush1.msra.mxu0 0.0
        %1012 = vmatprep.subr.mxu0 0.0
        %1013 = vmatpush1.msra.mxu0 0.0
        %1014 = vmatprep.subr.mxu0 0.0
        %1015 = vmatpush1.msra.mxu0 0.0
        %1016 = vmatprep.subr.mxu0 0.0
        %1017 = vmatpush1.msra.mxu0 0.0
        %1018 = vmatprep.subr.mxu0 0.0
        %1019 = vmatpush1.msra.mxu0 0.0
        %1020 = vmatprep.subr.mxu0 0.0
        %1021 = vmatpush1.msra.mxu0 0.0
        %1022 = vmatprep.subr.mxu0 0.0
        %1023 = vmatpush1.msra.mxu0 0.0
        %1024 = vmatprep.subr.mxu0 0.0
        %1025 = vmatpush1.msra.mxu0 0.0
        %1026 = vmatprep.subr.mxu0 0.0
        %1027 = vmatpush1.msra.mxu0 0.0
        %1028 = vmatprep.subr.mxu0 0.0
        %1029 = vmatpush1.msra.mxu0 0.0
        %1030 = vmatprep.subr.mxu0 0.0
        %1031 = vmatpush1.msra.mxu0 0.0
        %1032 = vmatprep.subr.mxu0 0.0
        %1033 = vmatpush1.msra.mxu0 0.0
        %1034 = vmatprep.subr.mxu0 0.0
        %1035 = vmatpush1.msra.mxu0 0.0
        %1036 = vmatprep.subr.mxu0 0.0
        %1037 = vmatpush1.msra.mxu0 0.0
        %1038 = vmatprep.subr.mxu0 0.0
        %1039 = vmatpush1.msra.mxu0 0.0
        %1040 = vmatprep.subr.mxu0 0.0
        %1041 = vmatpush1.msra.mxu0 0.0
        %1042 = vmatprep.subr.mxu0 0.0
        %1043 = vmatpush1.msra.mxu0 0.0
        %1044 = vmatprep.subr.mxu0 0.0
        %1045 = vmatpush1.msra.mxu0 0.0
        %1046 = vmatprep.subr.mxu0 0.0
        %1047 = vmatpush1.msra.mxu0 0.0
        %1048 = vmatprep.subr.mxu0 0.0
        %1049 = vmatpush1.msra.mxu0 0.0
        %1050 = vmatprep.subr.mxu0 0.0
        %1051 = vmatpush1.msra.mxu0 0.0
        %1052 = vmatprep.subr.mxu0 0.0
        %1053 = vmatpush1.msra.mxu0 0.0
        %1054 = vmatprep.subr.mxu0 0.0
        %1055 = vmatpush1.msra.mxu0 0.0
        %1056 = vmatprep.mubr.f32.mxu0 0.0
        %1057 = vmatmul.mubr.f32.gmra.mrb[0].mxu0 %v570
        %v1058 = vpop.f32.mrb[0].mxu0
        %v1059 = vadd.f32 0.0, %v1058
        %v1060 = vpop.f32.mrb[0].mxu0
        %1061 = vdwg.mxu0
        %1062 = vmatprep.subr.mxu0 0.0
        %1063 = vmatpush1.msra.mxu0 %v497
        %1064 = vmatprep.subr.mxu0 0.0
        %1065 = vmatpush1.msra.mxu0 %v498
        %1066 = vmatprep.subr.mxu0 0.0
        %1067 = vmatpush1.msra.mxu0 %v499
        %1068 = vmatprep.subr.mxu0 0.0
        %1069 = vmatpush1.msra.mxu0 %v500
        %1070 = vmatprep.subr.mxu0 0.0
        %1071 = vmatpush1.msra.mxu0 %v501
        %1072 = vmatprep.subr.mxu0 0.0
        %1073 = vmatpush1.msra.mxu0 %v502
        %1074 = vmatprep.subr.mxu0 0.0
        %1075 = vmatpush1.msra.mxu0 %v503
        %1076 = vmatprep.subr.mxu0 0.0
        %1077 = vmatpush1.msra.mxu0 %v504
        %1078 = vmatprep.subr.mxu0 0.0
        %1079 = vmatpush1.msra.mxu0 0.0
        %1080 = vmatprep.subr.mxu0 0.0
        %1081 = vmatpush1.msra.mxu0 0.0
        %1082 = vmatprep.subr.mxu0 0.0
        %1083 = vmatpush1.msra.mxu0 0.0
        %1084 = vmatprep.subr.mxu0 0.0
        %1085 = vmatpush1.msra.mxu0 0.0
        %1086 = vmatprep.subr.mxu0 0.0
        %1087 = vmatpush1.msra.mxu0 0.0
        %1088 = vmatprep.subr.mxu0 0.0
        %1089 = vmatpush1.msra.mxu0 0.0
        %1090 = vmatprep.subr.mxu0 0.0
        %1091 = vmatpush1.msra.mxu0 0.0
        %1092 = vmatprep.subr.mxu0 0.0
        %1093 = vmatpush1.msra.mxu0 0.0
        %1094 = vmatprep.subr.mxu0 0.0
        %1095 = vmatpush1.msra.mxu0 0.0
        %1096 = vmatprep.subr.mxu0 0.0
        %1097 = vmatpush1.msra.mxu0 0.0
        %1098 = vmatprep.subr.mxu0 0.0
        %1099 = vmatpush1.msra.mxu0 0.0
        %1100 = vmatprep.subr.mxu0 0.0
        %1101 = vmatpush1.msra.mxu0 0.0
        %1102 = vmatprep.subr.mxu0 0.0
        %1103 = vmatpush1.msra.mxu0 0.0
        %1104 = vmatprep.subr.mxu0 0.0
        %1105 = vmatpush1.msra.mxu0 0.0
        %1106 = vmatprep.subr.mxu0 0.0
        %1107 = vmatpush1.msra.mxu0 0.0
        %1108 = vmatprep.subr.mxu0 0.0
        %1109 = vmatpush1.msra.mxu0 0.0
        %1110 = vmatprep.subr.mxu0 0.0
        %1111 = vmatpush1.msra.mxu0 0.0
        %1112 = vmatprep.subr.mxu0 0.0
        %1113 = vmatpush1.msra.mxu0 0.0
        %1114 = vmatprep.subr.mxu0 0.0
        %1115 = vmatpush1.msra.mxu0 0.0
        %1116 = vmatprep.subr.mxu0 0.0
        %1117 = vmatpush1.msra.mxu0 0.0
        %1118 = vmatprep.subr.mxu0 0.0
        %1119 = vmatpush1.msra.mxu0 0.0
        %1120 = vmatprep.subr.mxu0 0.0
        %1121 = vmatpush1.msra.mxu0 0.0
        %1122 = vmatprep.subr.mxu0 0.0
        %1123 = vmatpush1.msra.mxu0 0.0
        %1124 = vmatprep.subr.mxu0 0.0
        %1125 = vmatpush1.msra.mxu0 0.0
        %1126 = vmatprep.mubr.f32.mxu0 0.0
        %1127 = vmatmul.mubr.f32.gmra.mrb[0].mxu0 %v570
        %v1128 = vpop.f32.mrb[0].mxu0
        %v1129 = vadd.f32 0.0, %v1128
        %v1130 = vpop.f32.mrb[0].mxu0
        %1131 = vdwg.mxu0
        %1132 = vmatprep.subr.mxu0 0.0
        %1133 = vmatpush1.msra.mxu0 %v505
        %1134 = vmatprep.subr.mxu0 0.0
        %1135 = vmatpush1.msra.mxu0 %v506
        %1136 = vmatprep.subr.mxu0 0.0
        %1137 = vmatpush1.msra.mxu0 %v507
        %1138 = vmatprep.subr.mxu0 0.0
        %1139 = vmatpush1.msra.mxu0 %v508
        %1140 = vmatprep.subr.mxu0 0.0
        %1141 = vmatpush1.msra.mxu0 %v509
        %1142 = vmatprep.subr.mxu0 0.0
        %1143 = vmatpush1.msra.mxu0 %v510
        %1144 = vmatprep.subr.mxu0 0.0
        %1145 = vmatpush1.msra.mxu0 %v511
        %1146 = vmatprep.subr.mxu0 0.0
        %1147 = vmatpush1.msra.mxu0 %v512
        %1148 = vmatprep.subr.mxu0 0.0
        %1149 = vmatpush1.msra.mxu0 0.0
        %1150 = vmatprep.subr.mxu0 0.0
        %1151 = vmatpush1.msra.mxu0 0.0
        %1152 = vmatprep.subr.mxu0 0.0
        %1153 = vmatpush1.msra.mxu0 0.0
        %1154 = vmatprep.subr.mxu0 0.0
        %1155 = vmatpush1.msra.mxu0 0.0
        %1156 = vmatprep.subr.mxu0 0.0
        %1157 = vmatpush1.msra.mxu0 0.0
        %1158 = vmatprep.subr.mxu0 0.0
        %1159 = vmatpush1.msra.mxu0 0.0
        %1160 = vmatprep.subr.mxu0 0.0
        %1161 = vmatpush1.msra.mxu0 0.0
        %1162 = vmatprep.subr.mxu0 0.0
        %1163 = vmatpush1.msra.mxu0 0.0
        %1164 = vmatprep.subr.mxu0 0.0
        %1165 = vmatpush1.msra.mxu0 0.0
        %1166 = vmatprep.subr.mxu0 0.0
        %1167 = vmatpush1.msra.mxu0 0.0
        %1168 = vmatprep.subr.mxu0 0.0
        %1169 = vmatpush1.msra.mxu0 0.0
        %1170 = vmatprep.subr.mxu0 0.0
        %1171 = vmatpush1.msra.mxu0 0.0
        %1172 = vmatprep.subr.mxu0 0.0
        %1173 = vmatpush1.msra.mxu0 0.0
        %1174 = vmatprep.subr.mxu0 0.0
        %1175 = vmatpush1.msra.mxu0 0.0
        %1176 = vmatprep.subr.mxu0 0.0
        %1177 = vmatpush1.msra.mxu0 0.0
        %1178 = vmatprep.subr.mxu0 0.0
        %1179 = vmatpush1.msra.mxu0 0.0
        %1180 = vmatprep.subr.mxu0 0.0
        %1181 = vmatpush1.msra.mxu0 0.0
        %1182 = vmatprep.subr.mxu0 0.0
        %1183 = vmatpush1.msra.mxu0 0.0
        %1184 = vmatprep.subr.mxu0 0.0
        %1185 = vmatpush1.msra.mxu0 0.0
        %1186 = vmatprep.subr.mxu0 0.0
        %1187 = vmatpush1.msra.mxu0 0.0
        %1188 = vmatprep.subr.mxu0 0.0
        %1189 = vmatpush1.msra.mxu0 0.0
        %1190 = vmatprep.subr.mxu0 0.0
        %1191 = vmatpush1.msra.mxu0 0.0
        %1192 = vmatprep.subr.mxu0 0.0
        %1193 = vmatpush1.msra.mxu0 0.0
        %1194 = vmatprep.subr.mxu0 0.0
        %1195 = vmatpush1.msra.mxu0 0.0
        %1196 = vmatprep.mubr.f32.mxu0 0.0
        %1197 = vmatmul.mubr.f32.gmra.mrb[0].mxu0 %v570
        %v1198 = vpop.f32.mrb[0].mxu0
        %v1199 = vadd.f32 0.0, %v1198
        %v1200 = vpop.f32.mrb[0].mxu0
        %1201 = vdwg.mxu0
        %1202 = vmatprep.subr.mxu0 0.0
        %1203 = vmatpush1.msra.mxu0 %v513
        %1204 = vmatprep.subr.mxu0 0.0
        %1205 = vmatpush1.msra.mxu0 %v514
        %1206 = vmatprep.subr.mxu0 0.0
        %1207 = vmatpush1.msra.mxu0 %v515
        %1208 = vmatprep.subr.mxu0 0.0
        %1209 = vmatpush1.msra.mxu0 %v516
        %1210 = vmatprep.subr.mxu0 0.0
        %1211 = vmatpush1.msra.mxu0 %v517
        %1212 = vmatprep.subr.mxu0 0.0
        %1213 = vmatpush1.msra.mxu0 %v518
        %1214 = vmatprep.subr.mxu0 0.0
        %1215 = vmatpush1.msra.mxu0 %v519
        %1216 = vmatprep.subr.mxu0 0.0
        %1217 = vmatpush1.msra.mxu0 %v520
        %1218 = vmatprep.subr.mxu0 0.0
        %1219 = vmatpush1.msra.mxu0 0.0
        %1220 = vmatprep.subr.mxu0 0.0
        %1221 = vmatpush1.msra.mxu0 0.0
        %1222 = vmatprep.subr.mxu0 0.0
        %1223 = vmatpush1.msra.mxu0 0.0
        %1224 = vmatprep.subr.mxu0 0.0
        %1225 = vmatpush1.msra.mxu0 0.0
        %1226 = vmatprep.subr.mxu0 0.0
        %1227 = vmatpush1.msra.mxu0 0.0
        %1228 = vmatprep.subr.mxu0 0.0
        %1229 = vmatpush1.msra.mxu0 0.0
        %1230 = vmatprep.subr.mxu0 0.0
        %1231 = vmatpush1.msra.mxu0 0.0
        %1232 = vmatprep.subr.mxu0 0.0
        %1233 = vmatpush1.msra.mxu0 0.0
        %1234 = vmatprep.subr.mxu0 0.0
        %1235 = vmatpush1.msra.mxu0 0.0
        %1236 = vmatprep.subr.mxu0 0.0
        %1237 = vmatpush1.msra.mxu0 0.0
        %1238 = vmatprep.subr.mxu0 0.0
        %1239 = vmatpush1.msra.mxu0 0.0
        %1240 = vmatprep.subr.mxu0 0.0
        %1241 = vmatpush1.msra.mxu0 0.0
        %1242 = vmatprep.subr.mxu0 0.0
        %1243 = vmatpush1.msra.mxu0 0.0
        %1244 = vmatprep.subr.mxu0 0.0
        %1245 = vmatpush1.msra.mxu0 0.0
        %1246 = vmatprep.subr.mxu0 0.0
        %1247 = vmatpush1.msra.mxu0 0.0
        %1248 = vmatprep.subr.mxu0 0.0
        %1249 = vmatpush1.msra.mxu0 0.0
        %1250 = vmatprep.subr.mxu0 0.0
        %1251 = vmatpush1.msra.mxu0 0.0
        %1252 = vmatprep.subr.mxu0 0.0
        %1253 = vmatpush1.msra.mxu0 0.0
        %1254 = vmatprep.subr.mxu0 0.0
        %1255 = vmatpush1.msra.mxu0 0.0
        %1256 = vmatprep.subr.mxu0 0.0
        %1257 = vmatpush1.msra.mxu0 0.0
        %1258 = vmatprep.subr.mxu0 0.0
        %1259 = vmatpush1.msra.mxu0 0.0
        %1260 = vmatprep.subr.mxu0 0.0
        %1261 = vmatpush1.msra.mxu0 0.0
        %1262 = vmatprep.subr.mxu0 0.0
        %1263 = vmatpush1.msra.mxu0 0.0
        %1264 = vmatprep.subr.mxu0 0.0
        %1265 = vmatpush1.msra.mxu0 0.0
        %1266 = vmatprep.mubr.f32.mxu0 0.0
        %1267 = vmatmul.mubr.f32.gmra.mrb[0].mxu0 %v570
        %v1268 = vpop.f32.mrb[0].mxu0
        %v1269 = vadd.f32 0.0, %v1268
        %v1270 = vpop.f32.mrb[0].mxu0
        %1271 = vdwg.mxu0
        %1272 = vmatprep.subr.mxu0 0.0
        %1273 = vmatpush1.msra.mxu0 %v521
        %1274 = vmatprep.subr.mxu0 0.0
        %1275 = vmatpush1.msra.mxu0 %v522
        %1276 = vmatprep.subr.mxu0 0.0
        %1277 = vmatpush1.msra.mxu0 %v523
        %1278 = vmatprep.subr.mxu0 0.0
        %1279 = vmatpush1.msra.mxu0 %v524
        %1280 = vmatprep.subr.mxu0 0.0
        %1281 = vmatpush1.msra.mxu0 %v525
        %1282 = vmatprep.subr.mxu0 0.0
        %1283 = vmatpush1.msra.mxu0 %v526
        %1284 = vmatprep.subr.mxu0 0.0
        %1285 = vmatpush1.msra.mxu0 %v527
        %1286 = vmatprep.subr.mxu0 0.0
        %1287 = vmatpush1.msra.mxu0 %v528
        %1288 = vmatprep.subr.mxu0 0.0
        %1289 = vmatpush1.msra.mxu0 0.0
        %1290 = vmatprep.subr.mxu0 0.0
        %1291 = vmatpush1.msra.mxu0 0.0
        %1292 = vmatprep.subr.mxu0 0.0
        %1293 = vmatpush1.msra.mxu0 0.0
        %1294 = vmatprep.subr.mxu0 0.0
        %1295 = vmatpush1.msra.mxu0 0.0
        %1296 = vmatprep.subr.mxu0 0.0
        %1297 = vmatpush1.msra.mxu0 0.0
        %1298 = vmatprep.subr.mxu0 0.0
        %1299 = vmatpush1.msra.mxu0 0.0
        %1300 = vmatprep.subr.mxu0 0.0
        %1301 = vmatpush1.msra.mxu0 0.0
        %1302 = vmatprep.subr.mxu0 0.0
        %1303 = vmatpush1.msra.mxu0 0.0
        %1304 = vmatprep.subr.mxu0 0.0
        %1305 = vmatpush1.msra.mxu0 0.0
        %1306 = vmatprep.subr.mxu0 0.0
        %1307 = vmatpush1.msra.mxu0 0.0
        %1308 = vmatprep.subr.mxu0 0.0
        %1309 = vmatpush1.msra.mxu0 0.0
        %1310 = vmatprep.subr.mxu0 0.0
        %1311 = vmatpush1.msra.mxu0 0.0
        %1312 = vmatprep.subr.mxu0 0.0
        %1313 = vmatpush1.msra.mxu0 0.0
        %1314 = vmatprep.subr.mxu0 0.0
        %1315 = vmatpush1.msra.mxu0 0.0
        %1316 = vmatprep.subr.mxu0 0.0
        %1317 = vmatpush1.msra.mxu0 0.0
        %1318 = vmatprep.subr.mxu0 0.0
        %1319 = vmatpush1.msra.mxu0 0.0
        %1320 = vmatprep.subr.mxu0 0.0
        %1321 = vmatpush1.msra.mxu0 0.0
        %1322 = vmatprep.subr.mxu0 0.0
        %1323 = vmatpush1.msra.mxu0 0.0
        %1324 = vmatprep.subr.mxu0 0.0
        %1325 = vmatpush1.msra.mxu0 0.0
        %1326 = vmatprep.subr.mxu0 0.0
        %1327 = vmatpush1.msra.mxu0 0.0
        %1328 = vmatprep.subr.mxu0 0.0
        %1329 = vmatpush1.msra.mxu0 0.0
        %1330 = vmatprep.subr.mxu0 0.0
        %1331 = vmatpush1.msra.mxu0 0.0
        %1332 = vmatprep.subr.mxu0 0.0
        %1333 = vmatpush1.msra.mxu0 0.0
        %1334 = vmatprep.subr.mxu0 0.0
        %1335 = vmatpush1.msra.mxu0 0.0
        %1336 = vmatprep.mubr.f32.mxu0 0.0
        %1337 = vmatmul.mubr.f32.gmra.mrb[0].mxu0 %v570
        %v1338 = vpop.f32.mrb[0].mxu0
        %v1339 = vadd.f32 0.0, %v1338
        %v1340 = vpop.f32.mrb[0].mxu0
        %1341 = vdwg.mxu0
        %1342 = vmatprep.subr.mxu0 0.0
        %1343 = vmatpush1.msra.mxu0 %v529
        %1344 = vmatprep.subr.mxu0 0.0
        %1345 = vmatpush1.msra.mxu0 %v530
        %1346 = vmatprep.subr.mxu0 0.0
        %1347 = vmatpush1.msra.mxu0 %v531
        %1348 = vmatprep.subr.mxu0 0.0
        %1349 = vmatpush1.msra.mxu0 %v532
        %1350 = vmatprep.subr.mxu0 0.0
        %1351 = vmatpush1.msra.mxu0 %v533
        %1352 = vmatprep.subr.mxu0 0.0
        %1353 = vmatpush1.msra.mxu0 %v534
        %1354 = vmatprep.subr.mxu0 0.0
        %1355 = vmatpush1.msra.mxu0 %v535
        %1356 = vmatprep.subr.mxu0 0.0
        %1357 = vmatpush1.msra.mxu0 %v536
        %1358 = vmatprep.subr.mxu0 0.0
        %1359 = vmatpush1.msra.mxu0 0.0
        %1360 = vmatprep.subr.mxu0 0.0
        %1361 = vmatpush1.msra.mxu0 0.0
        %1362 = vmatprep.subr.mxu0 0.0
        %1363 = vmatpush1.msra.mxu0 0.0
        %1364 = vmatprep.subr.mxu0 0.0
        %1365 = vmatpush1.msra.mxu0 0.0
        %1366 = vmatprep.subr.mxu0 0.0
        %1367 = vmatpush1.msra.mxu0 0.0
        %1368 = vmatprep.subr.mxu0 0.0
        %1369 = vmatpush1.msra.mxu0 0.0
        %1370 = vmatprep.subr.mxu0 0.0
        %1371 = vmatpush1.msra.mxu0 0.0
        %1372 = vmatprep.subr.mxu0 0.0
        %1373 = vmatpush1.msra.mxu0 0.0
        %1374 = vmatprep.subr.mxu0 0.0
        %1375 = vmatpush1.msra.mxu0 0.0
        %1376 = vmatprep.subr.mxu0 0.0
        %1377 = vmatpush1.msra.mxu0 0.0
        %1378 = vmatprep.subr.mxu0 0.0
        %1379 = vmatpush1.msra.mxu0 0.0
        %1380 = vmatprep.subr.mxu0 0.0
        %1381 = vmatpush1.msra.mxu0 0.0
        %1382 = vmatprep.subr.mxu0 0.0
        %1383 = vmatpush1.msra.mxu0 0.0
        %1384 = vmatprep.subr.mxu0 0.0
        %1385 = vmatpush1.msra.mxu0 0.0
        %1386 = vmatprep.subr.mxu0 0.0
        %1387 = vmatpush1.msra.mxu0 0.0
        %1388 = vmatprep.subr.mxu0 0.0
        %1389 = vmatpush1.msra.mxu0 0.0
        %1390 = vmatprep.subr.mxu0 0.0
        %1391 = vmatpush1.msra.mxu0 0.0
        %1392 = vmatprep.subr.mxu0 0.0
        %1393 = vmatpush1.msra.mxu0 0.0
        %1394 = vmatprep.subr.mxu0 0.0
        %1395 = vmatpush1.msra.mxu0 0.0
        %1396 = vmatprep.subr.mxu0 0.0
        %1397 = vmatpush1.msra.mxu0 0.0
        %1398 = vmatprep.subr.mxu0 0.0
        %1399 = vmatpush1.msra.mxu0 0.0
        %1400 = vmatprep.subr.mxu0 0.0
        %1401 = vmatpush1.msra.mxu0 0.0
        %1402 = vmatprep.subr.mxu0 0.0
        %1403 = vmatpush1.msra.mxu0 0.0
        %1404 = vmatprep.subr.mxu0 0.0
        %1405 = vmatpush1.msra.mxu0 0.0
        %1406 = vmatprep.mubr.f32.mxu0 0.0
        %1407 = vmatmul.mubr.f32.gmra.mrb[0].mxu0 %v570
        %v1408 = vpop.f32.mrb[0].mxu0
        %v1409 = vadd.f32 0.0, %v1408
        %v1410 = vpop.f32.mrb[0].mxu0
        %1411 = vdwg.mxu0
        %1412 = vmatprep.subr.mxu0 0.0
        %1413 = vmatpush1.msra.mxu0 %v537
        %1414 = vmatprep.subr.mxu0 0.0
        %1415 = vmatpush1.msra.mxu0 %v538
        %1416 = vmatprep.subr.mxu0 0.0
        %1417 = vmatpush1.msra.mxu0 %v539
        %1418 = vmatprep.subr.mxu0 0.0
        %1419 = vmatpush1.msra.mxu0 %v540
        %1420 = vmatprep.subr.mxu0 0.0
        %1421 = vmatpush1.msra.mxu0 %v541
        %1422 = vmatprep.subr.mxu0 0.0
        %1423 = vmatpush1.msra.mxu0 %v542
        %1424 = vmatprep.subr.mxu0 0.0
        %1425 = vmatpush1.msra.mxu0 %v543
        %1426 = vmatprep.subr.mxu0 0.0
        %1427 = vmatpush1.msra.mxu0 %v544
        %1428 = vmatprep.subr.mxu0 0.0
        %1429 = vmatpush1.msra.mxu0 0.0
        %1430 = vmatprep.subr.mxu0 0.0
        %1431 = vmatpush1.msra.mxu0 0.0
        %1432 = vmatprep.subr.mxu0 0.0
        %1433 = vmatpush1.msra.mxu0 0.0
        %1434 = vmatprep.subr.mxu0 0.0
        %1435 = vmatpush1.msra.mxu0 0.0
        %1436 = vmatprep.subr.mxu0 0.0
        %1437 = vmatpush1.msra.mxu0 0.0
        %1438 = vmatprep.subr.mxu0 0.0
        %1439 = vmatpush1.msra.mxu0 0.0
        %1440 = vmatprep.subr.mxu0 0.0
        %1441 = vmatpush1.msra.mxu0 0.0
        %1442 = vmatprep.subr.mxu0 0.0
        %1443 = vmatpush1.msra.mxu0 0.0
        %1444 = vmatprep.subr.mxu0 0.0
        %1445 = vmatpush1.msra.mxu0 0.0
        %1446 = vmatprep.subr.mxu0 0.0
        %1447 = vmatpush1.msra.mxu0 0.0
        %1448 = vmatprep.subr.mxu0 0.0
        %1449 = vmatpush1.msra.mxu0 0.0
        %1450 = vmatprep.subr.mxu0 0.0
        %1451 = vmatpush1.msra.mxu0 0.0
        %1452 = vmatprep.subr.mxu0 0.0
        %1453 = vmatpush1.msra.mxu0 0.0
        %1454 = vmatprep.subr.mxu0 0.0
        %1455 = vmatpush1.msra.mxu0 0.0
        %1456 = vmatprep.subr.mxu0 0.0
        %1457 = vmatpush1.msra.mxu0 0.0
        %1458 = vmatprep.subr.mxu0 0.0
        %1459 = vmatpush1.msra.mxu0 0.0
        %1460 = vmatprep.subr.mxu0 0.0
        %1461 = vmatpush1.msra.mxu0 0.0
        %1462 = vmatprep.subr.mxu0 0.0
        %1463 = vmatpush1.msra.mxu0 0.0
        %1464 = vmatprep.subr.mxu0 0.0
        %1465 = vmatpush1.msra.mxu0 0.0
        %1466 = vmatprep.subr.mxu0 0.0
        %1467 = vmatpush1.msra.mxu0 0.0
        %1468 = vmatprep.subr.mxu0 0.0
        %1469 = vmatpush1.msra.mxu0 0.0
        %1470 = vmatprep.subr.mxu0 0.0
        %1471 = vmatpush1.msra.mxu0 0.0
        %1472 = vmatprep.subr.mxu0 0.0
        %1473 = vmatpush1.msra.mxu0 0.0
        %1474 = vmatprep.subr.mxu0 0.0
        %1475 = vmatpush1.msra.mxu0 0.0
        %1476 = vmatprep.mubr.f32.mxu0 0.0
        %1477 = vmatmul.mubr.f32.gmra.mrb[0].mxu0 %v570
        %v1478 = vpop.f32.mrb[0].mxu0
        %v1479 = vadd.f32 0.0, %v1478
        %v1480 = vpop.f32.mrb[0].mxu0
        %1481 = vdwg.mxu0
        %1482 = vmatprep.subr.mxu0 0.0
        %1483 = vmatpush1.msra.mxu0 %v545
        %1484 = vmatprep.subr.mxu0 0.0
        %1485 = vmatpush1.msra.mxu0 %v546
        %1486 = vmatprep.subr.mxu0 0.0
        %1487 = vmatpush1.msra.mxu0 %v547
        %1488 = vmatprep.subr.mxu0 0.0
        %1489 = vmatpush1.msra.mxu0 %v548
        %1490 = vmatprep.subr.mxu0 0.0
        %1491 = vmatpush1.msra.mxu0 %v549
        %1492 = vmatprep.subr.mxu0 0.0
        %1493 = vmatpush1.msra.mxu0 %v550
        %1494 = vmatprep.subr.mxu0 0.0
        %1495 = vmatpush1.msra.mxu0 %v551
        %1496 = vmatprep.subr.mxu0 0.0
        %1497 = vmatpush1.msra.mxu0 %v552
        %1498 = vmatprep.subr.mxu0 0.0
        %1499 = vmatpush1.msra.mxu0 0.0
        %1500 = vmatprep.subr.mxu0 0.0
        %1501 = vmatpush1.msra.mxu0 0.0
        %1502 = vmatprep.subr.mxu0 0.0
        %1503 = vmatpush1.msra.mxu0 0.0
        %1504 = vmatprep.subr.mxu0 0.0
        %1505 = vmatpush1.msra.mxu0 0.0
        %1506 = vmatprep.subr.mxu0 0.0
        %1507 = vmatpush1.msra.mxu0 0.0
        %1508 = vmatprep.subr.mxu0 0.0
        %1509 = vmatpush1.msra.mxu0 0.0
        %1510 = vmatprep.subr.mxu0 0.0
        %1511 = vmatpush1.msra.mxu0 0.0
        %1512 = vmatprep.subr.mxu0 0.0
        %1513 = vmatpush1.msra.mxu0 0.0
        %1514 = vmatprep.subr.mxu0 0.0
        %1515 = vmatpush1.msra.mxu0 0.0
        %1516 = vmatprep.subr.mxu0 0.0
        %1517 = vmatpush1.msra.mxu0 0.0
        %1518 = vmatprep.subr.mxu0 0.0
        %1519 = vmatpush1.msra.mxu0 0.0
        %1520 = vmatprep.subr.mxu0 0.0
        %1521 = vmatpush1.msra.mxu0 0.0
        %1522 = vmatprep.subr.mxu0 0.0
        %1523 = vmatpush1.msra.mxu0 0.0
        %1524 = vmatprep.subr.mxu0 0.0
        %1525 = vmatpush1.msra.mxu0 0.0
        %1526 = vmatprep.subr.mxu0 0.0
        %1527 = vmatpush1.msra.mxu0 0.0
        %1528 = vmatprep.subr.mxu0 0.0
        %1529 = vmatpush1.msra.mxu0 0.0
        %1530 = vmatprep.subr.mxu0 0.0
        %1531 = vmatpush1.msra.mxu0 0.0
        %1532 = vmatprep.subr.mxu0 0.0
        %1533 = vmatpush1.msra.mxu0 0.0
        %1534 = vmatprep.subr.mxu0 0.0
        %1535 = vmatpush1.msra.mxu0 0.0
        %1536 = vmatprep.subr.mxu0 0.0
        %1537 = vmatpush1.msra.mxu0 0.0
        %1538 = vmatprep.subr.mxu0 0.0
        %1539 = vmatpush1.msra.mxu0 0.0
        %1540 = vmatprep.subr.mxu0 0.0
        %1541 = vmatpush1.msra.mxu0 0.0
        %1542 = vmatprep.subr.mxu0 0.0
        %1543 = vmatpush1.msra.mxu0 0.0
        %1544 = vmatprep.subr.mxu0 0.0
        %1545 = vmatpush1.msra.mxu0 0.0
        %1546 = vmatprep.mubr.f32.mxu0 0.0
        %1547 = vmatmul.mubr.f32.gmra.mrb[0].mxu0 %v570
        %v1548 = vpop.f32.mrb[0].mxu0
        %v1549 = vadd.f32 0.0, %v1548
        %v1550 = vpop.f32.mrb[0].mxu0
        %1551 = vdwg.mxu0
        %1552 = vmatprep.subr.mxu0 0.0
        %1553 = vmatpush1.msra.mxu0 %v553
        %1554 = vmatprep.subr.mxu0 0.0
        %1555 = vmatpush1.msra.mxu0 %v554
        %1556 = vmatprep.subr.mxu0 0.0
        %1557 = vmatpush1.msra.mxu0 %v555
        %1558 = vmatprep.subr.mxu0 0.0
        %1559 = vmatpush1.msra.mxu0 %v556
        %1560 = vmatprep.subr.mxu0 0.0
        %1561 = vmatpush1.msra.mxu0 %v557
        %1562 = vmatprep.subr.mxu0 0.0
        %1563 = vmatpush1.msra.mxu0 %v558
        %1564 = vmatprep.subr.mxu0 0.0
        %1565 = vmatpush1.msra.mxu0 %v559
        %1566 = vmatprep.subr.mxu0 0.0
        %1567 = vmatpush1.msra.mxu0 %v560
        %1568 = vmatprep.subr.mxu0 0.0
        %1569 = vmatpush1.msra.mxu0 0.0
        %1570 = vmatprep.subr.mxu0 0.0
        %1571 = vmatpush1.msra.mxu0 0.0
        %1572 = vmatprep.subr.mxu0 0.0
        %1573 = vmatpush1.msra.mxu0 0.0
        %1574 = vmatprep.subr.mxu0 0.0
        %1575 = vmatpush1.msra.mxu0 0.0
        %1576 = vmatprep.subr.mxu0 0.0
        %1577 = vmatpush1.msra.mxu0 0.0
        %1578 = vmatprep.subr.mxu0 0.0
        %1579 = vmatpush1.msra.mxu0 0.0
        %1580 = vmatprep.subr.mxu0 0.0
        %1581 = vmatpush1.msra.mxu0 0.0
        %1582 = vmatprep.subr.mxu0 0.0
        %1583 = vmatpush1.msra.mxu0 0.0
        %1584 = vmatprep.subr.mxu0 0.0
        %1585 = vmatpush1.msra.mxu0 0.0
        %1586 = vmatprep.subr.mxu0 0.0
        %1587 = vmatpush1.msra.mxu0 0.0
        %1588 = vmatprep.subr.mxu0 0.0
        %1589 = vmatpush1.msra.mxu0 0.0
        %1590 = vmatprep.subr.mxu0 0.0
        %1591 = vmatpush1.msra.mxu0 0.0
        %1592 = vmatprep.subr.mxu0 0.0
        %1593 = vmatpush1.msra.mxu0 0.0
        %1594 = vmatprep.subr.mxu0 0.0
        %1595 = vmatpush1.msra.mxu0 0.0
        %1596 = vmatprep.subr.mxu0 0.0
        %1597 = vmatpush1.msra.mxu0 0.0
        %1598 = vmatprep.subr.mxu0 0.0
        %1599 = vmatpush1.msra.mxu0 0.0
        %1600 = vmatprep.subr.mxu0 0.0
        %1601 = vmatpush1.msra.mxu0 0.0
        %1602 = vmatprep.subr.mxu0 0.0
        %1603 = vmatpush1.msra.mxu0 0.0
        %1604 = vmatprep.subr.mxu0 0.0
        %1605 = vmatpush1.msra.mxu0 0.0
        %1606 = vmatprep.subr.mxu0 0.0
        %1607 = vmatpush1.msra.mxu0 0.0
        %1608 = vmatprep.subr.mxu0 0.0
        %1609 = vmatpush1.msra.mxu0 0.0
        %1610 = vmatprep.subr.mxu0 0.0
        %1611 = vmatpush1.msra.mxu0 0.0
        %1612 = vmatprep.subr.mxu0 0.0
        %1613 = vmatpush1.msra.mxu0 0.0
        %1614 = vmatprep.subr.mxu0 0.0
        %1615 = vmatpush1.msra.mxu0 0.0
        %1616 = vmatprep.mubr.f32.mxu0 0.0
        %1617 = vmatmul.mubr.f32.gmra.mrb[0].mxu0 %v570
        %v1618 = vpop.f32.mrb[0].mxu0
        %v1619 = vadd.f32 0.0, %v1618
        %v1620 = vpop.f32.mrb[0].mxu0
        %1621 = vdwg.mxu0
        %1622 = vmatprep.subr.mxu0 0.0
        %1623 = vmatpush1.msra.mxu0 %v561
        %1624 = vmatprep.subr.mxu0 0.0
        %1625 = vmatpush1.msra.mxu0 %v562
        %1626 = vmatprep.subr.mxu0 0.0
        %1627 = vmatpush1.msra.mxu0 %v563
        %1628 = vmatprep.subr.mxu0 0.0
        %1629 = vmatpush1.msra.mxu0 %v564
        %1630 = vmatprep.subr.mxu0 0.0
        %1631 = vmatpush1.msra.mxu0 %v565
        %1632 = vmatprep.subr.mxu0 0.0
        %1633 = vmatpush1.msra.mxu0 %v566
        %1634 = vmatprep.subr.mxu0 0.0
        %1635 = vmatpush1.msra.mxu0 %v567
        %1636 = vmatprep.subr.mxu0 0.0
        %1637 = vmatpush1.msra.mxu0 %v568
        %1638 = vmatprep.subr.mxu0 0.0
        %1639 = vmatpush1.msra.mxu0 0.0
        %1640 = vmatprep.subr.mxu0 0.0
        %1641 = vmatpush1.msra.mxu0 0.0
        %1642 = vmatprep.subr.mxu0 0.0
        %1643 = vmatpush1.msra.mxu0 0.0
        %1644 = vmatprep.subr.mxu0 0.0
        %1645 = vmatpush1.msra.mxu0 0.0
        %1646 = vmatprep.subr.mxu0 0.0
        %1647 = vmatpush1.msra.mxu0 0.0
        %1648 = vmatprep.subr.mxu0 0.0
        %1649 = vmatpush1.msra.mxu0 0.0
        %1650 = vmatprep.subr.mxu0 0.0
        %1651 = vmatpush1.msra.mxu0 0.0
        %1652 = vmatprep.subr.mxu0 0.0
        %1653 = vmatpush1.msra.mxu0 0.0
        %1654 = vmatprep.subr.mxu0 0.0
        %1655 = vmatpush1.msra.mxu0 0.0
        %1656 = vmatprep.subr.mxu0 0.0
        %1657 = vmatpush1.msra.mxu0 0.0
        %1658 = vmatprep.subr.mxu0 0.0
        %1659 = vmatpush1.msra.mxu0 0.0
        %1660 = vmatprep.subr.mxu0 0.0
        %1661 = vmatpush1.msra.mxu0 0.0
        %1662 = vmatprep.subr.mxu0 0.0
        %1663 = vmatpush1.msra.mxu0 0.0
        %1664 = vmatprep.subr.mxu0 0.0
        %1665 = vmatpush1.msra.mxu0 0.0
        %1666 = vmatprep.subr.mxu0 0.0
        %1667 = vmatpush1.msra.mxu0 0.0
        %1668 = vmatprep.subr.mxu0 0.0
        %1669 = vmatpush1.msra.mxu0 0.0
        %1670 = vmatprep.subr.mxu0 0.0
        %1671 = vmatpush1.msra.mxu0 0.0
        %1672 = vmatprep.subr.mxu0 0.0
        %1673 = vmatpush1.msra.mxu0 0.0
        %1674 = vmatprep.subr.mxu0 0.0
        %1675 = vmatpush1.msra.mxu0 0.0
        %1676 = vmatprep.subr.mxu0 0.0
        %1677 = vmatpush1.msra.mxu0 0.0
        %1678 = vmatprep.subr.mxu0 0.0
        %1679 = vmatpush1.msra.mxu0 0.0
        %1680 = vmatprep.subr.mxu0 0.0
        %1681 = vmatpush1.msra.mxu0 0.0
        %1682 = vmatprep.subr.mxu0 0.0
        %1683 = vmatpush1.msra.mxu0 0.0
        %1684 = vmatprep.subr.mxu0 0.0
        %1685 = vmatpush1.msra.mxu0 0.0
        %1686 = vmatprep.mubr.f32.mxu0 0.0
        %1687 = vmatmul.mubr.f32.gmra.mrb[0].mxu0 %v570
        %v1688 = vpop.f32.mrb[0].mxu0
        %v1689 = vadd.f32 0.0, %v1688
        %v1690 = vpop.f32.mrb[0].mxu0
        %1691 = vdwg.mxu0
        %1693 = vrot.lane.b32.xlu0 %v639, 124
        %v1694 = vpop.permute.xlu0 %1693
        %vm1695 = vcmask 31744
        %v1696 = vsel %vm1695, %v639, 0
        %v1698 = vsel %vm1695, %v1694, 0
        %1700 = vmatprep.subr.mxu0 0.0
        %1701 = vmatpush1.xpose.msra.mxu0 %v1698
        %1702 = vmatprep.subr.mxu0 0.0
        %1703 = vmatpush1.xpose.msra.mxu0 0.0
        %1704 = vmatprep.subr.mxu0 0.0
        %1705 = vmatpush1.xpose.msra.mxu0 0.0
        %1706 = vmatprep.subr.mxu0 0.0
        %1707 = vmatpush1.xpose.msra.mxu0 0.0
        %1708 = vmatprep.subr.mxu0 0.0
        %1709 = vmatpush1.xpose.msra.mxu0 0.0
        %1710 = vmatprep.subr.mxu0 0.0
        %1711 = vmatpush1.xpose.msra.mxu0 0.0
        %1712 = vmatprep.subr.mxu0 0.0
        %1713 = vmatpush1.xpose.msra.mxu0 0.0
        %1714 = vmatprep.subr.mxu0 0.0
        %1715 = vmatpush1.xpose.msra.mxu0 0.0
        %1716 = vmatprep.subr.mxu0 0.0
        %1717 = vmatpush1.xpose.msra.mxu0 0.0
        %1718 = vmatprep.subr.mxu0 0.0
        %1719 = vmatpush1.xpose.msra.mxu0 0.0
        %1720 = vmatprep.subr.mxu0 0.0
        %1721 = vmatpush1.xpose.msra.mxu0 0.0
        %1722 = vmatprep.subr.mxu0 0.0
        %1723 = vmatpush1.xpose.msra.mxu0 0.0
        %1724 = vmatprep.subr.mxu0 0.0
        %1725 = vmatpush1.xpose.msra.mxu0 0.0
        %1726 = vmatprep.subr.mxu0 0.0
        %1727 = vmatpush1.xpose.msra.mxu0 0.0
        %1728 = vmatprep.subr.mxu0 0.0
        %1729 = vmatpush1.xpose.msra.mxu0 0.0
        %1730 = vmatprep.subr.mxu0 0.0
        %1731 = vmatpush1.xpose.msra.mxu0 0.0
        %1732 = vmatprep.subr.mxu0 0.0
        %1733 = vmatpush1.xpose.msra.mxu0 0.0
        %1734 = vmatprep.subr.mxu0 0.0
        %1735 = vmatpush1.xpose.msra.mxu0 0.0
        %1736 = vmatprep.subr.mxu0 0.0
        %1737 = vmatpush1.xpose.msra.mxu0 0.0
        %1738 = vmatprep.subr.mxu0 0.0
        %1739 = vmatpush1.xpose.msra.mxu0 0.0
        %1740 = vmatprep.subr.mxu0 0.0
        %1741 = vmatpush1.xpose.msra.mxu0 0.0
        %1742 = vmatprep.subr.mxu0 0.0
        %1743 = vmatpush1.xpose.msra.mxu0 0.0
        %1744 = vmatprep.subr.mxu0 0.0
        %1745 = vmatpush1.xpose.msra.mxu0 0.0
        %1746 = vmatprep.subr.mxu0 0.0
        %1747 = vmatpush1.xpose.msra.mxu0 0.0
        %1748 = vmatprep.subr.mxu0 0.0
        %1749 = vmatpush1.xpose.msra.mxu0 0.0
        %1750 = vmatprep.subr.mxu0 0.0
        %1751 = vmatpush1.xpose.msra.mxu0 0.0
        %1752 = vmatprep.subr.mxu0 0.0
        %1753 = vmatpush1.xpose.msra.mxu0 0.0
        %1754 = vmatprep.subr.mxu0 0.0
        %1755 = vmatpush1.xpose.msra.mxu0 0.0
        %1756 = vmatprep.subr.mxu0 0.0
        %1757 = vmatpush1.xpose.msra.mxu0 0.0
        %1758 = vmatprep.subr.mxu0 0.0
        %1759 = vmatpush1.xpose.msra.mxu0 0.0
        %1760 = vmatprep.subr.mxu0 0.0
        %1761 = vmatpush1.xpose.msra.mxu0 0.0
        %1762 = vmatprep.subr.mxu0 0.0
        %1763 = vmatpush1.xpose.msra.mxu0 0.0
        %1764 = vmatprep.mubr.f32.mxu0 0.0
        %1765 = vmatmul.mubr.f32.gmra.mrb[0].mxu0 %v1696
        %v1766 = vpop.f32.mrb[0].mxu0
        %v1767 = vadd.f32 0.0, %v1766
        %v1768 = vpop.f32.mrb[0].mxu0
        %1769 = vdwg.mxu0
        %1771 = vrot.lane.b32.xlu0 %v709, 124
        %v1772 = vpop.permute.xlu0 %1771
        %v1773 = vsel %vm1695, %v709, 0
        %v1775 = vsel %vm1695, %v1772, 0
        %1777 = vmatprep.subr.mxu0 0.0
        %1778 = vmatpush1.xpose.msra.mxu0 %v1775
        %1779 = vmatprep.subr.mxu0 0.0
        %1780 = vmatpush1.xpose.msra.mxu0 0.0
        %1781 = vmatprep.subr.mxu0 0.0
        %1782 = vmatpush1.xpose.msra.mxu0 0.0
        %1783 = vmatprep.subr.mxu0 0.0
        %1784 = vmatpush1.xpose.msra.mxu0 0.0
        %1785 = vmatprep.subr.mxu0 0.0
        %1786 = vmatpush1.xpose.msra.mxu0 0.0
        %1787 = vmatprep.subr.mxu0 0.0
        %1788 = vmatpush1.xpose.msra.mxu0 0.0
        %1789 = vmatprep.subr.mxu0 0.0
        %1790 = vmatpush1.xpose.msra.mxu0 0.0
        %1791 = vmatprep.subr.mxu0 0.0
        %1792 = vmatpush1.xpose.msra.mxu0 0.0
        %1793 = vmatprep.subr.mxu0 0.0
        %1794 = vmatpush1.xpose.msra.mxu0 0.0
        %1795 = vmatprep.subr.mxu0 0.0
        %1796 = vmatpush1.xpose.msra.mxu0 0.0
        %1797 = vmatprep.subr.mxu0 0.0
        %1798 = vmatpush1.xpose.msra.mxu0 0.0
        %1799 = vmatprep.subr.mxu0 0.0
        %1800 = vmatpush1.xpose.msra.mxu0 0.0
        %1801 = vmatprep.subr.mxu0 0.0
        %1802 = vmatpush1.xpose.msra.mxu0 0.0
        %1803 = vmatprep.subr.mxu0 0.0
        %1804 = vmatpush1.xpose.msra.mxu0 0.0
        %1805 = vmatprep.subr.mxu0 0.0
        %1806 = vmatpush1.xpose.msra.mxu0 0.0
        %1807 = vmatprep.subr.mxu0 0.0
        %1808 = vmatpush1.xpose.msra.mxu0 0.0
        %1809 = vmatprep.subr.mxu0 0.0
        %1810 = vmatpush1.xpose.msra.mxu0 0.0
        %1811 = vmatprep.subr.mxu0 0.0
        %1812 = vmatpush1.xpose.msra.mxu0 0.0
        %1813 = vmatprep.subr.mxu0 0.0
        %1814 = vmatpush1.xpose.msra.mxu0 0.0
        %1815 = vmatprep.subr.mxu0 0.0
        %1816 = vmatpush1.xpose.msra.mxu0 0.0
        %1817 = vmatprep.subr.mxu0 0.0
        %1818 = vmatpush1.xpose.msra.mxu0 0.0
        %1819 = vmatprep.subr.mxu0 0.0
        %1820 = vmatpush1.xpose.msra.mxu0 0.0
        %1821 = vmatprep.subr.mxu0 0.0
        %1822 = vmatpush1.xpose.msra.mxu0 0.0
        %1823 = vmatprep.subr.mxu0 0.0
        %1824 = vmatpush1.xpose.msra.mxu0 0.0
        %1825 = vmatprep.subr.mxu0 0.0
        %1826 = vmatpush1.xpose.msra.mxu0 0.0
        %1827 = vmatprep.subr.mxu0 0.0
        %1828 = vmatpush1.xpose.msra.mxu0 0.0
        %1829 = vmatprep.subr.mxu0 0.0
        %1830 = vmatpush1.xpose.msra.mxu0 0.0
        %1831 = vmatprep.subr.mxu0 0.0
        %1832 = vmatpush1.xpose.msra.mxu0 0.0
        %1833 = vmatprep.subr.mxu0 0.0
        %1834 = vmatpush1.xpose.msra.mxu0 0.0
        %1835 = vmatprep.subr.mxu0 0.0
        %1836 = vmatpush1.xpose.msra.mxu0 0.0
        %1837 = vmatprep.subr.mxu0 0.0
        %1838 = vmatpush1.xpose.msra.mxu0 0.0
        %1839 = vmatprep.subr.mxu0 0.0
        %1840 = vmatpush1.xpose.msra.mxu0 0.0
        %1841 = vmatprep.mubr.f32.mxu0 0.0
        %1842 = vmatmul.mubr.f32.gmra.mrb[0].mxu0 %v1773
        %v1843 = vpop.f32.mrb[0].mxu0
        %v1844 = vadd.f32 0.0, %v1843
        %v1845 = vpop.f32.mrb[0].mxu0
        %1846 = vdwg.mxu0
        %1848 = vrot.lane.b32.xlu0 %v779, 124
        %v1849 = vpop.permute.xlu0 %1848
        %v1850 = vsel %vm1695, %v779, 0
        %v1852 = vsel %vm1695, %v1849, 0
        %1854 = vmatprep.subr.mxu0 0.0
        %1855 = vmatpush1.xpose.msra.mxu0 %v1852
        %1856 = vmatprep.subr.mxu0 0.0
        %1857 = vmatpush1.xpose.msra.mxu0 0.0
        %1858 = vmatprep.subr.mxu0 0.0
        %1859 = vmatpush1.xpose.msra.mxu0 0.0
        %1860 = vmatprep.subr.mxu0 0.0
        %1861 = vmatpush1.xpose.msra.mxu0 0.0
        %1862 = vmatprep.subr.mxu0 0.0
        %1863 = vmatpush1.xpose.msra.mxu0 0.0
        %1864 = vmatprep.subr.mxu0 0.0
        %1865 = vmatpush1.xpose.msra.mxu0 0.0
        %1866 = vmatprep.subr.mxu0 0.0
        %1867 = vmatpush1.xpose.msra.mxu0 0.0
        %1868 = vmatprep.subr.mxu0 0.0
        %1869 = vmatpush1.xpose.msra.mxu0 0.0
        %1870 = vmatprep.subr.mxu0 0.0
        %1871 = vmatpush1.xpose.msra.mxu0 0.0
        %1872 = vmatprep.subr.mxu0 0.0
        %1873 = vmatpush1.xpose.msra.mxu0 0.0
        %1874 = vmatprep.subr.mxu0 0.0
        %1875 = vmatpush1.xpose.msra.mxu0 0.0
        %1876 = vmatprep.subr.mxu0 0.0
        %1877 = vmatpush1.xpose.msra.mxu0 0.0
        %1878 = vmatprep.subr.mxu0 0.0
        %1879 = vmatpush1.xpose.msra.mxu0 0.0
        %1880 = vmatprep.subr.mxu0 0.0
        %1881 = vmatpush1.xpose.msra.mxu0 0.0
        %1882 = vmatprep.subr.mxu0 0.0
        %1883 = vmatpush1.xpose.msra.mxu0 0.0
        %1884 = vmatprep.subr.mxu0 0.0
        %1885 = vmatpush1.xpose.msra.mxu0 0.0
        %1886 = vmatprep.subr.mxu0 0.0
        %1887 = vmatpush1.xpose.msra.mxu0 0.0
        %1888 = vmatprep.subr.mxu0 0.0
        %1889 = vmatpush1.xpose.msra.mxu0 0.0
        %1890 = vmatprep.subr.mxu0 0.0
        %1891 = vmatpush1.xpose.msra.mxu0 0.0
        %1892 = vmatprep.subr.mxu0 0.0
        %1893 = vmatpush1.xpose.msra.mxu0 0.0
        %1894 = vmatprep.subr.mxu0 0.0
        %1895 = vmatpush1.xpose.msra.mxu0 0.0
        %1896 = vmatprep.subr.mxu0 0.0
        %1897 = vmatpush1.xpose.msra.mxu0 0.0
        %1898 = vmatprep.subr.mxu0 0.0
        %1899 = vmatpush1.xpose.msra.mxu0 0.0
        %1900 = vmatprep.subr.mxu0 0.0
        %1901 = vmatpush1.xpose.msra.mxu0 0.0
        %1902 = vmatprep.subr.mxu0 0.0
        %1903 = vmatpush1.xpose.msra.mxu0 0.0
        %1904 = vmatprep.subr.mxu0 0.0
        %1905 = vmatpush1.xpose.msra.mxu0 0.0
        %1906 = vmatprep.subr.mxu0 0.0
        %1907 = vmatpush1.xpose.msra.mxu0 0.0
        %1908 = vmatprep.subr.mxu0 0.0
        %1909 = vmatpush1.xpose.msra.mxu0 0.0
        %1910 = vmatprep.subr.mxu0 0.0
        %1911 = vmatpush1.xpose.msra.mxu0 0.0
        %1912 = vmatprep.subr.mxu0 0.0
        %1913 = vmatpush1.xpose.msra.mxu0 0.0
        %1914 = vmatprep.subr.mxu0 0.0
        %1915 = vmatpush1.xpose.msra.mxu0 0.0
        %1916 = vmatprep.subr.mxu0 0.0
        %1917 = vmatpush1.xpose.msra.mxu0 0.0
        %1918 = vmatprep.mubr.f32.mxu0 0.0
        %1919 = vmatmul.mubr.f32.gmra.mrb[0].mxu0 %v1850
        %v1920 = vpop.f32.mrb[0].mxu0
        %v1921 = vadd.f32 0.0, %v1920
        %v1922 = vpop.f32.mrb[0].mxu0
        %1923 = vdwg.mxu0
        %1925 = vrot.lane.b32.xlu0 %v849, 124
        %v1926 = vpop.permute.xlu0 %1925
        %v1927 = vsel %vm1695, %v849, 0
        %v1929 = vsel %vm1695, %v1926, 0
        %1931 = vmatprep.subr.mxu0 0.0
        %1932 = vmatpush1.xpose.msra.mxu0 %v1929
        %1933 = vmatprep.subr.mxu0 0.0
        %1934 = vmatpush1.xpose.msra.mxu0 0.0
        %1935 = vmatprep.subr.mxu0 0.0
        %1936 = vmatpush1.xpose.msra.mxu0 0.0
        %1937 = vmatprep.subr.mxu0 0.0
        %1938 = vmatpush1.xpose.msra.mxu0 0.0
        %1939 = vmatprep.subr.mxu0 0.0
        %1940 = vmatpush1.xpose.msra.mxu0 0.0
        %1941 = vmatprep.subr.mxu0 0.0
        %1942 = vmatpush1.xpose.msra.mxu0 0.0
        %1943 = vmatprep.subr.mxu0 0.0
        %1944 = vmatpush1.xpose.msra.mxu0 0.0
        %1945 = vmatprep.subr.mxu0 0.0
        %1946 = vmatpush1.xpose.msra.mxu0 0.0
        %1947 = vmatprep.subr.mxu0 0.0
        %1948 = vmatpush1.xpose.msra.mxu0 0.0
        %1949 = vmatprep.subr.mxu0 0.0
        %1950 = vmatpush1.xpose.msra.mxu0 0.0
        %1951 = vmatprep.subr.mxu0 0.0
        %1952 = vmatpush1.xpose.msra.mxu0 0.0
        %1953 = vmatprep.subr.mxu0 0.0
        %1954 = vmatpush1.xpose.msra.mxu0 0.0
        %1955 = vmatprep.subr.mxu0 0.0
        %1956 = vmatpush1.xpose.msra.mxu0 0.0
        %1957 = vmatprep.subr.mxu0 0.0
        %1958 = vmatpush1.xpose.msra.mxu0 0.0
        %1959 = vmatprep.subr.mxu0 0.0
        %1960 = vmatpush1.xpose.msra.mxu0 0.0
        %1961 = vmatprep.subr.mxu0 0.0
        %1962 = vmatpush1.xpose.msra.mxu0 0.0
        %1963 = vmatprep.subr.mxu0 0.0
        %1964 = vmatpush1.xpose.msra.mxu0 0.0
        %1965 = vmatprep.subr.mxu0 0.0
        %1966 = vmatpush1.xpose.msra.mxu0 0.0
        %1967 = vmatprep.subr.mxu0 0.0
        %1968 = vmatpush1.xpose.msra.mxu0 0.0
        %1969 = vmatprep.subr.mxu0 0.0
        %1970 = vmatpush1.xpose.msra.mxu0 0.0
        %1971 = vmatprep.subr.mxu0 0.0
        %1972 = vmatpush1.xpose.msra.mxu0 0.0
        %1973 = vmatprep.subr.mxu0 0.0
        %1974 = vmatpush1.xpose.msra.mxu0 0.0
        %1975 = vmatprep.subr.mxu0 0.0
        %1976 = vmatpush1.xpose.msra.mxu0 0.0
        %1977 = vmatprep.subr.mxu0 0.0
        %1978 = vmatpush1.xpose.msra.mxu0 0.0
        %1979 = vmatprep.subr.mxu0 0.0
        %1980 = vmatpush1.xpose.msra.mxu0 0.0
        %1981 = vmatprep.subr.mxu0 0.0
        %1982 = vmatpush1.xpose.msra.mxu0 0.0
        %1983 = vmatprep.subr.mxu0 0.0
        %1984 = vmatpush1.xpose.msra.mxu0 0.0
        %1985 = vmatprep.subr.mxu0 0.0
        %1986 = vmatpush1.xpose.msra.mxu0 0.0
        %1987 = vmatprep.subr.mxu0 0.0
        %1988 = vmatpush1.xpose.msra.mxu0 0.0
        %1989 = vmatprep.subr.mxu0 0.0
        %1990 = vmatpush1.xpose.msra.mxu0 0.0
        %1991 = vmatprep.subr.mxu0 0.0
        %1992 = vmatpush1.xpose.msra.mxu0 0.0
        %1993 = vmatprep.subr.mxu0 0.0
        %1994 = vmatpush1.xpose.msra.mxu0 0.0
        %1995 = vmatprep.mubr.f32.mxu0 0.0
        %1996 = vmatmul.mubr.f32.gmra.mrb[0].mxu0 %v1927
        %v1997 = vpop.f32.mrb[0].mxu0
        %v1998 = vadd.f32 0.0, %v1997
        %v1999 = vpop.f32.mrb[0].mxu0
        %2000 = vdwg.mxu0
        %2002 = vrot.lane.b32.xlu0 %v919, 124
        %v2003 = vpop.permute.xlu0 %2002
        %v2004 = vsel %vm1695, %v919, 0
        %v2006 = vsel %vm1695, %v2003, 0
        %2008 = vmatprep.subr.mxu0 0.0
        %2009 = vmatpush1.xpose.msra.mxu0 %v2006
        %2010 = vmatprep.subr.mxu0 0.0
        %2011 = vmatpush1.xpose.msra.mxu0 0.0
        %2012 = vmatprep.subr.mxu0 0.0
        %2013 = vmatpush1.xpose.msra.mxu0 0.0
        %2014 = vmatprep.subr.mxu0 0.0
        %2015 = vmatpush1.xpose.msra.mxu0 0.0
        %2016 = vmatprep.subr.mxu0 0.0
        %2017 = vmatpush1.xpose.msra.mxu0 0.0
        %2018 = vmatprep.subr.mxu0 0.0
        %2019 = vmatpush1.xpose.msra.mxu0 0.0
        %2020 = vmatprep.subr.mxu0 0.0
        %2021 = vmatpush1.xpose.msra.mxu0 0.0
        %2022 = vmatprep.subr.mxu0 0.0
        %2023 = vmatpush1.xpose.msra.mxu0 0.0
        %2024 = vmatprep.subr.mxu0 0.0
        %2025 = vmatpush1.xpose.msra.mxu0 0.0
        %2026 = vmatprep.subr.mxu0 0.0
        %2027 = vmatpush1.xpose.msra.mxu0 0.0
        %2028 = vmatprep.subr.mxu0 0.0
        %2029 = vmatpush1.xpose.msra.mxu0 0.0
        %2030 = vmatprep.subr.mxu0 0.0
        %2031 = vmatpush1.xpose.msra.mxu0 0.0
        %2032 = vmatprep.subr.mxu0 0.0
        %2033 = vmatpush1.xpose.msra.mxu0 0.0
        %2034 = vmatprep.subr.mxu0 0.0
        %2035 = vmatpush1.xpose.msra.mxu0 0.0
        %2036 = vmatprep.subr.mxu0 0.0
        %2037 = vmatpush1.xpose.msra.mxu0 0.0
        %2038 = vmatprep.subr.mxu0 0.0
        %2039 = vmatpush1.xpose.msra.mxu0 0.0
        %2040 = vmatprep.subr.mxu0 0.0
        %2041 = vmatpush1.xpose.msra.mxu0 0.0
        %2042 = vmatprep.subr.mxu0 0.0
        %2043 = vmatpush1.xpose.msra.mxu0 0.0
        %2044 = vmatprep.subr.mxu0 0.0
        %2045 = vmatpush1.xpose.msra.mxu0 0.0
        %2046 = vmatprep.subr.mxu0 0.0
        %2047 = vmatpush1.xpose.msra.mxu0 0.0
        %2048 = vmatprep.subr.mxu0 0.0
        %2049 = vmatpush1.xpose.msra.mxu0 0.0
        %2050 = vmatprep.subr.mxu0 0.0
        %2051 = vmatpush1.xpose.msra.mxu0 0.0
        %2052 = vmatprep.subr.mxu0 0.0
        %2053 = vmatpush1.xpose.msra.mxu0 0.0
        %2054 = vmatprep.subr.mxu0 0.0
        %2055 = vmatpush1.xpose.msra.mxu0 0.0
        %2056 = vmatprep.subr.mxu0 0.0
        %2057 = vmatpush1.xpose.msra.mxu0 0.0
        %2058 = vmatprep.subr.mxu0 0.0
        %2059 = vmatpush1.xpose.msra.mxu0 0.0
        %2060 = vmatprep.subr.mxu0 0.0
        %2061 = vmatpush1.xpose.msra.mxu0 0.0
        %2062 = vmatprep.subr.mxu0 0.0
        %2063 = vmatpush1.xpose.msra.mxu0 0.0
        %2064 = vmatprep.subr.mxu0 0.0
        %2065 = vmatpush1.xpose.msra.mxu0 0.0
        %2066 = vmatprep.subr.mxu0 0.0
        %2067 = vmatpush1.xpose.msra.mxu0 0.0
        %2068 = vmatprep.subr.mxu0 0.0
        %2069 = vmatpush1.xpose.msra.mxu0 0.0
        %2070 = vmatprep.subr.mxu0 0.0
        %2071 = vmatpush1.xpose.msra.mxu0 0.0
        %2072 = vmatprep.mubr.f32.mxu0 0.0
        %2073 = vmatmul.mubr.f32.gmra.mrb[0].mxu0 %v2004
        %v2074 = vpop.f32.mrb[0].mxu0
        %v2075 = vadd.f32 0.0, %v2074
        %v2076 = vpop.f32.mrb[0].mxu0
        %2077 = vdwg.mxu0
        %2079 = vrot.lane.b32.xlu0 %v989, 124
        %v2080 = vpop.permute.xlu0 %2079
        %v2081 = vsel %vm1695, %v989, 0
        %v2083 = vsel %vm1695, %v2080, 0
        %2085 = vmatprep.subr.mxu0 0.0
        %2086 = vmatpush1.xpose.msra.mxu0 %v2083
        %2087 = vmatprep.subr.mxu0 0.0
        %2088 = vmatpush1.xpose.msra.mxu0 0.0
        %2089 = vmatprep.subr.mxu0 0.0
        %2090 = vmatpush1.xpose.msra.mxu0 0.0
        %2091 = vmatprep.subr.mxu0 0.0
        %2092 = vmatpush1.xpose.msra.mxu0 0.0
        %2093 = vmatprep.subr.mxu0 0.0
        %2094 = vmatpush1.xpose.msra.mxu0 0.0
        %2095 = vmatprep.subr.mxu0 0.0
        %2096 = vmatpush1.xpose.msra.mxu0 0.0
        %2097 = vmatprep.subr.mxu0 0.0
        %2098 = vmatpush1.xpose.msra.mxu0 0.0
        %2099 = vmatprep.subr.mxu0 0.0
        %2100 = vmatpush1.xpose.msra.mxu0 0.0
        %2101 = vmatprep.subr.mxu0 0.0
        %2102 = vmatpush1.xpose.msra.mxu0 0.0
        %2103 = vmatprep.subr.mxu0 0.0
        %2104 = vmatpush1.xpose.msra.mxu0 0.0
        %2105 = vmatprep.subr.mxu0 0.0
        %2106 = vmatpush1.xpose.msra.mxu0 0.0
        %2107 = vmatprep.subr.mxu0 0.0
        %2108 = vmatpush1.xpose.msra.mxu0 0.0
        %2109 = vmatprep.subr.mxu0 0.0
        %2110 = vmatpush1.xpose.msra.mxu0 0.0
        %2111 = vmatprep.subr.mxu0 0.0
        %2112 = vmatpush1.xpose.msra.mxu0 0.0
        %2113 = vmatprep.subr.mxu0 0.0
        %2114 = vmatpush1.xpose.msra.mxu0 0.0
        %2115 = vmatprep.subr.mxu0 0.0
        %2116 = vmatpush1.xpose.msra.mxu0 0.0
        %2117 = vmatprep.subr.mxu0 0.0
        %2118 = vmatpush1.xpose.msra.mxu0 0.0
        %2119 = vmatprep.subr.mxu0 0.0
        %2120 = vmatpush1.xpose.msra.mxu0 0.0
        %2121 = vmatprep.subr.mxu0 0.0
        %2122 = vmatpush1.xpose.msra.mxu0 0.0
        %2123 = vmatprep.subr.mxu0 0.0
        %2124 = vmatpush1.xpose.msra.mxu0 0.0
        %2125 = vmatprep.subr.mxu0 0.0
        %2126 = vmatpush1.xpose.msra.mxu0 0.0
        %2127 = vmatprep.subr.mxu0 0.0
        %2128 = vmatpush1.xpose.msra.mxu0 0.0
        %2129 = vmatprep.subr.mxu0 0.0
        %2130 = vmatpush1.xpose.msra.mxu0 0.0
        %2131 = vmatprep.subr.mxu0 0.0
        %2132 = vmatpush1.xpose.msra.mxu0 0.0
        %2133 = vmatprep.subr.mxu0 0.0
        %2134 = vmatpush1.xpose.msra.mxu0 0.0
        %2135 = vmatprep.subr.mxu0 0.0
        %2136 = vmatpush1.xpose.msra.mxu0 0.0
        %2137 = vmatprep.subr.mxu0 0.0
        %2138 = vmatpush1.xpose.msra.mxu0 0.0
        %2139 = vmatprep.subr.mxu0 0.0
        %2140 = vmatpush1.xpose.msra.mxu0 0.0
        %2141 = vmatprep.subr.mxu0 0.0
        %2142 = vmatpush1.xpose.msra.mxu0 0.0
        %2143 = vmatprep.subr.mxu0 0.0
        %2144 = vmatpush1.xpose.msra.mxu0 0.0
        %2145 = vmatprep.subr.mxu0 0.0
        %2146 = vmatpush1.xpose.msra.mxu0 0.0
        %2147 = vmatprep.subr.mxu0 0.0
        %2148 = vmatpush1.xpose.msra.mxu0 0.0
        %2149 = vmatprep.mubr.f32.mxu0 0.0
        %2150 = vmatmul.mubr.f32.gmra.mrb[0].mxu0 %v2081
        %v2151 = vpop.f32.mrb[0].mxu0
        %v2152 = vadd.f32 0.0, %v2151
        %v2153 = vpop.f32.mrb[0].mxu0
        %2154 = vdwg.mxu0
        %2156 = vrot.lane.b32.xlu0 %v1059, 124
        %v2157 = vpop.permute.xlu0 %2156
        %v2158 = vsel %vm1695, %v1059, 0
        %v2160 = vsel %vm1695, %v2157, 0
        %2162 = vmatprep.subr.mxu0 0.0
        %2163 = vmatpush1.xpose.msra.mxu0 %v2160
        %2164 = vmatprep.subr.mxu0 0.0
        %2165 = vmatpush1.xpose.msra.mxu0 0.0
        %2166 = vmatprep.subr.mxu0 0.0
        %2167 = vmatpush1.xpose.msra.mxu0 0.0
        %2168 = vmatprep.subr.mxu0 0.0
        %2169 = vmatpush1.xpose.msra.mxu0 0.0
        %2170 = vmatprep.subr.mxu0 0.0
        %2171 = vmatpush1.xpose.msra.mxu0 0.0
        %2172 = vmatprep.subr.mxu0 0.0
        %2173 = vmatpush1.xpose.msra.mxu0 0.0
        %2174 = vmatprep.subr.mxu0 0.0
        %2175 = vmatpush1.xpose.msra.mxu0 0.0
        %2176 = vmatprep.subr.mxu0 0.0
        %2177 = vmatpush1.xpose.msra.mxu0 0.0
        %2178 = vmatprep.subr.mxu0 0.0
        %2179 = vmatpush1.xpose.msra.mxu0 0.0
        %2180 = vmatprep.subr.mxu0 0.0
        %2181 = vmatpush1.xpose.msra.mxu0 0.0
        %2182 = vmatprep.subr.mxu0 0.0
        %2183 = vmatpush1.xpose.msra.mxu0 0.0
        %2184 = vmatprep.subr.mxu0 0.0
        %2185 = vmatpush1.xpose.msra.mxu0 0.0
        %2186 = vmatprep.subr.mxu0 0.0
        %2187 = vmatpush1.xpose.msra.mxu0 0.0
        %2188 = vmatprep.subr.mxu0 0.0
        %2189 = vmatpush1.xpose.msra.mxu0 0.0
        %2190 = vmatprep.subr.mxu0 0.0
        %2191 = vmatpush1.xpose.msra.mxu0 0.0
        %2192 = vmatprep.subr.mxu0 0.0
        %2193 = vmatpush1.xpose.msra.mxu0 0.0
        %2194 = vmatprep.subr.mxu0 0.0
        %2195 = vmatpush1.xpose.msra.mxu0 0.0
        %2196 = vmatprep.subr.mxu0 0.0
        %2197 = vmatpush1.xpose.msra.mxu0 0.0
        %2198 = vmatprep.subr.mxu0 0.0
        %2199 = vmatpush1.xpose.msra.mxu0 0.0
        %2200 = vmatprep.subr.mxu0 0.0
        %2201 = vmatpush1.xpose.msra.mxu0 0.0
        %2202 = vmatprep.subr.mxu0 0.0
        %2203 = vmatpush1.xpose.msra.mxu0 0.0
        %2204 = vmatprep.subr.mxu0 0.0
        %2205 = vmatpush1.xpose.msra.mxu0 0.0
        %2206 = vmatprep.subr.mxu0 0.0
        %2207 = vmatpush1.xpose.msra.mxu0 0.0
        %2208 = vmatprep.subr.mxu0 0.0
        %2209 = vmatpush1.xpose.msra.mxu0 0.0
        %2210 = vmatprep.subr.mxu0 0.0
        %2211 = vmatpush1.xpose.msra.mxu0 0.0
        %2212 = vmatprep.subr.mxu0 0.0
        %2213 = vmatpush1.xpose.msra.mxu0 0.0
        %2214 = vmatprep.subr.mxu0 0.0
        %2215 = vmatpush1.xpose.msra.mxu0 0.0
        %2216 = vmatprep.subr.mxu0 0.0
        %2217 = vmatpush1.xpose.msra.mxu0 0.0
        %2218 = vmatprep.subr.mxu0 0.0
        %2219 = vmatpush1.xpose.msra.mxu0 0.0
        %2220 = vmatprep.subr.mxu0 0.0
        %2221 = vmatpush1.xpose.msra.mxu0 0.0
        %2222 = vmatprep.subr.mxu0 0.0
        %2223 = vmatpush1.xpose.msra.mxu0 0.0
        %2224 = vmatprep.subr.mxu0 0.0
        %2225 = vmatpush1.xpose.msra.mxu0 0.0
        %2226 = vmatprep.mubr.f32.mxu0 0.0
        %2227 = vmatmul.mubr.f32.gmra.mrb[0].mxu0 %v2158
        %v2228 = vpop.f32.mrb[0].mxu0
        %v2229 = vadd.f32 0.0, %v2228
        %v2230 = vpop.f32.mrb[0].mxu0
        %2231 = vdwg.mxu0
        %2233 = vrot.lane.b32.xlu0 %v1129, 124
        %v2234 = vpop.permute.xlu0 %2233
        %v2235 = vsel %vm1695, %v1129, 0
        %v2237 = vsel %vm1695, %v2234, 0
        %2239 = vmatprep.subr.mxu0 0.0
        %2240 = vmatpush1.xpose.msra.mxu0 %v2237
        %2241 = vmatprep.subr.mxu0 0.0
        %2242 = vmatpush1.xpose.msra.mxu0 0.0
        %2243 = vmatprep.subr.mxu0 0.0
        %2244 = vmatpush1.xpose.msra.mxu0 0.0
        %2245 = vmatprep.subr.mxu0 0.0
        %2246 = vmatpush1.xpose.msra.mxu0 0.0
        %2247 = vmatprep.subr.mxu0 0.0
        %2248 = vmatpush1.xpose.msra.mxu0 0.0
        %2249 = vmatprep.subr.mxu0 0.0
        %2250 = vmatpush1.xpose.msra.mxu0 0.0
        %2251 = vmatprep.subr.mxu0 0.0
        %2252 = vmatpush1.xpose.msra.mxu0 0.0
        %2253 = vmatprep.subr.mxu0 0.0
        %2254 = vmatpush1.xpose.msra.mxu0 0.0
        %2255 = vmatprep.subr.mxu0 0.0
        %2256 = vmatpush1.xpose.msra.mxu0 0.0
        %2257 = vmatprep.subr.mxu0 0.0
        %2258 = vmatpush1.xpose.msra.mxu0 0.0
        %2259 = vmatprep.subr.mxu0 0.0
        %2260 = vmatpush1.xpose.msra.mxu0 0.0
        %2261 = vmatprep.subr.mxu0 0.0
        %2262 = vmatpush1.xpose.msra.mxu0 0.0
        %2263 = vmatprep.subr.mxu0 0.0
        %2264 = vmatpush1.xpose.msra.mxu0 0.0
        %2265 = vmatprep.subr.mxu0 0.0
        %2266 = vmatpush1.xpose.msra.mxu0 0.0
        %2267 = vmatprep.subr.mxu0 0.0
        %2268 = vmatpush1.xpose.msra.mxu0 0.0
        %2269 = vmatprep.subr.mxu0 0.0
        %2270 = vmatpush1.xpose.msra.mxu0 0.0
        %2271 = vmatprep.subr.mxu0 0.0
        %2272 = vmatpush1.xpose.msra.mxu0 0.0
        %2273 = vmatprep.subr.mxu0 0.0
        %2274 = vmatpush1.xpose.msra.mxu0 0.0
        %2275 = vmatprep.subr.mxu0 0.0
        %2276 = vmatpush1.xpose.msra.mxu0 0.0
        %2277 = vmatprep.subr.mxu0 0.0
        %2278 = vmatpush1.xpose.msra.mxu0 0.0
        %2279 = vmatprep.subr.mxu0 0.0
        %2280 = vmatpush1.xpose.msra.mxu0 0.0
        %2281 = vmatprep.subr.mxu0 0.0
        %2282 = vmatpush1.xpose.msra.mxu0 0.0
        %2283 = vmatprep.subr.mxu0 0.0
        %2284 = vmatpush1.xpose.msra.mxu0 0.0
        %2285 = vmatprep.subr.mxu0 0.0
        %2286 = vmatpush1.xpose.msra.mxu0 0.0
        %2287 = vmatprep.subr.mxu0 0.0
        %2288 = vmatpush1.xpose.msra.mxu0 0.0
        %2289 = vmatprep.subr.mxu0 0.0
        %2290 = vmatpush1.xpose.msra.mxu0 0.0
        %2291 = vmatprep.subr.mxu0 0.0
        %2292 = vmatpush1.xpose.msra.mxu0 0.0
        %2293 = vmatprep.subr.mxu0 0.0
        %2294 = vmatpush1.xpose.msra.mxu0 0.0
        %2295 = vmatprep.subr.mxu0 0.0
        %2296 = vmatpush1.xpose.msra.mxu0 0.0
        %2297 = vmatprep.subr.mxu0 0.0
        %2298 = vmatpush1.xpose.msra.mxu0 0.0
        %2299 = vmatprep.subr.mxu0 0.0
        %2300 = vmatpush1.xpose.msra.mxu0 0.0
        %2301 = vmatprep.subr.mxu0 0.0
        %2302 = vmatpush1.xpose.msra.mxu0 0.0
        %2303 = vmatprep.mubr.f32.mxu0 0.0
        %2304 = vmatmul.mubr.f32.gmra.mrb[0].mxu0 %v2235
        %v2305 = vpop.f32.mrb[0].mxu0
        %v2306 = vadd.f32 0.0, %v2305
        %v2307 = vpop.f32.mrb[0].mxu0
        %2308 = vdwg.mxu0
        %2310 = vrot.lane.b32.xlu0 %v1199, 124
        %v2311 = vpop.permute.xlu0 %2310
        %v2312 = vsel %vm1695, %v1199, 0
        %v2314 = vsel %vm1695, %v2311, 0
        %2316 = vmatprep.subr.mxu0 0.0
        %2317 = vmatpush1.xpose.msra.mxu0 %v2314
        %2318 = vmatprep.subr.mxu0 0.0
        %2319 = vmatpush1.xpose.msra.mxu0 0.0
        %2320 = vmatprep.subr.mxu0 0.0
        %2321 = vmatpush1.xpose.msra.mxu0 0.0
        %2322 = vmatprep.subr.mxu0 0.0
        %2323 = vmatpush1.xpose.msra.mxu0 0.0
        %2324 = vmatprep.subr.mxu0 0.0
        %2325 = vmatpush1.xpose.msra.mxu0 0.0
        %2326 = vmatprep.subr.mxu0 0.0
        %2327 = vmatpush1.xpose.msra.mxu0 0.0
        %2328 = vmatprep.subr.mxu0 0.0
        %2329 = vmatpush1.xpose.msra.mxu0 0.0
        %2330 = vmatprep.subr.mxu0 0.0
        %2331 = vmatpush1.xpose.msra.mxu0 0.0
        %2332 = vmatprep.subr.mxu0 0.0
        %2333 = vmatpush1.xpose.msra.mxu0 0.0
        %2334 = vmatprep.subr.mxu0 0.0
        %2335 = vmatpush1.xpose.msra.mxu0 0.0
        %2336 = vmatprep.subr.mxu0 0.0
        %2337 = vmatpush1.xpose.msra.mxu0 0.0
        %2338 = vmatprep.subr.mxu0 0.0
        %2339 = vmatpush1.xpose.msra.mxu0 0.0
        %2340 = vmatprep.subr.mxu0 0.0
        %2341 = vmatpush1.xpose.msra.mxu0 0.0
        %2342 = vmatprep.subr.mxu0 0.0
        %2343 = vmatpush1.xpose.msra.mxu0 0.0
        %2344 = vmatprep.subr.mxu0 0.0
        %2345 = vmatpush1.xpose.msra.mxu0 0.0
        %2346 = vmatprep.subr.mxu0 0.0
        %2347 = vmatpush1.xpose.msra.mxu0 0.0
        %2348 = vmatprep.subr.mxu0 0.0
        %2349 = vmatpush1.xpose.msra.mxu0 0.0
        %2350 = vmatprep.subr.mxu0 0.0
        %2351 = vmatpush1.xpose.msra.mxu0 0.0
        %2352 = vmatprep.subr.mxu0 0.0
        %2353 = vmatpush1.xpose.msra.mxu0 0.0
        %2354 = vmatprep.subr.mxu0 0.0
        %2355 = vmatpush1.xpose.msra.mxu0 0.0
        %2356 = vmatprep.subr.mxu0 0.0
        %2357 = vmatpush1.xpose.msra.mxu0 0.0
        %2358 = vmatprep.subr.mxu0 0.0
        %2359 = vmatpush1.xpose.msra.mxu0 0.0
        %2360 = vmatprep.subr.mxu0 0.0
        %2361 = vmatpush1.xpose.msra.mxu0 0.0
        %2362 = vmatprep.subr.mxu0 0.0
        %2363 = vmatpush1.xpose.msra.mxu0 0.0
        %2364 = vmatprep.subr.mxu0 0.0
        %2365 = vmatpush1.xpose.msra.mxu0 0.0
        %2366 = vmatprep.subr.mxu0 0.0
        %2367 = vmatpush1.xpose.msra.mxu0 0.0
        %2368 = vmatprep.subr.mxu0 0.0
        %2369 = vmatpush1.xpose.msra.mxu0 0.0
        %2370 = vmatprep.subr.mxu0 0.0
        %2371 = vmatpush1.xpose.msra.mxu0 0.0
        %2372 = vmatprep.subr.mxu0 0.0
        %2373 = vmatpush1.xpose.msra.mxu0 0.0
        %2374 = vmatprep.subr.mxu0 0.0
        %2375 = vmatpush1.xpose.msra.mxu0 0.0
        %2376 = vmatprep.subr.mxu0 0.0
        %2377 = vmatpush1.xpose.msra.mxu0 0.0
        %2378 = vmatprep.subr.mxu0 0.0
        %2379 = vmatpush1.xpose.msra.mxu0 0.0
        %2380 = vmatprep.mubr.f32.mxu0 0.0
        %2381 = vmatmul.mubr.f32.gmra.mrb[0].mxu0 %v2312
        %v2382 = vpop.f32.mrb[0].mxu0
        %v2383 = vadd.f32 0.0, %v2382
        %v2384 = vpop.f32.mrb[0].mxu0
        %2385 = vdwg.mxu0
        %2387 = vrot.lane.b32.xlu0 %v1269, 124
        %v2388 = vpop.permute.xlu0 %2387
        %v2389 = vsel %vm1695, %v1269, 0
        %v2391 = vsel %vm1695, %v2388, 0
        %2393 = vmatprep.subr.mxu0 0.0
        %2394 = vmatpush1.xpose.msra.mxu0 %v2391
        %2395 = vmatprep.subr.mxu0 0.0
        %2396 = vmatpush1.xpose.msra.mxu0 0.0
        %2397 = vmatprep.subr.mxu0 0.0
        %2398 = vmatpush1.xpose.msra.mxu0 0.0
        %2399 = vmatprep.subr.mxu0 0.0
        %2400 = vmatpush1.xpose.msra.mxu0 0.0
        %2401 = vmatprep.subr.mxu0 0.0
        %2402 = vmatpush1.xpose.msra.mxu0 0.0
        %2403 = vmatprep.subr.mxu0 0.0
        %2404 = vmatpush1.xpose.msra.mxu0 0.0
        %2405 = vmatprep.subr.mxu0 0.0
        %2406 = vmatpush1.xpose.msra.mxu0 0.0
        %2407 = vmatprep.subr.mxu0 0.0
        %2408 = vmatpush1.xpose.msra.mxu0 0.0
        %2409 = vmatprep.subr.mxu0 0.0
        %2410 = vmatpush1.xpose.msra.mxu0 0.0
        %2411 = vmatprep.subr.mxu0 0.0
        %2412 = vmatpush1.xpose.msra.mxu0 0.0
        %2413 = vmatprep.subr.mxu0 0.0
        %2414 = vmatpush1.xpose.msra.mxu0 0.0
        %2415 = vmatprep.subr.mxu0 0.0
        %2416 = vmatpush1.xpose.msra.mxu0 0.0
        %2417 = vmatprep.subr.mxu0 0.0
        %2418 = vmatpush1.xpose.msra.mxu0 0.0
        %2419 = vmatprep.subr.mxu0 0.0
        %2420 = vmatpush1.xpose.msra.mxu0 0.0
        %2421 = vmatprep.subr.mxu0 0.0
        %2422 = vmatpush1.xpose.msra.mxu0 0.0
        %2423 = vmatprep.subr.mxu0 0.0
        %2424 = vmatpush1.xpose.msra.mxu0 0.0
        %2425 = vmatprep.subr.mxu0 0.0
        %2426 = vmatpush1.xpose.msra.mxu0 0.0
        %2427 = vmatprep.subr.mxu0 0.0
        %2428 = vmatpush1.xpose.msra.mxu0 0.0
        %2429 = vmatprep.subr.mxu0 0.0
        %2430 = vmatpush1.xpose.msra.mxu0 0.0
        %2431 = vmatprep.subr.mxu0 0.0
        %2432 = vmatpush1.xpose.msra.mxu0 0.0
        %2433 = vmatprep.subr.mxu0 0.0
        %2434 = vmatpush1.xpose.msra.mxu0 0.0
        %2435 = vmatprep.subr.mxu0 0.0
        %2436 = vmatpush1.xpose.msra.mxu0 0.0
        %2437 = vmatprep.subr.mxu0 0.0
        %2438 = vmatpush1.xpose.msra.mxu0 0.0
        %2439 = vmatprep.subr.mxu0 0.0
        %2440 = vmatpush1.xpose.msra.mxu0 0.0
        %2441 = vmatprep.subr.mxu0 0.0
        %2442 = vmatpush1.xpose.msra.mxu0 0.0
        %2443 = vmatprep.subr.mxu0 0.0
        %2444 = vmatpush1.xpose.msra.mxu0 0.0
        %2445 = vmatprep.subr.mxu0 0.0
        %2446 = vmatpush1.xpose.msra.mxu0 0.0
        %2447 = vmatprep.subr.mxu0 0.0
        %2448 = vmatpush1.xpose.msra.mxu0 0.0
        %2449 = vmatprep.subr.mxu0 0.0
        %2450 = vmatpush1.xpose.msra.mxu0 0.0
        %2451 = vmatprep.subr.mxu0 0.0
        %2452 = vmatpush1.xpose.msra.mxu0 0.0
        %2453 = vmatprep.subr.mxu0 0.0
        %2454 = vmatpush1.xpose.msra.mxu0 0.0
        %2455 = vmatprep.subr.mxu0 0.0
        %2456 = vmatpush1.xpose.msra.mxu0 0.0
        %2457 = vmatprep.mubr.f32.mxu0 0.0
        %2458 = vmatmul.mubr.f32.gmra.mrb[0].mxu0 %v2389
        %v2459 = vpop.f32.mrb[0].mxu0
        %v2460 = vadd.f32 0.0, %v2459
        %v2461 = vpop.f32.mrb[0].mxu0
        %2462 = vdwg.mxu0
        %2464 = vrot.lane.b32.xlu0 %v1339, 124
        %v2465 = vpop.permute.xlu0 %2464
        %v2466 = vsel %vm1695, %v1339, 0
        %v2468 = vsel %vm1695, %v2465, 0
        %2470 = vmatprep.subr.mxu0 0.0
        %2471 = vmatpush1.xpose.msra.mxu0 %v2468
        %2472 = vmatprep.subr.mxu0 0.0
        %2473 = vmatpush1.xpose.msra.mxu0 0.0
        %2474 = vmatprep.subr.mxu0 0.0
        %2475 = vmatpush1.xpose.msra.mxu0 0.0
        %2476 = vmatprep.subr.mxu0 0.0
        %2477 = vmatpush1.xpose.msra.mxu0 0.0
        %2478 = vmatprep.subr.mxu0 0.0
        %2479 = vmatpush1.xpose.msra.mxu0 0.0
        %2480 = vmatprep.subr.mxu0 0.0
        %2481 = vmatpush1.xpose.msra.mxu0 0.0
        %2482 = vmatprep.subr.mxu0 0.0
        %2483 = vmatpush1.xpose.msra.mxu0 0.0
        %2484 = vmatprep.subr.mxu0 0.0
        %2485 = vmatpush1.xpose.msra.mxu0 0.0
        %2486 = vmatprep.subr.mxu0 0.0
        %2487 = vmatpush1.xpose.msra.mxu0 0.0
        %2488 = vmatprep.subr.mxu0 0.0
        %2489 = vmatpush1.xpose.msra.mxu0 0.0
        %2490 = vmatprep.subr.mxu0 0.0
        %2491 = vmatpush1.xpose.msra.mxu0 0.0
        %2492 = vmatprep.subr.mxu0 0.0
        %2493 = vmatpush1.xpose.msra.mxu0 0.0
        %2494 = vmatprep.subr.mxu0 0.0
        %2495 = vmatpush1.xpose.msra.mxu0 0.0
        %2496 = vmatprep.subr.mxu0 0.0
        %2497 = vmatpush1.xpose.msra.mxu0 0.0
        %2498 = vmatprep.subr.mxu0 0.0
        %2499 = vmatpush1.xpose.msra.mxu0 0.0
        %2500 = vmatprep.subr.mxu0 0.0
        %2501 = vmatpush1.xpose.msra.mxu0 0.0
        %2502 = vmatprep.subr.mxu0 0.0
        %2503 = vmatpush1.xpose.msra.mxu0 0.0
        %2504 = vmatprep.subr.mxu0 0.0
        %2505 = vmatpush1.xpose.msra.mxu0 0.0
        %2506 = vmatprep.subr.mxu0 0.0
        %2507 = vmatpush1.xpose.msra.mxu0 0.0
        %2508 = vmatprep.subr.mxu0 0.0
        %2509 = vmatpush1.xpose.msra.mxu0 0.0
        %2510 = vmatprep.subr.mxu0 0.0
        %2511 = vmatpush1.xpose.msra.mxu0 0.0
        %2512 = vmatprep.subr.mxu0 0.0
        %2513 = vmatpush1.xpose.msra.mxu0 0.0
        %2514 = vmatprep.subr.mxu0 0.0
        %2515 = vmatpush1.xpose.msra.mxu0 0.0
        %2516 = vmatprep.subr.mxu0 0.0
        %2517 = vmatpush1.xpose.msra.mxu0 0.0
        %2518 = vmatprep.subr.mxu0 0.0
        %2519 = vmatpush1.xpose.msra.mxu0 0.0
        %2520 = vmatprep.subr.mxu0 0.0
        %2521 = vmatpush1.xpose.msra.mxu0 0.0
        %2522 = vmatprep.subr.mxu0 0.0
        %2523 = vmatpush1.xpose.msra.mxu0 0.0
        %2524 = vmatprep.subr.mxu0 0.0
        %2525 = vmatpush1.xpose.msra.mxu0 0.0
        %2526 = vmatprep.subr.mxu0 0.0
        %2527 = vmatpush1.xpose.msra.mxu0 0.0
        %2528 = vmatprep.subr.mxu0 0.0
        %2529 = vmatpush1.xpose.msra.mxu0 0.0
        %2530 = vmatprep.subr.mxu0 0.0
        %2531 = vmatpush1.xpose.msra.mxu0 0.0
        %2532 = vmatprep.subr.mxu0 0.0
        %2533 = vmatpush1.xpose.msra.mxu0 0.0
        %2534 = vmatprep.mubr.f32.mxu0 0.0
        %2535 = vmatmul.mubr.f32.gmra.mrb[0].mxu0 %v2466
        %v2536 = vpop.f32.mrb[0].mxu0
        %v2537 = vadd.f32 0.0, %v2536
        %v2538 = vpop.f32.mrb[0].mxu0
        %2539 = vdwg.mxu0
        %2541 = vrot.lane.b32.xlu0 %v1409, 124
        %v2542 = vpop.permute.xlu0 %2541
        %v2543 = vsel %vm1695, %v1409, 0
        %v2545 = vsel %vm1695, %v2542, 0
        %2547 = vmatprep.subr.mxu0 0.0
        %2548 = vmatpush1.xpose.msra.mxu0 %v2545
        %2549 = vmatprep.subr.mxu0 0.0
        %2550 = vmatpush1.xpose.msra.mxu0 0.0
        %2551 = vmatprep.subr.mxu0 0.0
        %2552 = vmatpush1.xpose.msra.mxu0 0.0
        %2553 = vmatprep.subr.mxu0 0.0
        %2554 = vmatpush1.xpose.msra.mxu0 0.0
        %2555 = vmatprep.subr.mxu0 0.0
        %2556 = vmatpush1.xpose.msra.mxu0 0.0
        %2557 = vmatprep.subr.mxu0 0.0
        %2558 = vmatpush1.xpose.msra.mxu0 0.0
        %2559 = vmatprep.subr.mxu0 0.0
        %2560 = vmatpush1.xpose.msra.mxu0 0.0
        %2561 = vmatprep.subr.mxu0 0.0
        %2562 = vmatpush1.xpose.msra.mxu0 0.0
        %2563 = vmatprep.subr.mxu0 0.0
        %2564 = vmatpush1.xpose.msra.mxu0 0.0
        %2565 = vmatprep.subr.mxu0 0.0
        %2566 = vmatpush1.xpose.msra.mxu0 0.0
        %2567 = vmatprep.subr.mxu0 0.0
        %2568 = vmatpush1.xpose.msra.mxu0 0.0
        %2569 = vmatprep.subr.mxu0 0.0
        %2570 = vmatpush1.xpose.msra.mxu0 0.0
        %2571 = vmatprep.subr.mxu0 0.0
        %2572 = vmatpush1.xpose.msra.mxu0 0.0
        %2573 = vmatprep.subr.mxu0 0.0
        %2574 = vmatpush1.xpose.msra.mxu0 0.0
        %2575 = vmatprep.subr.mxu0 0.0
        %2576 = vmatpush1.xpose.msra.mxu0 0.0
        %2577 = vmatprep.subr.mxu0 0.0
        %2578 = vmatpush1.xpose.msra.mxu0 0.0
        %2579 = vmatprep.subr.mxu0 0.0
        %2580 = vmatpush1.xpose.msra.mxu0 0.0
        %2581 = vmatprep.subr.mxu0 0.0
        %2582 = vmatpush1.xpose.msra.mxu0 0.0
        %2583 = vmatprep.subr.mxu0 0.0
        %2584 = vmatpush1.xpose.msra.mxu0 0.0
        %2585 = vmatprep.subr.mxu0 0.0
        %2586 = vmatpush1.xpose.msra.mxu0 0.0
        %2587 = vmatprep.subr.mxu0 0.0
        %2588 = vmatpush1.xpose.msra.mxu0 0.0
        %2589 = vmatprep.subr.mxu0 0.0
        %2590 = vmatpush1.xpose.msra.mxu0 0.0
        %2591 = vmatprep.subr.mxu0 0.0
        %2592 = vmatpush1.xpose.msra.mxu0 0.0
        %2593 = vmatprep.subr.mxu0 0.0
        %2594 = vmatpush1.xpose.msra.mxu0 0.0
        %2595 = vmatprep.subr.mxu0 0.0
        %2596 = vmatpush1.xpose.msra.mxu0 0.0
        %2597 = vmatprep.subr.mxu0 0.0
        %2598 = vmatpush1.xpose.msra.mxu0 0.0
        %2599 = vmatprep.subr.mxu0 0.0
        %2600 = vmatpush1.xpose.msra.mxu0 0.0
        %2601 = vmatprep.subr.mxu0 0.0
        %2602 = vmatpush1.xpose.msra.mxu0 0.0
        %2603 = vmatprep.subr.mxu0 0.0
        %2604 = vmatpush1.xpose.msra.mxu0 0.0
        %2605 = vmatprep.subr.mxu0 0.0
        %2606 = vmatpush1.xpose.msra.mxu0 0.0
        %2607 = vmatprep.subr.mxu0 0.0
        %2608 = vmatpush1.xpose.msra.mxu0 0.0
        %2609 = vmatprep.subr.mxu0 0.0
        %2610 = vmatpush1.xpose.msra.mxu0 0.0
        %2611 = vmatprep.mubr.f32.mxu0 0.0
        %2612 = vmatmul.mubr.f32.gmra.mrb[0].mxu0 %v2543
        %v2613 = vpop.f32.mrb[0].mxu0
        %v2614 = vadd.f32 0.0, %v2613
        %v2615 = vpop.f32.mrb[0].mxu0
        %2616 = vdwg.mxu0
        %2618 = vrot.lane.b32.xlu0 %v1479, 124
        %v2619 = vpop.permute.xlu0 %2618
        %v2620 = vsel %vm1695, %v1479, 0
        %v2622 = vsel %vm1695, %v2619, 0
        %2624 = vmatprep.subr.mxu0 0.0
        %2625 = vmatpush1.xpose.msra.mxu0 %v2622
        %2626 = vmatprep.subr.mxu0 0.0
        %2627 = vmatpush1.xpose.msra.mxu0 0.0
        %2628 = vmatprep.subr.mxu0 0.0
        %2629 = vmatpush1.xpose.msra.mxu0 0.0
        %2630 = vmatprep.subr.mxu0 0.0
        %2631 = vmatpush1.xpose.msra.mxu0 0.0
        %2632 = vmatprep.subr.mxu0 0.0
        %2633 = vmatpush1.xpose.msra.mxu0 0.0
        %2634 = vmatprep.subr.mxu0 0.0
        %2635 = vmatpush1.xpose.msra.mxu0 0.0
        %2636 = vmatprep.subr.mxu0 0.0
        %2637 = vmatpush1.xpose.msra.mxu0 0.0
        %2638 = vmatprep.subr.mxu0 0.0
        %2639 = vmatpush1.xpose.msra.mxu0 0.0
        %2640 = vmatprep.subr.mxu0 0.0
        %2641 = vmatpush1.xpose.msra.mxu0 0.0
        %2642 = vmatprep.subr.mxu0 0.0
        %2643 = vmatpush1.xpose.msra.mxu0 0.0
        %2644 = vmatprep.subr.mxu0 0.0
        %2645 = vmatpush1.xpose.msra.mxu0 0.0
        %2646 = vmatprep.subr.mxu0 0.0
        %2647 = vmatpush1.xpose.msra.mxu0 0.0
        %2648 = vmatprep.subr.mxu0 0.0
        %2649 = vmatpush1.xpose.msra.mxu0 0.0
        %2650 = vmatprep.subr.mxu0 0.0
        %2651 = vmatpush1.xpose.msra.mxu0 0.0
        %2652 = vmatprep.subr.mxu0 0.0
        %2653 = vmatpush1.xpose.msra.mxu0 0.0
        %2654 = vmatprep.subr.mxu0 0.0
        %2655 = vmatpush1.xpose.msra.mxu0 0.0
        %2656 = vmatprep.subr.mxu0 0.0
        %2657 = vmatpush1.xpose.msra.mxu0 0.0
        %2658 = vmatprep.subr.mxu0 0.0
        %2659 = vmatpush1.xpose.msra.mxu0 0.0
        %2660 = vmatprep.subr.mxu0 0.0
        %2661 = vmatpush1.xpose.msra.mxu0 0.0
        %2662 = vmatprep.subr.mxu0 0.0
        %2663 = vmatpush1.xpose.msra.mxu0 0.0
        %2664 = vmatprep.subr.mxu0 0.0
        %2665 = vmatpush1.xpose.msra.mxu0 0.0
        %2666 = vmatprep.subr.mxu0 0.0
        %2667 = vmatpush1.xpose.msra.mxu0 0.0
        %2668 = vmatprep.subr.mxu0 0.0
        %2669 = vmatpush1.xpose.msra.mxu0 0.0
        %2670 = vmatprep.subr.mxu0 0.0
        %2671 = vmatpush1.xpose.msra.mxu0 0.0
        %2672 = vmatprep.subr.mxu0 0.0
        %2673 = vmatpush1.xpose.msra.mxu0 0.0
        %2674 = vmatprep.subr.mxu0 0.0
        %2675 = vmatpush1.xpose.msra.mxu0 0.0
        %2676 = vmatprep.subr.mxu0 0.0
        %2677 = vmatpush1.xpose.msra.mxu0 0.0
        %2678 = vmatprep.subr.mxu0 0.0
        %2679 = vmatpush1.xpose.msra.mxu0 0.0
        %2680 = vmatprep.subr.mxu0 0.0
        %2681 = vmatpush1.xpose.msra.mxu0 0.0
        %2682 = vmatprep.subr.mxu0 0.0
        %2683 = vmatpush1.xpose.msra.mxu0 0.0
        %2684 = vmatprep.subr.mxu0 0.0
        %2685 = vmatpush1.xpose.msra.mxu0 0.0
        %2686 = vmatprep.subr.mxu0 0.0
        %2687 = vmatpush1.xpose.msra.mxu0 0.0
        %2688 = vmatprep.mubr.f32.mxu0 0.0
        %2689 = vmatmul.mubr.f32.gmra.mrb[0].mxu0 %v2620
        %v2690 = vpop.f32.mrb[0].mxu0
        %v2691 = vadd.f32 0.0, %v2690
        %v2692 = vpop.f32.mrb[0].mxu0
        %2693 = vdwg.mxu0
        %2695 = vrot.lane.b32.xlu0 %v1549, 124
        %v2696 = vpop.permute.xlu0 %2695
        %v2697 = vsel %vm1695, %v1549, 0
        %v2699 = vsel %vm1695, %v2696, 0
        %2701 = vmatprep.subr.mxu0 0.0
        %2702 = vmatpush1.xpose.msra.mxu0 %v2699
        %2703 = vmatprep.subr.mxu0 0.0
        %2704 = vmatpush1.xpose.msra.mxu0 0.0
        %2705 = vmatprep.subr.mxu0 0.0
        %2706 = vmatpush1.xpose.msra.mxu0 0.0
        %2707 = vmatprep.subr.mxu0 0.0
        %2708 = vmatpush1.xpose.msra.mxu0 0.0
        %2709 = vmatprep.subr.mxu0 0.0
        %2710 = vmatpush1.xpose.msra.mxu0 0.0
        %2711 = vmatprep.subr.mxu0 0.0
        %2712 = vmatpush1.xpose.msra.mxu0 0.0
        %2713 = vmatprep.subr.mxu0 0.0
        %2714 = vmatpush1.xpose.msra.mxu0 0.0
        %2715 = vmatprep.subr.mxu0 0.0
        %2716 = vmatpush1.xpose.msra.mxu0 0.0
        %2717 = vmatprep.subr.mxu0 0.0
        %2718 = vmatpush1.xpose.msra.mxu0 0.0
        %2719 = vmatprep.subr.mxu0 0.0
        %2720 = vmatpush1.xpose.msra.mxu0 0.0
        %2721 = vmatprep.subr.mxu0 0.0
        %2722 = vmatpush1.xpose.msra.mxu0 0.0
        %2723 = vmatprep.subr.mxu0 0.0
        %2724 = vmatpush1.xpose.msra.mxu0 0.0
        %2725 = vmatprep.subr.mxu0 0.0
        %2726 = vmatpush1.xpose.msra.mxu0 0.0
        %2727 = vmatprep.subr.mxu0 0.0
        %2728 = vmatpush1.xpose.msra.mxu0 0.0
        %2729 = vmatprep.subr.mxu0 0.0
        %2730 = vmatpush1.xpose.msra.mxu0 0.0
        %2731 = vmatprep.subr.mxu0 0.0
        %2732 = vmatpush1.xpose.msra.mxu0 0.0
        %2733 = vmatprep.subr.mxu0 0.0
        %2734 = vmatpush1.xpose.msra.mxu0 0.0
        %2735 = vmatprep.subr.mxu0 0.0
        %2736 = vmatpush1.xpose.msra.mxu0 0.0
        %2737 = vmatprep.subr.mxu0 0.0
        %2738 = vmatpush1.xpose.msra.mxu0 0.0
        %2739 = vmatprep.subr.mxu0 0.0
        %2740 = vmatpush1.xpose.msra.mxu0 0.0
        %2741 = vmatprep.subr.mxu0 0.0
        %2742 = vmatpush1.xpose.msra.mxu0 0.0
        %2743 = vmatprep.subr.mxu0 0.0
        %2744 = vmatpush1.xpose.msra.mxu0 0.0
        %2745 = vmatprep.subr.mxu0 0.0
        %2746 = vmatpush1.xpose.msra.mxu0 0.0
        %2747 = vmatprep.subr.mxu0 0.0
        %2748 = vmatpush1.xpose.msra.mxu0 0.0
        %2749 = vmatprep.subr.mxu0 0.0
        %2750 = vmatpush1.xpose.msra.mxu0 0.0
        %2751 = vmatprep.subr.mxu0 0.0
        %2752 = vmatpush1.xpose.msra.mxu0 0.0
        %2753 = vmatprep.subr.mxu0 0.0
        %2754 = vmatpush1.xpose.msra.mxu0 0.0
        %2755 = vmatprep.subr.mxu0 0.0
        %2756 = vmatpush1.xpose.msra.mxu0 0.0
        %2757 = vmatprep.subr.mxu0 0.0
        %2758 = vmatpush1.xpose.msra.mxu0 0.0
        %2759 = vmatprep.subr.mxu0 0.0
        %2760 = vmatpush1.xpose.msra.mxu0 0.0
        %2761 = vmatprep.subr.mxu0 0.0
        %2762 = vmatpush1.xpose.msra.mxu0 0.0
        %2763 = vmatprep.subr.mxu0 0.0
        %2764 = vmatpush1.xpose.msra.mxu0 0.0
        %2765 = vmatprep.mubr.f32.mxu0 0.0
        %2766 = vmatmul.mubr.f32.gmra.mrb[0].mxu0 %v2697
        %v2767 = vpop.f32.mrb[0].mxu0
        %v2768 = vadd.f32 0.0, %v2767
        %v2769 = vpop.f32.mrb[0].mxu0
        %2770 = vdwg.mxu0
        %2772 = vrot.lane.b32.xlu0 %v1619, 124
        %v2773 = vpop.permute.xlu0 %2772
        %v2774 = vsel %vm1695, %v1619, 0
        %v2776 = vsel %vm1695, %v2773, 0
        %2778 = vmatprep.subr.mxu0 0.0
        %2779 = vmatpush1.xpose.msra.mxu0 %v2776
        %2780 = vmatprep.subr.mxu0 0.0
        %2781 = vmatpush1.xpose.msra.mxu0 0.0
        %2782 = vmatprep.subr.mxu0 0.0
        %2783 = vmatpush1.xpose.msra.mxu0 0.0
        %2784 = vmatprep.subr.mxu0 0.0
        %2785 = vmatpush1.xpose.msra.mxu0 0.0
        %2786 = vmatprep.subr.mxu0 0.0
        %2787 = vmatpush1.xpose.msra.mxu0 0.0
        %2788 = vmatprep.subr.mxu0 0.0
        %2789 = vmatpush1.xpose.msra.mxu0 0.0
        %2790 = vmatprep.subr.mxu0 0.0
        %2791 = vmatpush1.xpose.msra.mxu0 0.0
        %2792 = vmatprep.subr.mxu0 0.0
        %2793 = vmatpush1.xpose.msra.mxu0 0.0
        %2794 = vmatprep.subr.mxu0 0.0
        %2795 = vmatpush1.xpose.msra.mxu0 0.0
        %2796 = vmatprep.subr.mxu0 0.0
        %2797 = vmatpush1.xpose.msra.mxu0 0.0
        %2798 = vmatprep.subr.mxu0 0.0
        %2799 = vmatpush1.xpose.msra.mxu0 0.0
        %2800 = vmatprep.subr.mxu0 0.0
        %2801 = vmatpush1.xpose.msra.mxu0 0.0
        %2802 = vmatprep.subr.mxu0 0.0
        %2803 = vmatpush1.xpose.msra.mxu0 0.0
        %2804 = vmatprep.subr.mxu0 0.0
        %2805 = vmatpush1.xpose.msra.mxu0 0.0
        %2806 = vmatprep.subr.mxu0 0.0
        %2807 = vmatpush1.xpose.msra.mxu0 0.0
        %2808 = vmatprep.subr.mxu0 0.0
        %2809 = vmatpush1.xpose.msra.mxu0 0.0
        %2810 = vmatprep.subr.mxu0 0.0
        %2811 = vmatpush1.xpose.msra.mxu0 0.0
        %2812 = vmatprep.subr.mxu0 0.0
        %2813 = vmatpush1.xpose.msra.mxu0 0.0
        %2814 = vmatprep.subr.mxu0 0.0
        %2815 = vmatpush1.xpose.msra.mxu0 0.0
        %2816 = vmatprep.subr.mxu0 0.0
        %2817 = vmatpush1.xpose.msra.mxu0 0.0
        %2818 = vmatprep.subr.mxu0 0.0
        %2819 = vmatpush1.xpose.msra.mxu0 0.0
        %2820 = vmatprep.subr.mxu0 0.0
        %2821 = vmatpush1.xpose.msra.mxu0 0.0
        %2822 = vmatprep.subr.mxu0 0.0
        %2823 = vmatpush1.xpose.msra.mxu0 0.0
        %2824 = vmatprep.subr.mxu0 0.0
        %2825 = vmatpush1.xpose.msra.mxu0 0.0
        %2826 = vmatprep.subr.mxu0 0.0
        %2827 = vmatpush1.xpose.msra.mxu0 0.0
        %2828 = vmatprep.subr.mxu0 0.0
        %2829 = vmatpush1.xpose.msra.mxu0 0.0
        %2830 = vmatprep.subr.mxu0 0.0
        %2831 = vmatpush1.xpose.msra.mxu0 0.0
        %2832 = vmatprep.subr.mxu0 0.0
        %2833 = vmatpush1.xpose.msra.mxu0 0.0
        %2834 = vmatprep.subr.mxu0 0.0
        %2835 = vmatpush1.xpose.msra.mxu0 0.0
        %2836 = vmatprep.subr.mxu0 0.0
        %2837 = vmatpush1.xpose.msra.mxu0 0.0
        %2838 = vmatprep.subr.mxu0 0.0
        %2839 = vmatpush1.xpose.msra.mxu0 0.0
        %2840 = vmatprep.subr.mxu0 0.0
        %2841 = vmatpush1.xpose.msra.mxu0 0.0
        %2842 = vmatprep.mubr.f32.mxu0 0.0
        %2843 = vmatmul.mubr.f32.gmra.mrb[0].mxu0 %v2774
        %v2844 = vpop.f32.mrb[0].mxu0
        %v2845 = vadd.f32 0.0, %v2844
        %v2846 = vpop.f32.mrb[0].mxu0
        %2847 = vdwg.mxu0
        %2849 = vrot.lane.b32.xlu0 %v1689, 124
        %v2850 = vpop.permute.xlu0 %2849
        %v2851 = vsel %vm1695, %v1689, 0
        %v2853 = vsel %vm1695, %v2850, 0
        %2855 = vmatprep.subr.mxu0 0.0
        %2856 = vmatpush1.xpose.msra.mxu0 %v2853
        %2857 = vmatprep.subr.mxu0 0.0
        %2858 = vmatpush1.xpose.msra.mxu0 0.0
        %2859 = vmatprep.subr.mxu0 0.0
        %2860 = vmatpush1.xpose.msra.mxu0 0.0
        %2861 = vmatprep.subr.mxu0 0.0
        %2862 = vmatpush1.xpose.msra.mxu0 0.0
        %2863 = vmatprep.subr.mxu0 0.0
        %2864 = vmatpush1.xpose.msra.mxu0 0.0
        %2865 = vmatprep.subr.mxu0 0.0
        %2866 = vmatpush1.xpose.msra.mxu0 0.0
        %2867 = vmatprep.subr.mxu0 0.0
        %2868 = vmatpush1.xpose.msra.mxu0 0.0
        %2869 = vmatprep.subr.mxu0 0.0
        %2870 = vmatpush1.xpose.msra.mxu0 0.0
        %2871 = vmatprep.subr.mxu0 0.0
        %2872 = vmatpush1.xpose.msra.mxu0 0.0
        %2873 = vmatprep.subr.mxu0 0.0
        %2874 = vmatpush1.xpose.msra.mxu0 0.0
        %2875 = vmatprep.subr.mxu0 0.0
        %2876 = vmatpush1.xpose.msra.mxu0 0.0
        %2877 = vmatprep.subr.mxu0 0.0
        %2878 = vmatpush1.xpose.msra.mxu0 0.0
        %2879 = vmatprep.subr.mxu0 0.0
        %2880 = vmatpush1.xpose.msra.mxu0 0.0
        %2881 = vmatprep.subr.mxu0 0.0
        %2882 = vmatpush1.xpose.msra.mxu0 0.0
        %2883 = vmatprep.subr.mxu0 0.0
        %2884 = vmatpush1.xpose.msra.mxu0 0.0
        %2885 = vmatprep.subr.mxu0 0.0
        %2886 = vmatpush1.xpose.msra.mxu0 0.0
        %2887 = vmatprep.subr.mxu0 0.0
        %2888 = vmatpush1.xpose.msra.mxu0 0.0
        %2889 = vmatprep.subr.mxu0 0.0
        %2890 = vmatpush1.xpose.msra.mxu0 0.0
        %2891 = vmatprep.subr.mxu0 0.0
        %2892 = vmatpush1.xpose.msra.mxu0 0.0
        %2893 = vmatprep.subr.mxu0 0.0
        %2894 = vmatpush1.xpose.msra.mxu0 0.0
        %2895 = vmatprep.subr.mxu0 0.0
        %2896 = vmatpush1.xpose.msra.mxu0 0.0
        %2897 = vmatprep.subr.mxu0 0.0
        %2898 = vmatpush1.xpose.msra.mxu0 0.0
        %2899 = vmatprep.subr.mxu0 0.0
        %2900 = vmatpush1.xpose.msra.mxu0 0.0
        %2901 = vmatprep.subr.mxu0 0.0
        %2902 = vmatpush1.xpose.msra.mxu0 0.0
        %2903 = vmatprep.subr.mxu0 0.0
        %2904 = vmatpush1.xpose.msra.mxu0 0.0
        %2905 = vmatprep.subr.mxu0 0.0
        %2906 = vmatpush1.xpose.msra.mxu0 0.0
        %2907 = vmatprep.subr.mxu0 0.0
        %2908 = vmatpush1.xpose.msra.mxu0 0.0
        %2909 = vmatprep.subr.mxu0 0.0
        %2910 = vmatpush1.xpose.msra.mxu0 0.0
        %2911 = vmatprep.subr.mxu0 0.0
        %2912 = vmatpush1.xpose.msra.mxu0 0.0
        %2913 = vmatprep.subr.mxu0 0.0
        %2914 = vmatpush1.xpose.msra.mxu0 0.0
        %2915 = vmatprep.subr.mxu0 0.0
        %2916 = vmatpush1.xpose.msra.mxu0 0.0
        %2917 = vmatprep.subr.mxu0 0.0
        %2918 = vmatpush1.xpose.msra.mxu0 0.0
        %2919 = vmatprep.mubr.f32.mxu0 0.0
        %2920 = vmatmul.mubr.f32.gmra.mrb[0].mxu0 %v2851
        %v2921 = vpop.f32.mrb[0].mxu0
        %v2922 = vadd.f32 0.0, %v2921
        %v2923 = vpop.f32.mrb[0].mxu0
        %2924 = vdwg.mxu0
        %v2925 = vmul.f32 %v1767, 0.5
        %v2926 = vmul.f32 %v1844, 0.5
        %v2927 = vmul.f32 %v1921, 0.5
        %v2928 = vmul.f32 %v1998, 0.5
        %v2929 = vmul.f32 %v2075, 0.5
        %v2930 = vmul.f32 %v2152, 0.5
        %v2931 = vmul.f32 %v2229, 0.5
        %v2932 = vmul.f32 %v2306, 0.5
        %v2933 = vmul.f32 %v2383, 0.5
        %v2934 = vmul.f32 %v2460, 0.5
        %v2935 = vmul.f32 %v2537, 0.5
        %v2936 = vmul.f32 %v2614, 0.5
        %v2937 = vmul.f32 %v2691, 0.5
        %v2938 = vmul.f32 %v2768, 0.5
        %v2939 = vmul.f32 %v2845, 0.5
        %v2940 = vmul.f32 %v2922, 0.5
        %vm2941 = vcmask 64512
        %v2942 = vsel %vm2941, %v2925, -inf
        %2943 = vmax.xlane.f32.xlu0 %v2942
        %v2944 = vpop.xlane.xlu0 %2943
        %v2945 = vsel %vm2941, %v2926, -inf
        %2946 = vmax.xlane.f32.xlu0 %v2945
        %v2947 = vpop.xlane.xlu0 %2946
        %v2948 = vsel %vm2941, %v2927, -inf
        %2949 = vmax.xlane.f32.xlu0 %v2948
        %v2950 = vpop.xlane.xlu0 %2949
        %v2951 = vsel %vm2941, %v2928, -inf
        %2952 = vmax.xlane.f32.xlu0 %v2951
        %v2953 = vpop.xlane.xlu0 %2952
        %v2954 = vsel %vm2941, %v2929, -inf
        %2955 = vmax.xlane.f32.xlu0 %v2954
        %v2956 = vpop.xlane.xlu0 %2955
        %v2957 = vsel %vm2941, %v2930, -inf
        %2958 = vmax.xlane.f32.xlu0 %v2957
        %v2959 = vpop.xlane.xlu0 %2958
        %v2960 = vsel %vm2941, %v2931, -inf
        %2961 = vmax.xlane.f32.xlu0 %v2960
        %v2962 = vpop.xlane.xlu0 %2961
        %v2963 = vsel %vm2941, %v2932, -inf
        %2964 = vmax.xlane.f32.xlu0 %v2963
        %v2965 = vpop.xlane.xlu0 %2964
        %v2966 = vsel %vm2941, %v2933, -inf
        %2967 = vmax.xlane.f32.xlu0 %v2966
        %v2968 = vpop.xlane.xlu0 %2967
        %v2969 = vsel %vm2941, %v2934, -inf
        %2970 = vmax.xlane.f32.xlu0 %v2969
        %v2971 = vpop.xlane.xlu0 %2970
        %v2972 = vsel %vm2941, %v2935, -inf
        %2973 = vmax.xlane.f32.xlu0 %v2972
        %v2974 = vpop.xlane.xlu0 %2973
        %v2975 = vsel %vm2941, %v2936, -inf
        %2976 = vmax.xlane.f32.xlu0 %v2975
        %v2977 = vpop.xlane.xlu0 %2976
        %v2978 = vsel %vm2941, %v2937, -inf
        %2979 = vmax.xlane.f32.xlu0 %v2978
        %v2980 = vpop.xlane.xlu0 %2979
        %v2981 = vsel %vm2941, %v2938, -inf
        %2982 = vmax.xlane.f32.xlu0 %v2981
        %v2983 = vpop.xlane.xlu0 %2982
        %v2984 = vsel %vm2941, %v2939, -inf
        %2985 = vmax.xlane.f32.xlu0 %v2984
        %v2986 = vpop.xlane.xlu0 %2985
        %v2987 = vsel %vm2941, %v2940, -inf
        %2988 = vmax.xlane.f32.xlu0 %v2987
        %v2989 = vpop.xlane.xlu0 %2988
        %v2990 = vsub.f32 %v2925, %v2944
        %v2991 = vsub.f32 %v2926, %v2947
        %v2992 = vsub.f32 %v2927, %v2950
        %v2993 = vsub.f32 %v2928, %v2953
        %v2994 = vsub.f32 %v2929, %v2956
        %v2995 = vsub.f32 %v2930, %v2959
        %v2996 = vsub.f32 %v2931, %v2962
        %v2997 = vsub.f32 %v2932, %v2965
        %v2998 = vsub.f32 %v2933, %v2968
        %v2999 = vsub.f32 %v2934, %v2971
        %v3000 = vsub.f32 %v2935, %v2974
        %v3001 = vsub.f32 %v2936, %v2977
        %v3002 = vsub.f32 %v2937, %v2980
        %v3003 = vsub.f32 %v2938, %v2983
        %v3004 = vsub.f32 %v2939, %v2986
        %v3005 = vsub.f32 %v2940, %v2989
        %v3006 = vmul.f32 %v2990, 1.442695
        %v3007 = vpow.pop %v3006
        %v3008 = vmul.f32 %v2991, 1.442695
        %v3009 = vpow.pop %v3008
        %v3010 = vmul.f32 %v2992, 1.442695
        %v3011 = vpow.pop %v3010
        %v3012 = vmul.f32 %v2993, 1.442695
        %v3013 = vpow.pop %v3012
        %v3014 = vmul.f32 %v2994, 1.442695
        %v3015 = vpow.pop %v3014
        %v3016 = vmul.f32 %v2995, 1.442695
        %v3017 = vpow.pop %v3016
        %v3018 = vmul.f32 %v2996, 1.442695
        %v3019 = vpow.pop %v3018
        %v3020 = vmul.f32 %v2997, 1.442695
        %v3021 = vpow.pop %v3020
        %v3022 = vmul.f32 %v2998, 1.442695
        %v3023 = vpow.pop %v3022
        %v3024 = vmul.f32 %v2999, 1.442695
        %v3025 = vpow.pop %v3024
        %v3026 = vmul.f32 %v3000, 1.442695
        %v3027 = vpow.pop %v3026
        %v3028 = vmul.f32 %v3001, 1.442695
        %v3029 = vpow.pop %v3028
        %v3030 = vmul.f32 %v3002, 1.442695
        %v3031 = vpow.pop %v3030
        %v3032 = vmul.f32 %v3003, 1.442695
        %v3033 = vpow.pop %v3032
        %v3034 = vmul.f32 %v3004, 1.442695
        %v3035 = vpow.pop %v3034
        %v3036 = vmul.f32 %v3005, 1.442695
        %v3037 = vpow.pop %v3036
        %v3038 = vsel %vm2941, %v3007, 0.0
        %3039 = vadd.xlane.f32.xlu0 %v3038
        %v3040 = vpop.xlane.xlu0 %3039
        %v3041 = vsel %vm2941, %v3009, 0.0
        %3042 = vadd.xlane.f32.xlu0 %v3041
        %v3043 = vpop.xlane.xlu0 %3042
        %v3044 = vsel %vm2941, %v3011, 0.0
        %3045 = vadd.xlane.f32.xlu0 %v3044
        %v3046 = vpop.xlane.xlu0 %3045
        %v3047 = vsel %vm2941, %v3013, 0.0
        %3048 = vadd.xlane.f32.xlu0 %v3047
        %v3049 = vpop.xlane.xlu0 %3048
        %v3050 = vsel %vm2941, %v3015, 0.0
        %3051 = vadd.xlane.f32.xlu0 %v3050
        %v3052 = vpop.xlane.xlu0 %3051
        %v3053 = vsel %vm2941, %v3017, 0.0
        %3054 = vadd.xlane.f32.xlu0 %v3053
        %v3055 = vpop.xlane.xlu0 %3054
        %v3056 = vsel %vm2941, %v3019, 0.0
        %3057 = vadd.xlane.f32.xlu0 %v3056
        %v3058 = vpop.xlane.xlu0 %3057
        %v3059 = vsel %vm2941, %v3021, 0.0
        %3060 = vadd.xlane.f32.xlu0 %v3059
        %v3061 = vpop.xlane.xlu0 %3060
        %v3062 = vsel %vm2941, %v3023, 0.0
        %3063 = vadd.xlane.f32.xlu0 %v3062
        %v3064 = vpop.xlane.xlu0 %3063
        %v3065 = vsel %vm2941, %v3025, 0.0
        %3066 = vadd.xlane.f32.xlu0 %v3065
        %v3067 = vpop.xlane.xlu0 %3066
        %v3068 = vsel %vm2941, %v3027, 0.0
        %3069 = vadd.xlane.f32.xlu0 %v3068
        %v3070 = vpop.xlane.xlu0 %3069
        %v3071 = vsel %vm2941, %v3029, 0.0
        %3072 = vadd.xlane.f32.xlu0 %v3071
        %v3073 = vpop.xlane.xlu0 %3072
        %v3074 = vsel %vm2941, %v3031, 0.0
        %3075 = vadd.xlane.f32.xlu0 %v3074
        %v3076 = vpop.xlane.xlu0 %3075
        %v3077 = vsel %vm2941, %v3033, 0.0
        %3078 = vadd.xlane.f32.xlu0 %v3077
        %v3079 = vpop.xlane.xlu0 %3078
        %v3080 = vsel %vm2941, %v3035, 0.0
        %3081 = vadd.xlane.f32.xlu0 %v3080
        %v3082 = vpop.xlane.xlu0 %3081
        %v3083 = vsel %vm2941, %v3037, 0.0
        %3084 = vadd.xlane.f32.xlu0 %v3083
        %v3085 = vpop.xlane.xlu0 %3084
        %v3086 = vrcp.pop %v3040
        %v3087 = vmul.f32 %v3007, %v3086
        %v3088 = vrcp.pop %v3043
        %v3089 = vmul.f32 %v3009, %v3088
        %v3090 = vrcp.pop %v3046
        %v3091 = vmul.f32 %v3011, %v3090
        %v3092 = vrcp.pop %v3049
        %v3093 = vmul.f32 %v3013, %v3092
        %v3094 = vrcp.pop %v3052
        %v3095 = vmul.f32 %v3015, %v3094
        %v3096 = vrcp.pop %v3055
        %v3097 = vmul.f32 %v3017, %v3096
        %v3098 = vrcp.pop %v3058
        %v3099 = vmul.f32 %v3019, %v3098
        %v3100 = vrcp.pop %v3061
        %v3101 = vmul.f32 %v3021, %v3100
        %v3102 = vrcp.pop %v3064
        %v3103 = vmul.f32 %v3023, %v3102
        %v3104 = vrcp.pop %v3067
        %v3105 = vmul.f32 %v3025, %v3104
        %v3106 = vrcp.pop %v3070
        %v3107 = vmul.f32 %v3027, %v3106
        %v3108 = vrcp.pop %v3073
        %v3109 = vmul.f32 %v3029, %v3108
        %v3110 = vrcp.pop %v3076
        %v3111 = vmul.f32 %v3031, %v3110
        %v3112 = vrcp.pop %v3079
        %v3113 = vmul.f32 %v3033, %v3112
        %v3114 = vrcp.pop %v3082
        %v3115 = vmul.f32 %v3035, %v3114
        %v3116 = vrcp.pop %v3085
        %v3117 = vmul.f32 %v3037, %v3116
        %3118 = vrot.lane.b32.xlu0 %v639, 120
        %v3119 = vpop.permute.xlu0 %3118
        %v3122 = vsel %vm2941, %v3087, 0
        %3124 = vmatprep.subr.mxu0 0.0
        %3125 = vmatpush1.msra.mxu0 %v3119
        %3126 = vmatprep.subr.mxu0 0.0
        %3127 = vmatpush1.msra.mxu0 0.0
        %3128 = vmatprep.subr.mxu0 0.0
        %3129 = vmatpush1.msra.mxu0 0.0
        %3130 = vmatprep.subr.mxu0 0.0
        %3131 = vmatpush1.msra.mxu0 0.0
        %3132 = vmatprep.subr.mxu0 0.0
        %3133 = vmatpush1.msra.mxu0 0.0
        %3134 = vmatprep.subr.mxu0 0.0
        %3135 = vmatpush1.msra.mxu0 0.0
        %3136 = vmatprep.subr.mxu0 0.0
        %3137 = vmatpush1.msra.mxu0 0.0
        %3138 = vmatprep.subr.mxu0 0.0
        %3139 = vmatpush1.msra.mxu0 0.0
        %3140 = vmatprep.subr.mxu0 0.0
        %3141 = vmatpush1.msra.mxu0 0.0
        %3142 = vmatprep.subr.mxu0 0.0
        %3143 = vmatpush1.msra.mxu0 0.0
        %3144 = vmatprep.subr.mxu0 0.0
        %3145 = vmatpush1.msra.mxu0 0.0
        %3146 = vmatprep.subr.mxu0 0.0
        %3147 = vmatpush1.msra.mxu0 0.0
        %3148 = vmatprep.subr.mxu0 0.0
        %3149 = vmatpush1.msra.mxu0 0.0
        %3150 = vmatprep.subr.mxu0 0.0
        %3151 = vmatpush1.msra.mxu0 0.0
        %3152 = vmatprep.subr.mxu0 0.0
        %3153 = vmatpush1.msra.mxu0 0.0
        %3154 = vmatprep.subr.mxu0 0.0
        %3155 = vmatpush1.msra.mxu0 0.0
        %3156 = vmatprep.subr.mxu0 0.0
        %3157 = vmatpush1.msra.mxu0 0.0
        %3158 = vmatprep.subr.mxu0 0.0
        %3159 = vmatpush1.msra.mxu0 0.0
        %3160 = vmatprep.subr.mxu0 0.0
        %3161 = vmatpush1.msra.mxu0 0.0
        %3162 = vmatprep.subr.mxu0 0.0
        %3163 = vmatpush1.msra.mxu0 0.0
        %3164 = vmatprep.subr.mxu0 0.0
        %3165 = vmatpush1.msra.mxu0 0.0
        %3166 = vmatprep.subr.mxu0 0.0
        %3167 = vmatpush1.msra.mxu0 0.0
        %3168 = vmatprep.subr.mxu0 0.0
        %3169 = vmatpush1.msra.mxu0 0.0
        %3170 = vmatprep.subr.mxu0 0.0
        %3171 = vmatpush1.msra.mxu0 0.0
        %3172 = vmatprep.subr.mxu0 0.0
        %3173 = vmatpush1.msra.mxu0 0.0
        %3174 = vmatprep.subr.mxu0 0.0
        %3175 = vmatpush1.msra.mxu0 0.0
        %3176 = vmatprep.subr.mxu0 0.0
        %3177 = vmatpush1.msra.mxu0 0.0
        %3178 = vmatprep.subr.mxu0 0.0
        %3179 = vmatpush1.msra.mxu0 0.0
        %3180 = vmatprep.subr.mxu0 0.0
        %3181 = vmatpush1.msra.mxu0 0.0
        %3182 = vmatprep.subr.mxu0 0.0
        %3183 = vmatpush1.msra.mxu0 0.0
        %3184 = vmatprep.subr.mxu0 0.0
        %3185 = vmatpush1.msra.mxu0 0.0
        %3186 = vmatprep.subr.mxu0 0.0
        %3187 = vmatpush1.msra.mxu0 0.0
        %3188 = vmatprep.mubr.f32.mxu0 0.0
        %3189 = vmatmul.mubr.f32.gmra.mrb[0].mxu0 %v3122
        %v3190 = vpop.f32.mrb[0].mxu0
        %v3191 = vadd.f32 0.0, %v3190
        %v3192 = vpop.f32.mrb[0].mxu0
        %3193 = vdwg.mxu0
        %3194 = vrot.lane.b32.xlu0 %v709, 120
        %v3195 = vpop.permute.xlu0 %3194
        %v3198 = vsel %vm2941, %v3089, 0
        %3200 = vmatprep.subr.mxu0 0.0
        %3201 = vmatpush1.msra.mxu0 %v3195
        %3202 = vmatprep.subr.mxu0 0.0
        %3203 = vmatpush1.msra.mxu0 0.0
        %3204 = vmatprep.subr.mxu0 0.0
        %3205 = vmatpush1.msra.mxu0 0.0
        %3206 = vmatprep.subr.mxu0 0.0
        %3207 = vmatpush1.msra.mxu0 0.0
        %3208 = vmatprep.subr.mxu0 0.0
        %3209 = vmatpush1.msra.mxu0 0.0
        %3210 = vmatprep.subr.mxu0 0.0
        %3211 = vmatpush1.msra.mxu0 0.0
        %3212 = vmatprep.subr.mxu0 0.0
        %3213 = vmatpush1.msra.mxu0 0.0
        %3214 = vmatprep.subr.mxu0 0.0
        %3215 = vmatpush1.msra.mxu0 0.0
        %3216 = vmatprep.subr.mxu0 0.0
        %3217 = vmatpush1.msra.mxu0 0.0
        %3218 = vmatprep.subr.mxu0 0.0
        %3219 = vmatpush1.msra.mxu0 0.0
        %3220 = vmatprep.subr.mxu0 0.0
        %3221 = vmatpush1.msra.mxu0 0.0
        %3222 = vmatprep.subr.mxu0 0.0
        %3223 = vmatpush1.msra.mxu0 0.0
        %3224 = vmatprep.subr.mxu0 0.0
        %3225 = vmatpush1.msra.mxu0 0.0
        %3226 = vmatprep.subr.mxu0 0.0
        %3227 = vmatpush1.msra.mxu0 0.0
        %3228 = vmatprep.subr.mxu0 0.0
        %3229 = vmatpush1.msra.mxu0 0.0
        %3230 = vmatprep.subr.mxu0 0.0
        %3231 = vmatpush1.msra.mxu0 0.0
        %3232 = vmatprep.subr.mxu0 0.0
        %3233 = vmatpush1.msra.mxu0 0.0
        %3234 = vmatprep.subr.mxu0 0.0
        %3235 = vmatpush1.msra.mxu0 0.0
        %3236 = vmatprep.subr.mxu0 0.0
        %3237 = vmatpush1.msra.mxu0 0.0
        %3238 = vmatprep.subr.mxu0 0.0
        %3239 = vmatpush1.msra.mxu0 0.0
        %3240 = vmatprep.subr.mxu0 0.0
        %3241 = vmatpush1.msra.mxu0 0.0
        %3242 = vmatprep.subr.mxu0 0.0
        %3243 = vmatpush1.msra.mxu0 0.0
        %3244 = vmatprep.subr.mxu0 0.0
        %3245 = vmatpush1.msra.mxu0 0.0
        %3246 = vmatprep.subr.mxu0 0.0
        %3247 = vmatpush1.msra.mxu0 0.0
        %3248 = vmatprep.subr.mxu0 0.0
        %3249 = vmatpush1.msra.mxu0 0.0
        %3250 = vmatprep.subr.mxu0 0.0
        %3251 = vmatpush1.msra.mxu0 0.0
        %3252 = vmatprep.subr.mxu0 0.0
        %3253 = vmatpush1.msra.mxu0 0.0
        %3254 = vmatprep.subr.mxu0 0.0
        %3255 = vmatpush1.msra.mxu0 0.0
        %3256 = vmatprep.subr.mxu0 0.0
        %3257 = vmatpush1.msra.mxu0 0.0
        %3258 = vmatprep.subr.mxu0 0.0
        %3259 = vmatpush1.msra.mxu0 0.0
        %3260 = vmatprep.subr.mxu0 0.0
        %3261 = vmatpush1.msra.mxu0 0.0
        %3262 = vmatprep.subr.mxu0 0.0
        %3263 = vmatpush1.msra.mxu0 0.0
        %3264 = vmatprep.mubr.f32.mxu0 0.0
        %3265 = vmatmul.mubr.f32.gmra.mrb[0].mxu0 %v3198
        %v3266 = vpop.f32.mrb[0].mxu0
        %v3267 = vadd.f32 0.0, %v3266
        %v3268 = vpop.f32.mrb[0].mxu0
        %3269 = vdwg.mxu0
        %3270 = vrot.lane.b32.xlu0 %v779, 120
        %v3271 = vpop.permute.xlu0 %3270
        %v3274 = vsel %vm2941, %v3091, 0
        %3276 = vmatprep.subr.mxu0 0.0
        %3277 = vmatpush1.msra.mxu0 %v3271
        %3278 = vmatprep.subr.mxu0 0.0
        %3279 = vmatpush1.msra.mxu0 0.0
        %3280 = vmatprep.subr.mxu0 0.0
        %3281 = vmatpush1.msra.mxu0 0.0
        %3282 = vmatprep.subr.mxu0 0.0
        %3283 = vmatpush1.msra.mxu0 0.0
        %3284 = vmatprep.subr.mxu0 0.0
        %3285 = vmatpush1.msra.mxu0 0.0
        %3286 = vmatprep.subr.mxu0 0.0
        %3287 = vmatpush1.msra.mxu0 0.0
        %3288 = vmatprep.subr.mxu0 0.0
        %3289 = vmatpush1.msra.mxu0 0.0
        %3290 = vmatprep.subr.mxu0 0.0
        %3291 = vmatpush1.msra.mxu0 0.0
        %3292 = vmatprep.subr.mxu0 0.0
        %3293 = vmatpush1.msra.mxu0 0.0
        %3294 = vmatprep.subr.mxu0 0.0
        %3295 = vmatpush1.msra.mxu0 0.0
        %3296 = vmatprep.subr.mxu0 0.0
        %3297 = vmatpush1.msra.mxu0 0.0
        %3298 = vmatprep.subr.mxu0 0.0
        %3299 = vmatpush1.msra.mxu0 0.0
        %3300 = vmatprep.subr.mxu0 0.0
        %3301 = vmatpush1.msra.mxu0 0.0
        %3302 = vmatprep.subr.mxu0 0.0
        %3303 = vmatpush1.msra.mxu0 0.0
        %3304 = vmatprep.subr.mxu0 0.0
        %3305 = vmatpush1.msra.mxu0 0.0
        %3306 = vmatprep.subr.mxu0 0.0
        %3307 = vmatpush1.msra.mxu0 0.0
        %3308 = vmatprep.subr.mxu0 0.0
        %3309 = vmatpush1.msra.mxu0 0.0
        %3310 = vmatprep.subr.mxu0 0.0
        %3311 = vmatpush1.msra.mxu0 0.0
        %3312 = vmatprep.subr.mxu0 0.0
        %3313 = vmatpush1.msra.mxu0 0.0
        %3314 = vmatprep.subr.mxu0 0.0
        %3315 = vmatpush1.msra.mxu0 0.0
        %3316 = vmatprep.subr.mxu0 0.0
        %3317 = vmatpush1.msra.mxu0 0.0
        %3318 = vmatprep.subr.mxu0 0.0
        %3319 = vmatpush1.msra.mxu0 0.0
        %3320 = vmatprep.subr.mxu0 0.0
        %3321 = vmatpush1.msra.mxu0 0.0
        %3322 = vmatprep.subr.mxu0 0.0
        %3323 = vmatpush1.msra.mxu0 0.0
        %3324 = vmatprep.subr.mxu0 0.0
        %3325 = vmatpush1.msra.mxu0 0.0
        %3326 = vmatprep.subr.mxu0 0.0
        %3327 = vmatpush1.msra.mxu0 0.0
        %3328 = vmatprep.subr.mxu0 0.0
        %3329 = vmatpush1.msra.mxu0 0.0
        %3330 = vmatprep.subr.mxu0 0.0
        %3331 = vmatpush1.msra.mxu0 0.0
        %3332 = vmatprep.subr.mxu0 0.0
        %3333 = vmatpush1.msra.mxu0 0.0
        %3334 = vmatprep.subr.mxu0 0.0
        %3335 = vmatpush1.msra.mxu0 0.0
        %3336 = vmatprep.subr.mxu0 0.0
        %3337 = vmatpush1.msra.mxu0 0.0
        %3338 = vmatprep.subr.mxu0 0.0
        %3339 = vmatpush1.msra.mxu0 0.0
        %3340 = vmatprep.mubr.f32.mxu0 0.0
        %3341 = vmatmul.mubr.f32.gmra.mrb[0].mxu0 %v3274
        %v3342 = vpop.f32.mrb[0].mxu0
        %v3343 = vadd.f32 0.0, %v3342
        %v3344 = vpop.f32.mrb[0].mxu0
        %3345 = vdwg.mxu0
        %3346 = vrot.lane.b32.xlu0 %v849, 120
        %v3347 = vpop.permute.xlu0 %3346
        %v3350 = vsel %vm2941, %v3093, 0
        %3352 = vmatprep.subr.mxu0 0.0
        %3353 = vmatpush1.msra.mxu0 %v3347
        %3354 = vmatprep.subr.mxu0 0.0
        %3355 = vmatpush1.msra.mxu0 0.0
        %3356 = vmatprep.subr.mxu0 0.0
        %3357 = vmatpush1.msra.mxu0 0.0
        %3358 = vmatprep.subr.mxu0 0.0
        %3359 = vmatpush1.msra.mxu0 0.0
        %3360 = vmatprep.subr.mxu0 0.0
        %3361 = vmatpush1.msra.mxu0 0.0
        %3362 = vmatprep.subr.mxu0 0.0
        %3363 = vmatpush1.msra.mxu0 0.0
        %3364 = vmatprep.subr.mxu0 0.0
        %3365 = vmatpush1.msra.mxu0 0.0
        %3366 = vmatprep.subr.mxu0 0.0
        %3367 = vmatpush1.msra.mxu0 0.0
        %3368 = vmatprep.subr.mxu0 0.0
        %3369 = vmatpush1.msra.mxu0 0.0
        %3370 = vmatprep.subr.mxu0 0.0
        %3371 = vmatpush1.msra.mxu0 0.0
        %3372 = vmatprep.subr.mxu0 0.0
        %3373 = vmatpush1.msra.mxu0 0.0
        %3374 = vmatprep.subr.mxu0 0.0
        %3375 = vmatpush1.msra.mxu0 0.0
        %3376 = vmatprep.subr.mxu0 0.0
        %3377 = vmatpush1.msra.mxu0 0.0
        %3378 = vmatprep.subr.mxu0 0.0
        %3379 = vmatpush1.msra.mxu0 0.0
        %3380 = vmatprep.subr.mxu0 0.0
        %3381 = vmatpush1.msra.mxu0 0.0
        %3382 = vmatprep.subr.mxu0 0.0
        %3383 = vmatpush1.msra.mxu0 0.0
        %3384 = vmatprep.subr.mxu0 0.0
        %3385 = vmatpush1.msra.mxu0 0.0
        %3386 = vmatprep.subr.mxu0 0.0
        %3387 = vmatpush1.msra.mxu0 0.0
        %3388 = vmatprep.subr.mxu0 0.0
        %3389 = vmatpush1.msra.mxu0 0.0
        %3390 = vmatprep.subr.mxu0 0.0
        %3391 = vmatpush1.msra.mxu0 0.0
        %3392 = vmatprep.subr.mxu0 0.0
        %3393 = vmatpush1.msra.mxu0 0.0
        %3394 = vmatprep.subr.mxu0 0.0
        %3395 = vmatpush1.msra.mxu0 0.0
        %3396 = vmatprep.subr.mxu0 0.0
        %3397 = vmatpush1.msra.mxu0 0.0
        %3398 = vmatprep.subr.mxu0 0.0
        %3399 = vmatpush1.msra.mxu0 0.0
        %3400 = vmatprep.subr.mxu0 0.0
        %3401 = vmatpush1.msra.mxu0 0.0
        %3402 = vmatprep.subr.mxu0 0.0
        %3403 = vmatpush1.msra.mxu0 0.0
        %3404 = vmatprep.subr.mxu0 0.0
        %3405 = vmatpush1.msra.mxu0 0.0
        %3406 = vmatprep.subr.mxu0 0.0
        %3407 = vmatpush1.msra.mxu0 0.0
        %3408 = vmatprep.subr.mxu0 0.0
        %3409 = vmatpush1.msra.mxu0 0.0
        %3410 = vmatprep.subr.mxu0 0.0
        %3411 = vmatpush1.msra.mxu0 0.0
        %3412 = vmatprep.subr.mxu0 0.0
        %3413 = vmatpush1.msra.mxu0 0.0
        %3414 = vmatprep.subr.mxu0 0.0
        %3415 = vmatpush1.msra.mxu0 0.0
        %3416 = vmatprep.mubr.f32.mxu0 0.0
        %3417 = vmatmul.mubr.f32.gmra.mrb[0].mxu0 %v3350
        %v3418 = vpop.f32.mrb[0].mxu0
        %v3419 = vadd.f32 0.0, %v3418
        %v3420 = vpop.f32.mrb[0].mxu0
        %3421 = vdwg.mxu0
        %3422 = vrot.lane.b32.xlu0 %v919, 120
        %v3423 = vpop.permute.xlu0 %3422
        %v3426 = vsel %vm2941, %v3095, 0
        %3428 = vmatprep.subr.mxu0 0.0
        %3429 = vmatpush1.msra.mxu0 %v3423
        %3430 = vmatprep.subr.mxu0 0.0
        %3431 = vmatpush1.msra.mxu0 0.0
        %3432 = vmatprep.subr.mxu0 0.0
        %3433 = vmatpush1.msra.mxu0 0.0
        %3434 = vmatprep.subr.mxu0 0.0
        %3435 = vmatpush1.msra.mxu0 0.0
        %3436 = vmatprep.subr.mxu0 0.0
        %3437 = vmatpush1.msra.mxu0 0.0
        %3438 = vmatprep.subr.mxu0 0.0
        %3439 = vmatpush1.msra.mxu0 0.0
        %3440 = vmatprep.subr.mxu0 0.0
        %3441 = vmatpush1.msra.mxu0 0.0
        %3442 = vmatprep.subr.mxu0 0.0
        %3443 = vmatpush1.msra.mxu0 0.0
        %3444 = vmatprep.subr.mxu0 0.0
        %3445 = vmatpush1.msra.mxu0 0.0
        %3446 = vmatprep.subr.mxu0 0.0
        %3447 = vmatpush1.msra.mxu0 0.0
        %3448 = vmatprep.subr.mxu0 0.0
        %3449 = vmatpush1.msra.mxu0 0.0
        %3450 = vmatprep.subr.mxu0 0.0
        %3451 = vmatpush1.msra.mxu0 0.0
        %3452 = vmatprep.subr.mxu0 0.0
        %3453 = vmatpush1.msra.mxu0 0.0
        %3454 = vmatprep.subr.mxu0 0.0
        %3455 = vmatpush1.msra.mxu0 0.0
        %3456 = vmatprep.subr.mxu0 0.0
        %3457 = vmatpush1.msra.mxu0 0.0
        %3458 = vmatprep.subr.mxu0 0.0
        %3459 = vmatpush1.msra.mxu0 0.0
        %3460 = vmatprep.subr.mxu0 0.0
        %3461 = vmatpush1.msra.mxu0 0.0
        %3462 = vmatprep.subr.mxu0 0.0
        %3463 = vmatpush1.msra.mxu0 0.0
        %3464 = vmatprep.subr.mxu0 0.0
        %3465 = vmatpush1.msra.mxu0 0.0
        %3466 = vmatprep.subr.mxu0 0.0
        %3467 = vmatpush1.msra.mxu0 0.0
        %3468 = vmatprep.subr.mxu0 0.0
        %3469 = vmatpush1.msra.mxu0 0.0
        %3470 = vmatprep.subr.mxu0 0.0
        %3471 = vmatpush1.msra.mxu0 0.0
        %3472 = vmatprep.subr.mxu0 0.0
        %3473 = vmatpush1.msra.mxu0 0.0
        %3474 = vmatprep.subr.mxu0 0.0
        %3475 = vmatpush1.msra.mxu0 0.0
        %3476 = vmatprep.subr.mxu0 0.0
        %3477 = vmatpush1.msra.mxu0 0.0
        %3478 = vmatprep.subr.mxu0 0.0
        %3479 = vmatpush1.msra.mxu0 0.0
        %3480 = vmatprep.subr.mxu0 0.0
        %3481 = vmatpush1.msra.mxu0 0.0
        %3482 = vmatprep.subr.mxu0 0.0
        %3483 = vmatpush1.msra.mxu0 0.0
        %3484 = vmatprep.subr.mxu0 0.0
        %3485 = vmatpush1.msra.mxu0 0.0
        %3486 = vmatprep.subr.mxu0 0.0
        %3487 = vmatpush1.msra.mxu0 0.0
        %3488 = vmatprep.subr.mxu0 0.0
        %3489 = vmatpush1.msra.mxu0 0.0
        %3490 = vmatprep.subr.mxu0 0.0
        %3491 = vmatpush1.msra.mxu0 0.0
        %3492 = vmatprep.mubr.f32.mxu0 0.0
        %3493 = vmatmul.mubr.f32.gmra.mrb[0].mxu0 %v3426
        %v3494 = vpop.f32.mrb[0].mxu0
        %v3495 = vadd.f32 0.0, %v3494
        %v3496 = vpop.f32.mrb[0].mxu0
        %3497 = vdwg.mxu0
        %3498 = vrot.lane.b32.xlu0 %v989, 120
        %v3499 = vpop.permute.xlu0 %3498
        %v3502 = vsel %vm2941, %v3097, 0
        %3504 = vmatprep.subr.mxu0 0.0
        %3505 = vmatpush1.msra.mxu0 %v3499
        %3506 = vmatprep.subr.mxu0 0.0
        %3507 = vmatpush1.msra.mxu0 0.0
        %3508 = vmatprep.subr.mxu0 0.0
        %3509 = vmatpush1.msra.mxu0 0.0
        %3510 = vmatprep.subr.mxu0 0.0
        %3511 = vmatpush1.msra.mxu0 0.0
        %3512 = vmatprep.subr.mxu0 0.0
        %3513 = vmatpush1.msra.mxu0 0.0
        %3514 = vmatprep.subr.mxu0 0.0
        %3515 = vmatpush1.msra.mxu0 0.0
        %3516 = vmatprep.subr.mxu0 0.0
        %3517 = vmatpush1.msra.mxu0 0.0
        %3518 = vmatprep.subr.mxu0 0.0
        %3519 = vmatpush1.msra.mxu0 0.0
        %3520 = vmatprep.subr.mxu0 0.0
        %3521 = vmatpush1.msra.mxu0 0.0
        %3522 = vmatprep.subr.mxu0 0.0
        %3523 = vmatpush1.msra.mxu0 0.0
        %3524 = vmatprep.subr.mxu0 0.0
        %3525 = vmatpush1.msra.mxu0 0.0
        %3526 = vmatprep.subr.mxu0 0.0
        %3527 = vmatpush1.msra.mxu0 0.0
        %3528 = vmatprep.subr.mxu0 0.0
        %3529 = vmatpush1.msra.mxu0 0.0
        %3530 = vmatprep.subr.mxu0 0.0
        %3531 = vmatpush1.msra.mxu0 0.0
        %3532 = vmatprep.subr.mxu0 0.0
        %3533 = vmatpush1.msra.mxu0 0.0
        %3534 = vmatprep.subr.mxu0 0.0
        %3535 = vmatpush1.msra.mxu0 0.0
        %3536 = vmatprep.subr.mxu0 0.0
        %3537 = vmatpush1.msra.mxu0 0.0
        %3538 = vmatprep.subr.mxu0 0.0
        %3539 = vmatpush1.msra.mxu0 0.0
        %3540 = vmatprep.subr.mxu0 0.0
        %3541 = vmatpush1.msra.mxu0 0.0
        %3542 = vmatprep.subr.mxu0 0.0
        %3543 = vmatpush1.msra.mxu0 0.0
        %3544 = vmatprep.subr.mxu0 0.0
        %3545 = vmatpush1.msra.mxu0 0.0
        %3546 = vmatprep.subr.mxu0 0.0
        %3547 = vmatpush1.msra.mxu0 0.0
        %3548 = vmatprep.subr.mxu0 0.0
        %3549 = vmatpush1.msra.mxu0 0.0
        %3550 = vmatprep.subr.mxu0 0.0
        %3551 = vmatpush1.msra.mxu0 0.0
        %3552 = vmatprep.subr.mxu0 0.0
        %3553 = vmatpush1.msra.mxu0 0.0
        %3554 = vmatprep.subr.mxu0 0.0
        %3555 = vmatpush1.msra.mxu0 0.0
        %3556 = vmatprep.subr.mxu0 0.0
        %3557 = vmatpush1.msra.mxu0 0.0
        %3558 = vmatprep.subr.mxu0 0.0
        %3559 = vmatpush1.msra.mxu0 0.0
        %3560 = vmatprep.subr.mxu0 0.0
        %3561 = vmatpush1.msra.mxu0 0.0
        %3562 = vmatprep.subr.mxu0 0.0
        %3563 = vmatpush1.msra.mxu0 0.0
        %3564 = vmatprep.subr.mxu0 0.0
        %3565 = vmatpush1.msra.mxu0 0.0
        %3566 = vmatprep.subr.mxu0 0.0
        %3567 = vmatpush1.msra.mxu0 0.0
        %3568 = vmatprep.mubr.f32.mxu0 0.0
        %3569 = vmatmul.mubr.f32.gmra.mrb[0].mxu0 %v3502
        %v3570 = vpop.f32.mrb[0].mxu0
        %v3571 = vadd.f32 0.0, %v3570
        %v3572 = vpop.f32.mrb[0].mxu0
        %3573 = vdwg.mxu0
        %3574 = vrot.lane.b32.xlu0 %v1059, 120
        %v3575 = vpop.permute.xlu0 %3574
        %v3578 = vsel %vm2941, %v3099, 0
        %3580 = vmatprep.subr.mxu0 0.0
        %3581 = vmatpush1.msra.mxu0 %v3575
        %3582 = vmatprep.subr.mxu0 0.0
        %3583 = vmatpush1.msra.mxu0 0.0
        %3584 = vmatprep.subr.mxu0 0.0
        %3585 = vmatpush1.msra.mxu0 0.0
        %3586 = vmatprep.subr.mxu0 0.0
        %3587 = vmatpush1.msra.mxu0 0.0
        %3588 = vmatprep.subr.mxu0 0.0
        %3589 = vmatpush1.msra.mxu0 0.0
        %3590 = vmatprep.subr.mxu0 0.0
        %3591 = vmatpush1.msra.mxu0 0.0
        %3592 = vmatprep.subr.mxu0 0.0
        %3593 = vmatpush1.msra.mxu0 0.0
        %3594 = vmatprep.subr.mxu0 0.0
        %3595 = vmatpush1.msra.mxu0 0.0
        %3596 = vmatprep.subr.mxu0 0.0
        %3597 = vmatpush1.msra.mxu0 0.0
        %3598 = vmatprep.subr.mxu0 0.0
        %3599 = vmatpush1.msra.mxu0 0.0
        %3600 = vmatprep.subr.mxu0 0.0
        %3601 = vmatpush1.msra.mxu0 0.0
        %3602 = vmatprep.subr.mxu0 0.0
        %3603 = vmatpush1.msra.mxu0 0.0
        %3604 = vmatprep.subr.mxu0 0.0
        %3605 = vmatpush1.msra.mxu0 0.0
        %3606 = vmatprep.subr.mxu0 0.0
        %3607 = vmatpush1.msra.mxu0 0.0
        %3608 = vmatprep.subr.mxu0 0.0
        %3609 = vmatpush1.msra.mxu0 0.0
        %3610 = vmatprep.subr.mxu0 0.0
        %3611 = vmatpush1.msra.mxu0 0.0
        %3612 = vmatprep.subr.mxu0 0.0
        %3613 = vmatpush1.msra.mxu0 0.0
        %3614 = vmatprep.subr.mxu0 0.0
        %3615 = vmatpush1.msra.mxu0 0.0
        %3616 = vmatprep.subr.mxu0 0.0
        %3617 = vmatpush1.msra.mxu0 0.0
        %3618 = vmatprep.subr.mxu0 0.0
        %3619 = vmatpush1.msra.mxu0 0.0
        %3620 = vmatprep.subr.mxu0 0.0
        %3621 = vmatpush1.msra.mxu0 0.0
        %3622 = vmatprep.subr.mxu0 0.0
        %3623 = vmatpush1.msra.mxu0 0.0
        %3624 = vmatprep.subr.mxu0 0.0
        %3625 = vmatpush1.msra.mxu0 0.0
        %3626 = vmatprep.subr.mxu0 0.0
        %3627 = vmatpush1.msra.mxu0 0.0
        %3628 = vmatprep.subr.mxu0 0.0
        %3629 = vmatpush1.msra.mxu0 0.0
        %3630 = vmatprep.subr.mxu0 0.0
        %3631 = vmatpush1.msra.mxu0 0.0
        %3632 = vmatprep.subr.mxu0 0.0
        %3633 = vmatpush1.msra.mxu0 0.0
        %3634 = vmatprep.subr.mxu0 0.0
        %3635 = vmatpush1.msra.mxu0 0.0
        %3636 = vmatprep.subr.mxu0 0.0
        %3637 = vmatpush1.msra.mxu0 0.0
        %3638 = vmatprep.subr.mxu0 0.0
        %3639 = vmatpush1.msra.mxu0 0.0
        %3640 = vmatprep.subr.mxu0 0.0
        %3641 = vmatpush1.msra.mxu0 0.0
        %3642 = vmatprep.subr.mxu0 0.0
        %3643 = vmatpush1.msra.mxu0 0.0
        %3644 = vmatprep.mubr.f32.mxu0 0.0
        %3645 = vmatmul.mubr.f32.gmra.mrb[0].mxu0 %v3578
        %v3646 = vpop.f32.mrb[0].mxu0
        %v3647 = vadd.f32 0.0, %v3646
        %v3648 = vpop.f32.mrb[0].mxu0
        %3649 = vdwg.mxu0
        %3650 = vrot.lane.b32.xlu0 %v1129, 120
        %v3651 = vpop.permute.xlu0 %3650
        %v3654 = vsel %vm2941, %v3101, 0
        %3656 = vmatprep.subr.mxu0 0.0
        %3657 = vmatpush1.msra.mxu0 %v3651
        %3658 = vmatprep.subr.mxu0 0.0
        %3659 = vmatpush1.msra.mxu0 0.0
        %3660 = vmatprep.subr.mxu0 0.0
        %3661 = vmatpush1.msra.mxu0 0.0
        %3662 = vmatprep.subr.mxu0 0.0
        %3663 = vmatpush1.msra.mxu0 0.0
        %3664 = vmatprep.subr.mxu0 0.0
        %3665 = vmatpush1.msra.mxu0 0.0
        %3666 = vmatprep.subr.mxu0 0.0
        %3667 = vmatpush1.msra.mxu0 0.0
        %3668 = vmatprep.subr.mxu0 0.0
        %3669 = vmatpush1.msra.mxu0 0.0
        %3670 = vmatprep.subr.mxu0 0.0
        %3671 = vmatpush1.msra.mxu0 0.0
        %3672 = vmatprep.subr.mxu0 0.0
        %3673 = vmatpush1.msra.mxu0 0.0
        %3674 = vmatprep.subr.mxu0 0.0
        %3675 = vmatpush1.msra.mxu0 0.0
        %3676 = vmatprep.subr.mxu0 0.0
        %3677 = vmatpush1.msra.mxu0 0.0
        %3678 = vmatprep.subr.mxu0 0.0
        %3679 = vmatpush1.msra.mxu0 0.0
        %3680 = vmatprep.subr.mxu0 0.0
        %3681 = vmatpush1.msra.mxu0 0.0
        %3682 = vmatprep.subr.mxu0 0.0
        %3683 = vmatpush1.msra.mxu0 0.0
        %3684 = vmatprep.subr.mxu0 0.0
        %3685 = vmatpush1.msra.mxu0 0.0
        %3686 = vmatprep.subr.mxu0 0.0
        %3687 = vmatpush1.msra.mxu0 0.0
        %3688 = vmatprep.subr.mxu0 0.0
        %3689 = vmatpush1.msra.mxu0 0.0
        %3690 = vmatprep.subr.mxu0 0.0
        %3691 = vmatpush1.msra.mxu0 0.0
        %3692 = vmatprep.subr.mxu0 0.0
        %3693 = vmatpush1.msra.mxu0 0.0
        %3694 = vmatprep.subr.mxu0 0.0
        %3695 = vmatpush1.msra.mxu0 0.0
        %3696 = vmatprep.subr.mxu0 0.0
        %3697 = vmatpush1.msra.mxu0 0.0
        %3698 = vmatprep.subr.mxu0 0.0
        %3699 = vmatpush1.msra.mxu0 0.0
        %3700 = vmatprep.subr.mxu0 0.0
        %3701 = vmatpush1.msra.mxu0 0.0
        %3702 = vmatprep.subr.mxu0 0.0
        %3703 = vmatpush1.msra.mxu0 0.0
        %3704 = vmatprep.subr.mxu0 0.0
        %3705 = vmatpush1.msra.mxu0 0.0
        %3706 = vmatprep.subr.mxu0 0.0
        %3707 = vmatpush1.msra.mxu0 0.0
        %3708 = vmatprep.subr.mxu0 0.0
        %3709 = vmatpush1.msra.mxu0 0.0
        %3710 = vmatprep.subr.mxu0 0.0
        %3711 = vmatpush1.msra.mxu0 0.0
        %3712 = vmatprep.subr.mxu0 0.0
        %3713 = vmatpush1.msra.mxu0 0.0
        %3714 = vmatprep.subr.mxu0 0.0
        %3715 = vmatpush1.msra.mxu0 0.0
        %3716 = vmatprep.subr.mxu0 0.0
        %3717 = vmatpush1.msra.mxu0 0.0
        %3718 = vmatprep.subr.mxu0 0.0
        %3719 = vmatpush1.msra.mxu0 0.0
        %3720 = vmatprep.mubr.f32.mxu0 0.0
        %3721 = vmatmul.mubr.f32.gmra.mrb[0].mxu0 %v3654
        %v3722 = vpop.f32.mrb[0].mxu0
        %v3723 = vadd.f32 0.0, %v3722
        %v3724 = vpop.f32.mrb[0].mxu0
        %3725 = vdwg.mxu0
        %3726 = vrot.lane.b32.xlu0 %v1199, 120
        %v3727 = vpop.permute.xlu0 %3726
        %v3730 = vsel %vm2941, %v3103, 0
        %3732 = vmatprep.subr.mxu0 0.0
        %3733 = vmatpush1.msra.mxu0 %v3727
        %3734 = vmatprep.subr.mxu0 0.0
        %3735 = vmatpush1.msra.mxu0 0.0
        %3736 = vmatprep.subr.mxu0 0.0
        %3737 = vmatpush1.msra.mxu0 0.0
        %3738 = vmatprep.subr.mxu0 0.0
        %3739 = vmatpush1.msra.mxu0 0.0
        %3740 = vmatprep.subr.mxu0 0.0
        %3741 = vmatpush1.msra.mxu0 0.0
        %3742 = vmatprep.subr.mxu0 0.0
        %3743 = vmatpush1.msra.mxu0 0.0
        %3744 = vmatprep.subr.mxu0 0.0
        %3745 = vmatpush1.msra.mxu0 0.0
        %3746 = vmatprep.subr.mxu0 0.0
        %3747 = vmatpush1.msra.mxu0 0.0
        %3748 = vmatprep.subr.mxu0 0.0
        %3749 = vmatpush1.msra.mxu0 0.0
        %3750 = vmatprep.subr.mxu0 0.0
        %3751 = vmatpush1.msra.mxu0 0.0
        %3752 = vmatprep.subr.mxu0 0.0
        %3753 = vmatpush1.msra.mxu0 0.0
        %3754 = vmatprep.subr.mxu0 0.0
        %3755 = vmatpush1.msra.mxu0 0.0
        %3756 = vmatprep.subr.mxu0 0.0
        %3757 = vmatpush1.msra.mxu0 0.0
        %3758 = vmatprep.subr.mxu0 0.0
        %3759 = vmatpush1.msra.mxu0 0.0
        %3760 = vmatprep.subr.mxu0 0.0
        %3761 = vmatpush1.msra.mxu0 0.0
        %3762 = vmatprep.subr.mxu0 0.0
        %3763 = vmatpush1.msra.mxu0 0.0
        %3764 = vmatprep.subr.mxu0 0.0
        %3765 = vmatpush1.msra.mxu0 0.0
        %3766 = vmatprep.subr.mxu0 0.0
        %3767 = vmatpush1.msra.mxu0 0.0
        %3768 = vmatprep.subr.mxu0 0.0
        %3769 = vmatpush1.msra.mxu0 0.0
        %3770 = vmatprep.subr.mxu0 0.0
        %3771 = vmatpush1.msra.mxu0 0.0
        %3772 = vmatprep.subr.mxu0 0.0
        %3773 = vmatpush1.msra.mxu0 0.0
        %3774 = vmatprep.subr.mxu0 0.0
        %3775 = vmatpush1.msra.mxu0 0.0
        %3776 = vmatprep.subr.mxu0 0.0
        %3777 = vmatpush1.msra.mxu0 0.0
        %3778 = vmatprep.subr.mxu0 0.0
        %3779 = vmatpush1.msra.mxu0 0.0
        %3780 = vmatprep.subr.mxu0 0.0
        %3781 = vmatpush1.msra.mxu0 0.0
        %3782 = vmatprep.subr.mxu0 0.0
        %3783 = vmatpush1.msra.mxu0 0.0
        %3784 = vmatprep.subr.mxu0 0.0
        %3785 = vmatpush1.msra.mxu0 0.0
        %3786 = vmatprep.subr.mxu0 0.0
        %3787 = vmatpush1.msra.mxu0 0.0
        %3788 = vmatprep.subr.mxu0 0.0
        %3789 = vmatpush1.msra.mxu0 0.0
        %3790 = vmatprep.subr.mxu0 0.0
        %3791 = vmatpush1.msra.mxu0 0.0
        %3792 = vmatprep.subr.mxu0 0.0
        %3793 = vmatpush1.msra.mxu0 0.0
        %3794 = vmatprep.subr.mxu0 0.0
        %3795 = vmatpush1.msra.mxu0 0.0
        %3796 = vmatprep.mubr.f32.mxu0 0.0
        %3797 = vmatmul.mubr.f32.gmra.mrb[0].mxu0 %v3730
        %v3798 = vpop.f32.mrb[0].mxu0
        %v3799 = vadd.f32 0.0, %v3798
        %v3800 = vpop.f32.mrb[0].mxu0
        %3801 = vdwg.mxu0
        %3802 = vrot.lane.b32.xlu0 %v1269, 120
        %v3803 = vpop.permute.xlu0 %3802
        %v3806 = vsel %vm2941, %v3105, 0
        %3808 = vmatprep.subr.mxu0 0.0
        %3809 = vmatpush1.msra.mxu0 %v3803
        %3810 = vmatprep.subr.mxu0 0.0
        %3811 = vmatpush1.msra.mxu0 0.0
        %3812 = vmatprep.subr.mxu0 0.0
        %3813 = vmatpush1.msra.mxu0 0.0
        %3814 = vmatprep.subr.mxu0 0.0
        %3815 = vmatpush1.msra.mxu0 0.0
        %3816 = vmatprep.subr.mxu0 0.0
        %3817 = vmatpush1.msra.mxu0 0.0
        %3818 = vmatprep.subr.mxu0 0.0
        %3819 = vmatpush1.msra.mxu0 0.0
        %3820 = vmatprep.subr.mxu0 0.0
        %3821 = vmatpush1.msra.mxu0 0.0
        %3822 = vmatprep.subr.mxu0 0.0
        %3823 = vmatpush1.msra.mxu0 0.0
        %3824 = vmatprep.subr.mxu0 0.0
        %3825 = vmatpush1.msra.mxu0 0.0
        %3826 = vmatprep.subr.mxu0 0.0
        %3827 = vmatpush1.msra.mxu0 0.0
        %3828 = vmatprep.subr.mxu0 0.0
        %3829 = vmatpush1.msra.mxu0 0.0
        %3830 = vmatprep.subr.mxu0 0.0
        %3831 = vmatpush1.msra.mxu0 0.0
        %3832 = vmatprep.subr.mxu0 0.0
        %3833 = vmatpush1.msra.mxu0 0.0
        %3834 = vmatprep.subr.mxu0 0.0
        %3835 = vmatpush1.msra.mxu0 0.0
        %3836 = vmatprep.subr.mxu0 0.0
        %3837 = vmatpush1.msra.mxu0 0.0
        %3838 = vmatprep.subr.mxu0 0.0
        %3839 = vmatpush1.msra.mxu0 0.0
        %3840 = vmatprep.subr.mxu0 0.0
        %3841 = vmatpush1.msra.mxu0 0.0
        %3842 = vmatprep.subr.mxu0 0.0
        %3843 = vmatpush1.msra.mxu0 0.0
        %3844 = vmatprep.subr.mxu0 0.0
        %3845 = vmatpush1.msra.mxu0 0.0
        %3846 = vmatprep.subr.mxu0 0.0
        %3847 = vmatpush1.msra.mxu0 0.0
        %3848 = vmatprep.subr.mxu0 0.0
        %3849 = vmatpush1.msra.mxu0 0.0
        %3850 = vmatprep.subr.mxu0 0.0
        %3851 = vmatpush1.msra.mxu0 0.0
        %3852 = vmatprep.subr.mxu0 0.0
        %3853 = vmatpush1.msra.mxu0 0.0
        %3854 = vmatprep.subr.mxu0 0.0
        %3855 = vmatpush1.msra.mxu0 0.0
        %3856 = vmatprep.subr.mxu0 0.0
        %3857 = vmatpush1.msra.mxu0 0.0
        %3858 = vmatprep.subr.mxu0 0.0
        %3859 = vmatpush1.msra.mxu0 0.0
        %3860 = vmatprep.subr.mxu0 0.0
        %3861 = vmatpush1.msra.mxu0 0.0
        %3862 = vmatprep.subr.mxu0 0.0
        %3863 = vmatpush1.msra.mxu0 0.0
        %3864 = vmatprep.subr.mxu0 0.0
        %3865 = vmatpush1.msra.mxu0 0.0
        %3866 = vmatprep.subr.mxu0 0.0
        %3867 = vmatpush1.msra.mxu0 0.0
        %3868 = vmatprep.subr.mxu0 0.0
        %3869 = vmatpush1.msra.mxu0 0.0
        %3870 = vmatprep.subr.mxu0 0.0
        %3871 = vmatpush1.msra.mxu0 0.0
        %3872 = vmatprep.mubr.f32.mxu0 0.0
        %3873 = vmatmul.mubr.f32.gmra.mrb[0].mxu0 %v3806
        %v3874 = vpop.f32.mrb[0].mxu0
        %v3875 = vadd.f32 0.0, %v3874
        %v3876 = vpop.f32.mrb[0].mxu0
        %3877 = vdwg.mxu0
        %3878 = vrot.lane.b32.xlu0 %v1339, 120
        %v3879 = vpop.permute.xlu0 %3878
        %v3882 = vsel %vm2941, %v3107, 0
        %3884 = vmatprep.subr.mxu0 0.0
        %3885 = vmatpush1.msra.mxu0 %v3879
        %3886 = vmatprep.subr.mxu0 0.0
        %3887 = vmatpush1.msra.mxu0 0.0
        %3888 = vmatprep.subr.mxu0 0.0
        %3889 = vmatpush1.msra.mxu0 0.0
        %3890 = vmatprep.subr.mxu0 0.0
        %3891 = vmatpush1.msra.mxu0 0.0
        %3892 = vmatprep.subr.mxu0 0.0
        %3893 = vmatpush1.msra.mxu0 0.0
        %3894 = vmatprep.subr.mxu0 0.0
        %3895 = vmatpush1.msra.mxu0 0.0
        %3896 = vmatprep.subr.mxu0 0.0
        %3897 = vmatpush1.msra.mxu0 0.0
        %3898 = vmatprep.subr.mxu0 0.0
        %3899 = vmatpush1.msra.mxu0 0.0
        %3900 = vmatprep.subr.mxu0 0.0
        %3901 = vmatpush1.msra.mxu0 0.0
        %3902 = vmatprep.subr.mxu0 0.0
        %3903 = vmatpush1.msra.mxu0 0.0
        %3904 = vmatprep.subr.mxu0 0.0
        %3905 = vmatpush1.msra.mxu0 0.0
        %3906 = vmatprep.subr.mxu0 0.0
        %3907 = vmatpush1.msra.mxu0 0.0
        %3908 = vmatprep.subr.mxu0 0.0
        %3909 = vmatpush1.msra.mxu0 0.0
        %3910 = vmatprep.subr.mxu0 0.0
        %3911 = vmatpush1.msra.mxu0 0.0
        %3912 = vmatprep.subr.mxu0 0.0
        %3913 = vmatpush1.msra.mxu0 0.0
        %3914 = vmatprep.subr.mxu0 0.0
        %3915 = vmatpush1.msra.mxu0 0.0
        %3916 = vmatprep.subr.mxu0 0.0
        %3917 = vmatpush1.msra.mxu0 0.0
        %3918 = vmatprep.subr.mxu0 0.0
        %3919 = vmatpush1.msra.mxu0 0.0
        %3920 = vmatprep.subr.mxu0 0.0
        %3921 = vmatpush1.msra.mxu0 0.0
        %3922 = vmatprep.subr.mxu0 0.0
        %3923 = vmatpush1.msra.mxu0 0.0
        %3924 = vmatprep.subr.mxu0 0.0
        %3925 = vmatpush1.msra.mxu0 0.0
        %3926 = vmatprep.subr.mxu0 0.0
        %3927 = vmatpush1.msra.mxu0 0.0
        %3928 = vmatprep.subr.mxu0 0.0
        %3929 = vmatpush1.msra.mxu0 0.0
        %3930 = vmatprep.subr.mxu0 0.0
        %3931 = vmatpush1.msra.mxu0 0.0
        %3932 = vmatprep.subr.mxu0 0.0
        %3933 = vmatpush1.msra.mxu0 0.0
        %3934 = vmatprep.subr.mxu0 0.0
        %3935 = vmatpush1.msra.mxu0 0.0
        %3936 = vmatprep.subr.mxu0 0.0
        %3937 = vmatpush1.msra.mxu0 0.0
        %3938 = vmatprep.subr.mxu0 0.0
        %3939 = vmatpush1.msra.mxu0 0.0
        %3940 = vmatprep.subr.mxu0 0.0
        %3941 = vmatpush1.msra.mxu0 0.0
        %3942 = vmatprep.subr.mxu0 0.0
        %3943 = vmatpush1.msra.mxu0 0.0
        %3944 = vmatprep.subr.mxu0 0.0
        %3945 = vmatpush1.msra.mxu0 0.0
        %3946 = vmatprep.subr.mxu0 0.0
        %3947 = vmatpush1.msra.mxu0 0.0
        %3948 = vmatprep.mubr.f32.mxu0 0.0
        %3949 = vmatmul.mubr.f32.gmra.mrb[0].mxu0 %v3882
        %v3950 = vpop.f32.mrb[0].mxu0
        %v3951 = vadd.f32 0.0, %v3950
        %v3952 = vpop.f32.mrb[0].mxu0
        %3953 = vdwg.mxu0
        %3954 = vrot.lane.b32.xlu0 %v1409, 120
        %v3955 = vpop.permute.xlu0 %3954
        %v3958 = vsel %vm2941, %v3109, 0
        %3960 = vmatprep.subr.mxu0 0.0
        %3961 = vmatpush1.msra.mxu0 %v3955
        %3962 = vmatprep.subr.mxu0 0.0
        %3963 = vmatpush1.msra.mxu0 0.0
        %3964 = vmatprep.subr.mxu0 0.0
        %3965 = vmatpush1.msra.mxu0 0.0
        %3966 = vmatprep.subr.mxu0 0.0
        %3967 = vmatpush1.msra.mxu0 0.0
        %3968 = vmatprep.subr.mxu0 0.0
        %3969 = vmatpush1.msra.mxu0 0.0
        %3970 = vmatprep.subr.mxu0 0.0
        %3971 = vmatpush1.msra.mxu0 0.0
        %3972 = vmatprep.subr.mxu0 0.0
        %3973 = vmatpush1.msra.mxu0 0.0
        %3974 = vmatprep.subr.mxu0 0.0
        %3975 = vmatpush1.msra.mxu0 0.0
        %3976 = vmatprep.subr.mxu0 0.0
        %3977 = vmatpush1.msra.mxu0 0.0
        %3978 = vmatprep.subr.mxu0 0.0
        %3979 = vmatpush1.msra.mxu0 0.0
        %3980 = vmatprep.subr.mxu0 0.0
        %3981 = vmatpush1.msra.mxu0 0.0
        %3982 = vmatprep.subr.mxu0 0.0
        %3983 = vmatpush1.msra.mxu0 0.0
        %3984 = vmatprep.subr.mxu0 0.0
        %3985 = vmatpush1.msra.mxu0 0.0
        %3986 = vmatprep.subr.mxu0 0.0
        %3987 = vmatpush1.msra.mxu0 0.0
        %3988 = vmatprep.subr.mxu0 0.0
        %3989 = vmatpush1.msra.mxu0 0.0
        %3990 = vmatprep.subr.mxu0 0.0
        %3991 = vmatpush1.msra.mxu0 0.0
        %3992 = vmatprep.subr.mxu0 0.0
        %3993 = vmatpush1.msra.mxu0 0.0
        %3994 = vmatprep.subr.mxu0 0.0
        %3995 = vmatpush1.msra.mxu0 0.0
        %3996 = vmatprep.subr.mxu0 0.0
        %3997 = vmatpush1.msra.mxu0 0.0
        %3998 = vmatprep.subr.mxu0 0.0
        %3999 = vmatpush1.msra.mxu0 0.0
        %4000 = vmatprep.subr.mxu0 0.0
        %4001 = vmatpush1.msra.mxu0 0.0
        %4002 = vmatprep.subr.mxu0 0.0
        %4003 = vmatpush1.msra.mxu0 0.0
        %4004 = vmatprep.subr.mxu0 0.0
        %4005 = vmatpush1.msra.mxu0 0.0
        %4006 = vmatprep.subr.mxu0 0.0
        %4007 = vmatpush1.msra.mxu0 0.0
        %4008 = vmatprep.subr.mxu0 0.0
        %4009 = vmatpush1.msra.mxu0 0.0
        %4010 = vmatprep.subr.mxu0 0.0
        %4011 = vmatpush1.msra.mxu0 0.0
        %4012 = vmatprep.subr.mxu0 0.0
        %4013 = vmatpush1.msra.mxu0 0.0
        %4014 = vmatprep.subr.mxu0 0.0
        %4015 = vmatpush1.msra.mxu0 0.0
        %4016 = vmatprep.subr.mxu0 0.0
        %4017 = vmatpush1.msra.mxu0 0.0
        %4018 = vmatprep.subr.mxu0 0.0
        %4019 = vmatpush1.msra.mxu0 0.0
        %4020 = vmatprep.subr.mxu0 0.0
        %4021 = vmatpush1.msra.mxu0 0.0
        %4022 = vmatprep.subr.mxu0 0.0
        %4023 = vmatpush1.msra.mxu0 0.0
        %4024 = vmatprep.mubr.f32.mxu0 0.0
        %4025 = vmatmul.mubr.f32.gmra.mrb[0].mxu0 %v3958
        %v4026 = vpop.f32.mrb[0].mxu0
        %v4027 = vadd.f32 0.0, %v4026
        %v4028 = vpop.f32.mrb[0].mxu0
        %4029 = vdwg.mxu0
        %4030 = vrot.lane.b32.xlu0 %v1479, 120
        %v4031 = vpop.permute.xlu0 %4030
        %v4034 = vsel %vm2941, %v3111, 0
        %4036 = vmatprep.subr.mxu0 0.0
        %4037 = vmatpush1.msra.mxu0 %v4031
        %4038 = vmatprep.subr.mxu0 0.0
        %4039 = vmatpush1.msra.mxu0 0.0
        %4040 = vmatprep.subr.mxu0 0.0
        %4041 = vmatpush1.msra.mxu0 0.0
        %4042 = vmatprep.subr.mxu0 0.0
        %4043 = vmatpush1.msra.mxu0 0.0
        %4044 = vmatprep.subr.mxu0 0.0
        %4045 = vmatpush1.msra.mxu0 0.0
        %4046 = vmatprep.subr.mxu0 0.0
        %4047 = vmatpush1.msra.mxu0 0.0
        %4048 = vmatprep.subr.mxu0 0.0
        %4049 = vmatpush1.msra.mxu0 0.0
        %4050 = vmatprep.subr.mxu0 0.0
        %4051 = vmatpush1.msra.mxu0 0.0
        %4052 = vmatprep.subr.mxu0 0.0
        %4053 = vmatpush1.msra.mxu0 0.0
        %4054 = vmatprep.subr.mxu0 0.0
        %4055 = vmatpush1.msra.mxu0 0.0
        %4056 = vmatprep.subr.mxu0 0.0
        %4057 = vmatpush1.msra.mxu0 0.0
        %4058 = vmatprep.subr.mxu0 0.0
        %4059 = vmatpush1.msra.mxu0 0.0
        %4060 = vmatprep.subr.mxu0 0.0
        %4061 = vmatpush1.msra.mxu0 0.0
        %4062 = vmatprep.subr.mxu0 0.0
        %4063 = vmatpush1.msra.mxu0 0.0
        %4064 = vmatprep.subr.mxu0 0.0
        %4065 = vmatpush1.msra.mxu0 0.0
        %4066 = vmatprep.subr.mxu0 0.0
        %4067 = vmatpush1.msra.mxu0 0.0
        %4068 = vmatprep.subr.mxu0 0.0
        %4069 = vmatpush1.msra.mxu0 0.0
        %4070 = vmatprep.subr.mxu0 0.0
        %4071 = vmatpush1.msra.mxu0 0.0
        %4072 = vmatprep.subr.mxu0 0.0
        %4073 = vmatpush1.msra.mxu0 0.0
        %4074 = vmatprep.subr.mxu0 0.0
        %4075 = vmatpush1.msra.mxu0 0.0
        %4076 = vmatprep.subr.mxu0 0.0
        %4077 = vmatpush1.msra.mxu0 0.0
        %4078 = vmatprep.subr.mxu0 0.0
        %4079 = vmatpush1.msra.mxu0 0.0
        %4080 = vmatprep.subr.mxu0 0.0
        %4081 = vmatpush1.msra.mxu0 0.0
        %4082 = vmatprep.subr.mxu0 0.0
        %4083 = vmatpush1.msra.mxu0 0.0
        %4084 = vmatprep.subr.mxu0 0.0
        %4085 = vmatpush1.msra.mxu0 0.0
        %4086 = vmatprep.subr.mxu0 0.0
        %4087 = vmatpush1.msra.mxu0 0.0
        %4088 = vmatprep.subr.mxu0 0.0
        %4089 = vmatpush1.msra.mxu0 0.0
        %4090 = vmatprep.subr.mxu0 0.0
        %4091 = vmatpush1.msra.mxu0 0.0
        %4092 = vmatprep.subr.mxu0 0.0
        %4093 = vmatpush1.msra.mxu0 0.0
        %4094 = vmatprep.subr.mxu0 0.0
        %4095 = vmatpush1.msra.mxu0 0.0
        %4096 = vmatprep.subr.mxu0 0.0
        %4097 = vmatpush1.msra.mxu0 0.0
        %4098 = vmatprep.subr.mxu0 0.0
        %4099 = vmatpush1.msra.mxu0 0.0
        %4100 = vmatprep.mubr.f32.mxu0 0.0
        %4101 = vmatmul.mubr.f32.gmra.mrb[0].mxu0 %v4034
        %v4102 = vpop.f32.mrb[0].mxu0
        %v4103 = vadd.f32 0.0, %v4102
        %v4104 = vpop.f32.mrb[0].mxu0
        %4105 = vdwg.mxu0
        %4106 = vrot.lane.b32.xlu0 %v1549, 120
        %v4107 = vpop.permute.xlu0 %4106
        %v4110 = vsel %vm2941, %v3113, 0
        %4112 = vmatprep.subr.mxu0 0.0
        %4113 = vmatpush1.msra.mxu0 %v4107
        %4114 = vmatprep.subr.mxu0 0.0
        %4115 = vmatpush1.msra.mxu0 0.0
        %4116 = vmatprep.subr.mxu0 0.0
        %4117 = vmatpush1.msra.mxu0 0.0
        %4118 = vmatprep.subr.mxu0 0.0
        %4119 = vmatpush1.msra.mxu0 0.0
        %4120 = vmatprep.subr.mxu0 0.0
        %4121 = vmatpush1.msra.mxu0 0.0
        %4122 = vmatprep.subr.mxu0 0.0
        %4123 = vmatpush1.msra.mxu0 0.0
        %4124 = vmatprep.subr.mxu0 0.0
        %4125 = vmatpush1.msra.mxu0 0.0
        %4126 = vmatprep.subr.mxu0 0.0
        %4127 = vmatpush1.msra.mxu0 0.0
        %4128 = vmatprep.subr.mxu0 0.0
        %4129 = vmatpush1.msra.mxu0 0.0
        %4130 = vmatprep.subr.mxu0 0.0
        %4131 = vmatpush1.msra.mxu0 0.0
        %4132 = vmatprep.subr.mxu0 0.0
        %4133 = vmatpush1.msra.mxu0 0.0
        %4134 = vmatprep.subr.mxu0 0.0
        %4135 = vmatpush1.msra.mxu0 0.0
        %4136 = vmatprep.subr.mxu0 0.0
        %4137 = vmatpush1.msra.mxu0 0.0
        %4138 = vmatprep.subr.mxu0 0.0
        %4139 = vmatpush1.msra.mxu0 0.0
        %4140 = vmatprep.subr.mxu0 0.0
        %4141 = vmatpush1.msra.mxu0 0.0
        %4142 = vmatprep.subr.mxu0 0.0
        %4143 = vmatpush1.msra.mxu0 0.0
        %4144 = vmatprep.subr.mxu0 0.0
        %4145 = vmatpush1.msra.mxu0 0.0
        %4146 = vmatprep.subr.mxu0 0.0
        %4147 = vmatpush1.msra.mxu0 0.0
        %4148 = vmatprep.subr.mxu0 0.0
        %4149 = vmatpush1.msra.mxu0 0.0
        %4150 = vmatprep.subr.mxu0 0.0
        %4151 = vmatpush1.msra.mxu0 0.0
        %4152 = vmatprep.subr.mxu0 0.0
        %4153 = vmatpush1.msra.mxu0 0.0
        %4154 = vmatprep.subr.mxu0 0.0
        %4155 = vmatpush1.msra.mxu0 0.0
        %4156 = vmatprep.subr.mxu0 0.0
        %4157 = vmatpush1.msra.mxu0 0.0
        %4158 = vmatprep.subr.mxu0 0.0
        %4159 = vmatpush1.msra.mxu0 0.0
        %4160 = vmatprep.subr.mxu0 0.0
        %4161 = vmatpush1.msra.mxu0 0.0
        %4162 = vmatprep.subr.mxu0 0.0
        %4163 = vmatpush1.msra.mxu0 0.0
        %4164 = vmatprep.subr.mxu0 0.0
        %4165 = vmatpush1.msra.mxu0 0.0
        %4166 = vmatprep.subr.mxu0 0.0
        %4167 = vmatpush1.msra.mxu0 0.0
        %4168 = vmatprep.subr.mxu0 0.0
        %4169 = vmatpush1.msra.mxu0 0.0
        %4170 = vmatprep.subr.mxu0 0.0
        %4171 = vmatpush1.msra.mxu0 0.0
        %4172 = vmatprep.subr.mxu0 0.0
        %4173 = vmatpush1.msra.mxu0 0.0
        %4174 = vmatprep.subr.mxu0 0.0
        %4175 = vmatpush1.msra.mxu0 0.0
        %4176 = vmatprep.mubr.f32.mxu0 0.0
        %4177 = vmatmul.mubr.f32.gmra.mrb[0].mxu0 %v4110
        %v4178 = vpop.f32.mrb[0].mxu0
        %v4179 = vadd.f32 0.0, %v4178
        %v4180 = vpop.f32.mrb[0].mxu0
        %4181 = vdwg.mxu0
        %4182 = vrot.lane.b32.xlu0 %v1619, 120
        %v4183 = vpop.permute.xlu0 %4182
        %v4186 = vsel %vm2941, %v3115, 0
        %4188 = vmatprep.subr.mxu0 0.0
        %4189 = vmatpush1.msra.mxu0 %v4183
        %4190 = vmatprep.subr.mxu0 0.0
        %4191 = vmatpush1.msra.mxu0 0.0
        %4192 = vmatprep.subr.mxu0 0.0
        %4193 = vmatpush1.msra.mxu0 0.0
        %4194 = vmatprep.subr.mxu0 0.0
        %4195 = vmatpush1.msra.mxu0 0.0
        %4196 = vmatprep.subr.mxu0 0.0
        %4197 = vmatpush1.msra.mxu0 0.0
        %4198 = vmatprep.subr.mxu0 0.0
        %4199 = vmatpush1.msra.mxu0 0.0
        %4200 = vmatprep.subr.mxu0 0.0
        %4201 = vmatpush1.msra.mxu0 0.0
        %4202 = vmatprep.subr.mxu0 0.0
        %4203 = vmatpush1.msra.mxu0 0.0
        %4204 = vmatprep.subr.mxu0 0.0
        %4205 = vmatpush1.msra.mxu0 0.0
        %4206 = vmatprep.subr.mxu0 0.0
        %4207 = vmatpush1.msra.mxu0 0.0
        %4208 = vmatprep.subr.mxu0 0.0
        %4209 = vmatpush1.msra.mxu0 0.0
        %4210 = vmatprep.subr.mxu0 0.0
        %4211 = vmatpush1.msra.mxu0 0.0
        %4212 = vmatprep.subr.mxu0 0.0
        %4213 = vmatpush1.msra.mxu0 0.0
        %4214 = vmatprep.subr.mxu0 0.0
        %4215 = vmatpush1.msra.mxu0 0.0
        %4216 = vmatprep.subr.mxu0 0.0
        %4217 = vmatpush1.msra.mxu0 0.0
        %4218 = vmatprep.subr.mxu0 0.0
        %4219 = vmatpush1.msra.mxu0 0.0
        %4220 = vmatprep.subr.mxu0 0.0
        %4221 = vmatpush1.msra.mxu0 0.0
        %4222 = vmatprep.subr.mxu0 0.0
        %4223 = vmatpush1.msra.mxu0 0.0
        %4224 = vmatprep.subr.mxu0 0.0
        %4225 = vmatpush1.msra.mxu0 0.0
        %4226 = vmatprep.subr.mxu0 0.0
        %4227 = vmatpush1.msra.mxu0 0.0
        %4228 = vmatprep.subr.mxu0 0.0
        %4229 = vmatpush1.msra.mxu0 0.0
        %4230 = vmatprep.subr.mxu0 0.0
        %4231 = vmatpush1.msra.mxu0 0.0
        %4232 = vmatprep.subr.mxu0 0.0
        %4233 = vmatpush1.msra.mxu0 0.0
        %4234 = vmatprep.subr.mxu0 0.0
        %4235 = vmatpush1.msra.mxu0 0.0
        %4236 = vmatprep.subr.mxu0 0.0
        %4237 = vmatpush1.msra.mxu0 0.0
        %4238 = vmatprep.subr.mxu0 0.0
        %4239 = vmatpush1.msra.mxu0 0.0
        %4240 = vmatprep.subr.mxu0 0.0
        %4241 = vmatpush1.msra.mxu0 0.0
        %4242 = vmatprep.subr.mxu0 0.0
        %4243 = vmatpush1.msra.mxu0 0.0
        %4244 = vmatprep.subr.mxu0 0.0
        %4245 = vmatpush1.msra.mxu0 0.0
        %4246 = vmatprep.subr.mxu0 0.0
        %4247 = vmatpush1.msra.mxu0 0.0
        %4248 = vmatprep.subr.mxu0 0.0
        %4249 = vmatpush1.msra.mxu0 0.0
        %4250 = vmatprep.subr.mxu0 0.0
        %4251 = vmatpush1.msra.mxu0 0.0
        %4252 = vmatprep.mubr.f32.mxu0 0.0
        %4253 = vmatmul.mubr.f32.gmra.mrb[0].mxu0 %v4186
        %v4254 = vpop.f32.mrb[0].mxu0
        %v4255 = vadd.f32 0.0, %v4254
        %v4256 = vpop.f32.mrb[0].mxu0
        %4257 = vdwg.mxu0
        %4258 = vrot.lane.b32.xlu0 %v1689, 120
        %v4259 = vpop.permute.xlu0 %4258
        %v4262 = vsel %vm2941, %v3117, 0
        %4264 = vmatprep.subr.mxu0 0.0
        %4265 = vmatpush1.msra.mxu0 %v4259
        %4266 = vmatprep.subr.mxu0 0.0
        %4267 = vmatpush1.msra.mxu0 0.0
        %4268 = vmatprep.subr.mxu0 0.0
        %4269 = vmatpush1.msra.mxu0 0.0
        %4270 = vmatprep.subr.mxu0 0.0
        %4271 = vmatpush1.msra.mxu0 0.0
        %4272 = vmatprep.subr.mxu0 0.0
        %4273 = vmatpush1.msra.mxu0 0.0
        %4274 = vmatprep.subr.mxu0 0.0
        %4275 = vmatpush1.msra.mxu0 0.0
        %4276 = vmatprep.subr.mxu0 0.0
        %4277 = vmatpush1.msra.mxu0 0.0
        %4278 = vmatprep.subr.mxu0 0.0
        %4279 = vmatpush1.msra.mxu0 0.0
        %4280 = vmatprep.subr.mxu0 0.0
        %4281 = vmatpush1.msra.mxu0 0.0
        %4282 = vmatprep.subr.mxu0 0.0
        %4283 = vmatpush1.msra.mxu0 0.0
        %4284 = vmatprep.subr.mxu0 0.0
        %4285 = vmatpush1.msra.mxu0 0.0
        %4286 = vmatprep.subr.mxu0 0.0
        %4287 = vmatpush1.msra.mxu0 0.0
        %4288 = vmatprep.subr.mxu0 0.0
        %4289 = vmatpush1.msra.mxu0 0.0
        %4290 = vmatprep.subr.mxu0 0.0
        %4291 = vmatpush1.msra.mxu0 0.0
        %4292 = vmatprep.subr.mxu0 0.0
        %4293 = vmatpush1.msra.mxu0 0.0
        %4294 = vmatprep.subr.mxu0 0.0
        %4295 = vmatpush1.msra.mxu0 0.0
        %4296 = vmatprep.subr.mxu0 0.0
        %4297 = vmatpush1.msra.mxu0 0.0
        %4298 = vmatprep.subr.mxu0 0.0
        %4299 = vmatpush1.msra.mxu0 0.0
        %4300 = vmatprep.subr.mxu0 0.0
        %4301 = vmatpush1.msra.mxu0 0.0
        %4302 = vmatprep.subr.mxu0 0.0
        %4303 = vmatpush1.msra.mxu0 0.0
        %4304 = vmatprep.subr.mxu0 0.0
        %4305 = vmatpush1.msra.mxu0 0.0
        %4306 = vmatprep.subr.mxu0 0.0
        %4307 = vmatpush1.msra.mxu0 0.0
        %4308 = vmatprep.subr.mxu0 0.0
        %4309 = vmatpush1.msra.mxu0 0.0
        %4310 = vmatprep.subr.mxu0 0.0
        %4311 = vmatpush1.msra.mxu0 0.0
        %4312 = vmatprep.subr.mxu0 0.0
        %4313 = vmatpush1.msra.mxu0 0.0
        %4314 = vmatprep.subr.mxu0 0.0
        %4315 = vmatpush1.msra.mxu0 0.0
        %4316 = vmatprep.subr.mxu0 0.0
        %4317 = vmatpush1.msra.mxu0 0.0
        %4318 = vmatprep.subr.mxu0 0.0
        %4319 = vmatpush1.msra.mxu0 0.0
        %4320 = vmatprep.subr.mxu0 0.0
        %4321 = vmatpush1.msra.mxu0 0.0
        %4322 = vmatprep.subr.mxu0 0.0
        %4323 = vmatpush1.msra.mxu0 0.0
        %4324 = vmatprep.subr.mxu0 0.0
        %4325 = vmatpush1.msra.mxu0 0.0
        %4326 = vmatprep.subr.mxu0 0.0
        %4327 = vmatpush1.msra.mxu0 0.0
        %4328 = vmatprep.mubr.f32.mxu0 0.0
        %4329 = vmatmul.mubr.f32.gmra.mrb[0].mxu0 %v4262
        %v4330 = vpop.f32.mrb[0].mxu0
        %v4331 = vadd.f32 0.0, %v4330
        %v4332 = vpop.f32.mrb[0].mxu0
        %4333 = vdwg.mxu0
        %v4334 = vld [vmem:[%s2] sm:$0xf]
        %v4335 = vld [vmem:[%s2 + $0x4] sm:$0xf]
        %v4336 = vld [vmem:[%s2 + $0x8] sm:$0xf]
        %v4337 = vld [vmem:[%s2 + $0xc] sm:$0xf]
        %v4338 = vld [vmem:[%s2 + $0x10] sm:$0xf]
        %v4339 = vld [vmem:[%s2 + $0x14] sm:$0xf]
        %v4340 = vld [vmem:[%s2 + $0x18] sm:$0xf]
        %v4341 = vld [vmem:[%s2 + $0x1c] sm:$0xf]
        %v4342 = vld [vmem:[%s2 + $0x20] sm:$0xf]
        %v4343 = vld [vmem:[%s2 + $0x24] sm:$0xf]
        %v4344 = vld [vmem:[%s2 + $0x28] sm:$0xf]
        %v4345 = vld [vmem:[%s2 + $0x2c] sm:$0xf]
        %v4346 = vld [vmem:[%s2 + $0x30] sm:$0xf]
        %v4347 = vld [vmem:[%s2 + $0x34] sm:$0xf]
        %v4348 = vld [vmem:[%s2 + $0x38] sm:$0xf]
        %v4349 = vld [vmem:[%s2 + $0x3c] sm:$0xf]
        %v4351 = vsel %vm1695, %v3191, 0
        %vm4353 = vcmask 1043456
        %v4355 = vsel %vm4353, %v4334, 0
        %4357 = vmatprep.subr.mxu0 0.0
        %4358 = vmatpush1.msra.mxu0 %v4355
        %4359 = vmatprep.subr.mxu0 0.0
        %4360 = vmatpush1.msra.mxu0 0.0
        %4361 = vmatprep.subr.mxu0 0.0
        %4362 = vmatpush1.msra.mxu0 0.0
        %4363 = vmatprep.subr.mxu0 0.0
        %4364 = vmatpush1.msra.mxu0 0.0
        %4365 = vmatprep.subr.mxu0 0.0
        %4366 = vmatpush1.msra.mxu0 0.0
        %4367 = vmatprep.subr.mxu0 0.0
        %4368 = vmatpush1.msra.mxu0 0.0
        %4369 = vmatprep.subr.mxu0 0.0
        %4370 = vmatpush1.msra.mxu0 0.0
        %4371 = vmatprep.subr.mxu0 0.0
        %4372 = vmatpush1.msra.mxu0 0.0
        %4373 = vmatprep.subr.mxu0 0.0
        %4374 = vmatpush1.msra.mxu0 0.0
        %4375 = vmatprep.subr.mxu0 0.0
        %4376 = vmatpush1.msra.mxu0 0.0
        %4377 = vmatprep.subr.mxu0 0.0
        %4378 = vmatpush1.msra.mxu0 0.0
        %4379 = vmatprep.subr.mxu0 0.0
        %4380 = vmatpush1.msra.mxu0 0.0
        %4381 = vmatprep.subr.mxu0 0.0
        %4382 = vmatpush1.msra.mxu0 0.0
        %4383 = vmatprep.subr.mxu0 0.0
        %4384 = vmatpush1.msra.mxu0 0.0
        %4385 = vmatprep.subr.mxu0 0.0
        %4386 = vmatpush1.msra.mxu0 0.0
        %4387 = vmatprep.subr.mxu0 0.0
        %4388 = vmatpush1.msra.mxu0 0.0
        %4389 = vmatprep.subr.mxu0 0.0
        %4390 = vmatpush1.msra.mxu0 0.0
        %4391 = vmatprep.subr.mxu0 0.0
        %4392 = vmatpush1.msra.mxu0 0.0
        %4393 = vmatprep.subr.mxu0 0.0
        %4394 = vmatpush1.msra.mxu0 0.0
        %4395 = vmatprep.subr.mxu0 0.0
        %4396 = vmatpush1.msra.mxu0 0.0
        %4397 = vmatprep.subr.mxu0 0.0
        %4398 = vmatpush1.msra.mxu0 0.0
        %4399 = vmatprep.subr.mxu0 0.0
        %4400 = vmatpush1.msra.mxu0 0.0
        %4401 = vmatprep.subr.mxu0 0.0
        %4402 = vmatpush1.msra.mxu0 0.0
        %4403 = vmatprep.subr.mxu0 0.0
        %4404 = vmatpush1.msra.mxu0 0.0
        %4405 = vmatprep.subr.mxu0 0.0
        %4406 = vmatpush1.msra.mxu0 0.0
        %4407 = vmatprep.subr.mxu0 0.0
        %4408 = vmatpush1.msra.mxu0 0.0
        %4409 = vmatprep.subr.mxu0 0.0
        %4410 = vmatpush1.msra.mxu0 0.0
        %4411 = vmatprep.subr.mxu0 0.0
        %4412 = vmatpush1.msra.mxu0 0.0
        %4413 = vmatprep.subr.mxu0 0.0
        %4414 = vmatpush1.msra.mxu0 0.0
        %4415 = vmatprep.subr.mxu0 0.0
        %4416 = vmatpush1.msra.mxu0 0.0
        %4417 = vmatprep.subr.mxu0 0.0
        %4418 = vmatpush1.msra.mxu0 0.0
        %4419 = vmatprep.subr.mxu0 0.0
        %4420 = vmatpush1.msra.mxu0 0.0
        %4421 = vmatprep.mubr.f32.mxu0 0.0
        %4422 = vmatmul.mubr.f32.gmra.mrb[0].mxu0 %v4351
        %v4423 = vpop.f32.mrb[0].mxu0
        %v4424 = vadd.f32 0.0, %v4423
        %v4425 = vpop.f32.mrb[0].mxu0
        %4426 = vdwg.mxu0
        %v4428 = vsel %vm1695, %v3267, 0
        %v4431 = vsel %vm4353, %v4335, 0
        %4433 = vmatprep.subr.mxu0 0.0
        %4434 = vmatpush1.msra.mxu0 %v4431
        %4435 = vmatprep.subr.mxu0 0.0
        %4436 = vmatpush1.msra.mxu0 0.0
        %4437 = vmatprep.subr.mxu0 0.0
        %4438 = vmatpush1.msra.mxu0 0.0
        %4439 = vmatprep.subr.mxu0 0.0
        %4440 = vmatpush1.msra.mxu0 0.0
        %4441 = vmatprep.subr.mxu0 0.0
        %4442 = vmatpush1.msra.mxu0 0.0
        %4443 = vmatprep.subr.mxu0 0.0
        %4444 = vmatpush1.msra.mxu0 0.0
        %4445 = vmatprep.subr.mxu0 0.0
        %4446 = vmatpush1.msra.mxu0 0.0
        %4447 = vmatprep.subr.mxu0 0.0
        %4448 = vmatpush1.msra.mxu0 0.0
        %4449 = vmatprep.subr.mxu0 0.0
        %4450 = vmatpush1.msra.mxu0 0.0
        %4451 = vmatprep.subr.mxu0 0.0
        %4452 = vmatpush1.msra.mxu0 0.0
        %4453 = vmatprep.subr.mxu0 0.0
        %4454 = vmatpush1.msra.mxu0 0.0
        %4455 = vmatprep.subr.mxu0 0.0
        %4456 = vmatpush1.msra.mxu0 0.0
        %4457 = vmatprep.subr.mxu0 0.0
        %4458 = vmatpush1.msra.mxu0 0.0
        %4459 = vmatprep.subr.mxu0 0.0
        %4460 = vmatpush1.msra.mxu0 0.0
        %4461 = vmatprep.subr.mxu0 0.0
        %4462 = vmatpush1.msra.mxu0 0.0
        %4463 = vmatprep.subr.mxu0 0.0
        %4464 = vmatpush1.msra.mxu0 0.0
        %4465 = vmatprep.subr.mxu0 0.0
        %4466 = vmatpush1.msra.mxu0 0.0
        %4467 = vmatprep.subr.mxu0 0.0
        %4468 = vmatpush1.msra.mxu0 0.0
        %4469 = vmatprep.subr.mxu0 0.0
        %4470 = vmatpush1.msra.mxu0 0.0
        %4471 = vmatprep.subr.mxu0 0.0
        %4472 = vmatpush1.msra.mxu0 0.0
        %4473 = vmatprep.subr.mxu0 0.0
        %4474 = vmatpush1.msra.mxu0 0.0
        %4475 = vmatprep.subr.mxu0 0.0
        %4476 = vmatpush1.msra.mxu0 0.0
        %4477 = vmatprep.subr.mxu0 0.0
        %4478 = vmatpush1.msra.mxu0 0.0
        %4479 = vmatprep.subr.mxu0 0.0
        %4480 = vmatpush1.msra.mxu0 0.0
        %4481 = vmatprep.subr.mxu0 0.0
        %4482 = vmatpush1.msra.mxu0 0.0
        %4483 = vmatprep.subr.mxu0 0.0
        %4484 = vmatpush1.msra.mxu0 0.0
        %4485 = vmatprep.subr.mxu0 0.0
        %4486 = vmatpush1.msra.mxu0 0.0
        %4487 = vmatprep.subr.mxu0 0.0
        %4488 = vmatpush1.msra.mxu0 0.0
        %4489 = vmatprep.subr.mxu0 0.0
        %4490 = vmatpush1.msra.mxu0 0.0
        %4491 = vmatprep.subr.mxu0 0.0
        %4492 = vmatpush1.msra.mxu0 0.0
        %4493 = vmatprep.subr.mxu0 0.0
        %4494 = vmatpush1.msra.mxu0 0.0
        %4495 = vmatprep.subr.mxu0 0.0
        %4496 = vmatpush1.msra.mxu0 0.0
        %4497 = vmatprep.mubr.f32.mxu0 0.0
        %4498 = vmatmul.mubr.f32.gmra.mrb[0].mxu0 %v4428
        %v4499 = vpop.f32.mrb[0].mxu0
        %v4500 = vadd.f32 0.0, %v4499
        %v4501 = vpop.f32.mrb[0].mxu0
        %4502 = vdwg.mxu0
        %v4504 = vsel %vm1695, %v3343, 0
        %v4507 = vsel %vm4353, %v4336, 0
        %4509 = vmatprep.subr.mxu0 0.0
        %4510 = vmatpush1.msra.mxu0 %v4507
        %4511 = vmatprep.subr.mxu0 0.0
        %4512 = vmatpush1.msra.mxu0 0.0
        %4513 = vmatprep.subr.mxu0 0.0
        %4514 = vmatpush1.msra.mxu0 0.0
        %4515 = vmatprep.subr.mxu0 0.0
        %4516 = vmatpush1.msra.mxu0 0.0
        %4517 = vmatprep.subr.mxu0 0.0
        %4518 = vmatpush1.msra.mxu0 0.0
        %4519 = vmatprep.subr.mxu0 0.0
        %4520 = vmatpush1.msra.mxu0 0.0
        %4521 = vmatprep.subr.mxu0 0.0
        %4522 = vmatpush1.msra.mxu0 0.0
        %4523 = vmatprep.subr.mxu0 0.0
        %4524 = vmatpush1.msra.mxu0 0.0
        %4525 = vmatprep.subr.mxu0 0.0
        %4526 = vmatpush1.msra.mxu0 0.0
        %4527 = vmatprep.subr.mxu0 0.0
        %4528 = vmatpush1.msra.mxu0 0.0
        %4529 = vmatprep.subr.mxu0 0.0
        %4530 = vmatpush1.msra.mxu0 0.0
        %4531 = vmatprep.subr.mxu0 0.0
        %4532 = vmatpush1.msra.mxu0 0.0
        %4533 = vmatprep.subr.mxu0 0.0
        %4534 = vmatpush1.msra.mxu0 0.0
        %4535 = vmatprep.subr.mxu0 0.0
        %4536 = vmatpush1.msra.mxu0 0.0
        %4537 = vmatprep.subr.mxu0 0.0
        %4538 = vmatpush1.msra.mxu0 0.0
        %4539 = vmatprep.subr.mxu0 0.0
        %4540 = vmatpush1.msra.mxu0 0.0
        %4541 = vmatprep.subr.mxu0 0.0
        %4542 = vmatpush1.msra.mxu0 0.0
        %4543 = vmatprep.subr.mxu0 0.0
        %4544 = vmatpush1.msra.mxu0 0.0
        %4545 = vmatprep.subr.mxu0 0.0
        %4546 = vmatpush1.msra.mxu0 0.0
        %4547 = vmatprep.subr.mxu0 0.0
        %4548 = vmatpush1.msra.mxu0 0.0
        %4549 = vmatprep.subr.mxu0 0.0
        %4550 = vmatpush1.msra.mxu0 0.0
        %4551 = vmatprep.subr.mxu0 0.0
        %4552 = vmatpush1.msra.mxu0 0.0
        %4553 = vmatprep.subr.mxu0 0.0
        %4554 = vmatpush1.msra.mxu0 0.0
        %4555 = vmatprep.subr.mxu0 0.0
        %4556 = vmatpush1.msra.mxu0 0.0
        %4557 = vmatprep.subr.mxu0 0.0
        %4558 = vmatpush1.msra.mxu0 0.0
        %4559 = vmatprep.subr.mxu0 0.0
        %4560 = vmatpush1.msra.mxu0 0.0
        %4561 = vmatprep.subr.mxu0 0.0
        %4562 = vmatpush1.msra.mxu0 0.0
        %4563 = vmatprep.subr.mxu0 0.0
        %4564 = vmatpush1.msra.mxu0 0.0
        %4565 = vmatprep.subr.mxu0 0.0
        %4566 = vmatpush1.msra.mxu0 0.0
        %4567 = vmatprep.subr.mxu0 0.0
        %4568 = vmatpush1.msra.mxu0 0.0
        %4569 = vmatprep.subr.mxu0 0.0
        %4570 = vmatpush1.msra.mxu0 0.0
        %4571 = vmatprep.subr.mxu0 0.0
        %4572 = vmatpush1.msra.mxu0 0.0
        %4573 = vmatprep.mubr.f32.mxu0 0.0
        %4574 = vmatmul.mubr.f32.gmra.mrb[0].mxu0 %v4504
        %v4575 = vpop.f32.mrb[0].mxu0
        %v4576 = vadd.f32 0.0, %v4575
        %v4577 = vpop.f32.mrb[0].mxu0
        %4578 = vdwg.mxu0
        %v4580 = vsel %vm1695, %v3419, 0
        %v4583 = vsel %vm4353, %v4337, 0
        %4585 = vmatprep.subr.mxu0 0.0
        %4586 = vmatpush1.msra.mxu0 %v4583
        %4587 = vmatprep.subr.mxu0 0.0
        %4588 = vmatpush1.msra.mxu0 0.0
        %4589 = vmatprep.subr.mxu0 0.0
        %4590 = vmatpush1.msra.mxu0 0.0
        %4591 = vmatprep.subr.mxu0 0.0
        %4592 = vmatpush1.msra.mxu0 0.0
        %4593 = vmatprep.subr.mxu0 0.0
        %4594 = vmatpush1.msra.mxu0 0.0
        %4595 = vmatprep.subr.mxu0 0.0
        %4596 = vmatpush1.msra.mxu0 0.0
        %4597 = vmatprep.subr.mxu0 0.0
        %4598 = vmatpush1.msra.mxu0 0.0
        %4599 = vmatprep.subr.mxu0 0.0
        %4600 = vmatpush1.msra.mxu0 0.0
        %4601 = vmatprep.subr.mxu0 0.0
        %4602 = vmatpush1.msra.mxu0 0.0
        %4603 = vmatprep.subr.mxu0 0.0
        %4604 = vmatpush1.msra.mxu0 0.0
        %4605 = vmatprep.subr.mxu0 0.0
        %4606 = vmatpush1.msra.mxu0 0.0
        %4607 = vmatprep.subr.mxu0 0.0
        %4608 = vmatpush1.msra.mxu0 0.0
        %4609 = vmatprep.subr.mxu0 0.0
        %4610 = vmatpush1.msra.mxu0 0.0
        %4611 = vmatprep.subr.mxu0 0.0
        %4612 = vmatpush1.msra.mxu0 0.0
        %4613 = vmatprep.subr.mxu0 0.0
        %4614 = vmatpush1.msra.mxu0 0.0
        %4615 = vmatprep.subr.mxu0 0.0
        %4616 = vmatpush1.msra.mxu0 0.0
        %4617 = vmatprep.subr.mxu0 0.0
        %4618 = vmatpush1.msra.mxu0 0.0
        %4619 = vmatprep.subr.mxu0 0.0
        %4620 = vmatpush1.msra.mxu0 0.0
        %4621 = vmatprep.subr.mxu0 0.0
        %4622 = vmatpush1.msra.mxu0 0.0
        %4623 = vmatprep.subr.mxu0 0.0
        %4624 = vmatpush1.msra.mxu0 0.0
        %4625 = vmatprep.subr.mxu0 0.0
        %4626 = vmatpush1.msra.mxu0 0.0
        %4627 = vmatprep.subr.mxu0 0.0
        %4628 = vmatpush1.msra.mxu0 0.0
        %4629 = vmatprep.subr.mxu0 0.0
        %4630 = vmatpush1.msra.mxu0 0.0
        %4631 = vmatprep.subr.mxu0 0.0
        %4632 = vmatpush1.msra.mxu0 0.0
        %4633 = vmatprep.subr.mxu0 0.0
        %4634 = vmatpush1.msra.mxu0 0.0
        %4635 = vmatprep.subr.mxu0 0.0
        %4636 = vmatpush1.msra.mxu0 0.0
        %4637 = vmatprep.subr.mxu0 0.0
        %4638 = vmatpush1.msra.mxu0 0.0
        %4639 = vmatprep.subr.mxu0 0.0
        %4640 = vmatpush1.msra.mxu0 0.0
        %4641 = vmatprep.subr.mxu0 0.0
        %4642 = vmatpush1.msra.mxu0 0.0
        %4643 = vmatprep.subr.mxu0 0.0
        %4644 = vmatpush1.msra.mxu0 0.0
        %4645 = vmatprep.subr.mxu0 0.0
        %4646 = vmatpush1.msra.mxu0 0.0
        %4647 = vmatprep.subr.mxu0 0.0
        %4648 = vmatpush1.msra.mxu0 0.0
        %4649 = vmatprep.mubr.f32.mxu0 0.0
        %4650 = vmatmul.mubr.f32.gmra.mrb[0].mxu0 %v4580
        %v4651 = vpop.f32.mrb[0].mxu0
        %v4652 = vadd.f32 0.0, %v4651
        %v4653 = vpop.f32.mrb[0].mxu0
        %4654 = vdwg.mxu0
        %v4656 = vsel %vm1695, %v3495, 0
        %v4659 = vsel %vm4353, %v4338, 0
        %4661 = vmatprep.subr.mxu0 0.0
        %4662 = vmatpush1.msra.mxu0 %v4659
        %4663 = vmatprep.subr.mxu0 0.0
        %4664 = vmatpush1.msra.mxu0 0.0
        %4665 = vmatprep.subr.mxu0 0.0
        %4666 = vmatpush1.msra.mxu0 0.0
        %4667 = vmatprep.subr.mxu0 0.0
        %4668 = vmatpush1.msra.mxu0 0.0
        %4669 = vmatprep.subr.mxu0 0.0
        %4670 = vmatpush1.msra.mxu0 0.0
        %4671 = vmatprep.subr.mxu0 0.0
        %4672 = vmatpush1.msra.mxu0 0.0
        %4673 = vmatprep.subr.mxu0 0.0
        %4674 = vmatpush1.msra.mxu0 0.0
        %4675 = vmatprep.subr.mxu0 0.0
        %4676 = vmatpush1.msra.mxu0 0.0
        %4677 = vmatprep.subr.mxu0 0.0
        %4678 = vmatpush1.msra.mxu0 0.0
        %4679 = vmatprep.subr.mxu0 0.0
        %4680 = vmatpush1.msra.mxu0 0.0
        %4681 = vmatprep.subr.mxu0 0.0
        %4682 = vmatpush1.msra.mxu0 0.0
        %4683 = vmatprep.subr.mxu0 0.0
        %4684 = vmatpush1.msra.mxu0 0.0
        %4685 = vmatprep.subr.mxu0 0.0
        %4686 = vmatpush1.msra.mxu0 0.0
        %4687 = vmatprep.subr.mxu0 0.0
        %4688 = vmatpush1.msra.mxu0 0.0
        %4689 = vmatprep.subr.mxu0 0.0
        %4690 = vmatpush1.msra.mxu0 0.0
        %4691 = vmatprep.subr.mxu0 0.0
        %4692 = vmatpush1.msra.mxu0 0.0
        %4693 = vmatprep.subr.mxu0 0.0
        %4694 = vmatpush1.msra.mxu0 0.0
        %4695 = vmatprep.subr.mxu0 0.0
        %4696 = vmatpush1.msra.mxu0 0.0
        %4697 = vmatprep.subr.mxu0 0.0
        %4698 = vmatpush1.msra.mxu0 0.0
        %4699 = vmatprep.subr.mxu0 0.0
        %4700 = vmatpush1.msra.mxu0 0.0
        %4701 = vmatprep.subr.mxu0 0.0
        %4702 = vmatpush1.msra.mxu0 0.0
        %4703 = vmatprep.subr.mxu0 0.0
        %4704 = vmatpush1.msra.mxu0 0.0
        %4705 = vmatprep.subr.mxu0 0.0
        %4706 = vmatpush1.msra.mxu0 0.0
        %4707 = vmatprep.subr.mxu0 0.0
        %4708 = vmatpush1.msra.mxu0 0.0
        %4709 = vmatprep.subr.mxu0 0.0
        %4710 = vmatpush1.msra.mxu0 0.0
        %4711 = vmatprep.subr.mxu0 0.0
        %4712 = vmatpush1.msra.mxu0 0.0
        %4713 = vmatprep.subr.mxu0 0.0
        %4714 = vmatpush1.msra.mxu0 0.0
        %4715 = vmatprep.subr.mxu0 0.0
        %4716 = vmatpush1.msra.mxu0 0.0
        %4717 = vmatprep.subr.mxu0 0.0
        %4718 = vmatpush1.msra.mxu0 0.0
        %4719 = vmatprep.subr.mxu0 0.0
        %4720 = vmatpush1.msra.mxu0 0.0
        %4721 = vmatprep.subr.mxu0 0.0
        %4722 = vmatpush1.msra.mxu0 0.0
        %4723 = vmatprep.subr.mxu0 0.0
        %4724 = vmatpush1.msra.mxu0 0.0
        %4725 = vmatprep.mubr.f32.mxu0 0.0
        %4726 = vmatmul.mubr.f32.gmra.mrb[0].mxu0 %v4656
        %v4727 = vpop.f32.mrb[0].mxu0
        %v4728 = vadd.f32 0.0, %v4727
        %v4729 = vpop.f32.mrb[0].mxu0
        %4730 = vdwg.mxu0
        %v4732 = vsel %vm1695, %v3571, 0
        %v4735 = vsel %vm4353, %v4339, 0
        %4737 = vmatprep.subr.mxu0 0.0
        %4738 = vmatpush1.msra.mxu0 %v4735
        %4739 = vmatprep.subr.mxu0 0.0
        %4740 = vmatpush1.msra.mxu0 0.0
        %4741 = vmatprep.subr.mxu0 0.0
        %4742 = vmatpush1.msra.mxu0 0.0
        %4743 = vmatprep.subr.mxu0 0.0
        %4744 = vmatpush1.msra.mxu0 0.0
        %4745 = vmatprep.subr.mxu0 0.0
        %4746 = vmatpush1.msra.mxu0 0.0
        %4747 = vmatprep.subr.mxu0 0.0
        %4748 = vmatpush1.msra.mxu0 0.0
        %4749 = vmatprep.subr.mxu0 0.0
        %4750 = vmatpush1.msra.mxu0 0.0
        %4751 = vmatprep.subr.mxu0 0.0
        %4752 = vmatpush1.msra.mxu0 0.0
        %4753 = vmatprep.subr.mxu0 0.0
        %4754 = vmatpush1.msra.mxu0 0.0
        %4755 = vmatprep.subr.mxu0 0.0
        %4756 = vmatpush1.msra.mxu0 0.0
        %4757 = vmatprep.subr.mxu0 0.0
        %4758 = vmatpush1.msra.mxu0 0.0
        %4759 = vmatprep.subr.mxu0 0.0
        %4760 = vmatpush1.msra.mxu0 0.0
        %4761 = vmatprep.subr.mxu0 0.0
        %4762 = vmatpush1.msra.mxu0 0.0
        %4763 = vmatprep.subr.mxu0 0.0
        %4764 = vmatpush1.msra.mxu0 0.0
        %4765 = vmatprep.subr.mxu0 0.0
        %4766 = vmatpush1.msra.mxu0 0.0
        %4767 = vmatprep.subr.mxu0 0.0
        %4768 = vmatpush1.msra.mxu0 0.0
        %4769 = vmatprep.subr.mxu0 0.0
        %4770 = vmatpush1.msra.mxu0 0.0
        %4771 = vmatprep.subr.mxu0 0.0
        %4772 = vmatpush1.msra.mxu0 0.0
        %4773 = vmatprep.subr.mxu0 0.0
        %4774 = vmatpush1.msra.mxu0 0.0
        %4775 = vmatprep.subr.mxu0 0.0
        %4776 = vmatpush1.msra.mxu0 0.0
        %4777 = vmatprep.subr.mxu0 0.0
        %4778 = vmatpush1.msra.mxu0 0.0
        %4779 = vmatprep.subr.mxu0 0.0
        %4780 = vmatpush1.msra.mxu0 0.0
        %4781 = vmatprep.subr.mxu0 0.0
        %4782 = vmatpush1.msra.mxu0 0.0
        %4783 = vmatprep.subr.mxu0 0.0
        %4784 = vmatpush1.msra.mxu0 0.0
        %4785 = vmatprep.subr.mxu0 0.0
        %4786 = vmatpush1.msra.mxu0 0.0
        %4787 = vmatprep.subr.mxu0 0.0
        %4788 = vmatpush1.msra.mxu0 0.0
        %4789 = vmatprep.subr.mxu0 0.0
        %4790 = vmatpush1.msra.mxu0 0.0
        %4791 = vmatprep.subr.mxu0 0.0
        %4792 = vmatpush1.msra.mxu0 0.0
        %4793 = vmatprep.subr.mxu0 0.0
        %4794 = vmatpush1.msra.mxu0 0.0
        %4795 = vmatprep.subr.mxu0 0.0
        %4796 = vmatpush1.msra.mxu0 0.0
        %4797 = vmatprep.subr.mxu0 0.0
        %4798 = vmatpush1.msra.mxu0 0.0
        %4799 = vmatprep.subr.mxu0 0.0
        %4800 = vmatpush1.msra.mxu0 0.0
        %4801 = vmatprep.mubr.f32.mxu0 0.0
        %4802 = vmatmul.mubr.f32.gmra.mrb[0].mxu0 %v4732
        %v4803 = vpop.f32.mrb[0].mxu0
        %v4804 = vadd.f32 0.0, %v4803
        %v4805 = vpop.f32.mrb[0].mxu0
        %4806 = vdwg.mxu0
        %v4808 = vsel %vm1695, %v3647, 0
        %v4811 = vsel %vm4353, %v4340, 0
        %4813 = vmatprep.subr.mxu0 0.0
        %4814 = vmatpush1.msra.mxu0 %v4811
        %4815 = vmatprep.subr.mxu0 0.0
        %4816 = vmatpush1.msra.mxu0 0.0
        %4817 = vmatprep.subr.mxu0 0.0
        %4818 = vmatpush1.msra.mxu0 0.0
        %4819 = vmatprep.subr.mxu0 0.0
        %4820 = vmatpush1.msra.mxu0 0.0
        %4821 = vmatprep.subr.mxu0 0.0
        %4822 = vmatpush1.msra.mxu0 0.0
        %4823 = vmatprep.subr.mxu0 0.0
        %4824 = vmatpush1.msra.mxu0 0.0
        %4825 = vmatprep.subr.mxu0 0.0
        %4826 = vmatpush1.msra.mxu0 0.0
        %4827 = vmatprep.subr.mxu0 0.0
        %4828 = vmatpush1.msra.mxu0 0.0
        %4829 = vmatprep.subr.mxu0 0.0
        %4830 = vmatpush1.msra.mxu0 0.0
        %4831 = vmatprep.subr.mxu0 0.0
        %4832 = vmatpush1.msra.mxu0 0.0
        %4833 = vmatprep.subr.mxu0 0.0
        %4834 = vmatpush1.msra.mxu0 0.0
        %4835 = vmatprep.subr.mxu0 0.0
        %4836 = vmatpush1.msra.mxu0 0.0
        %4837 = vmatprep.subr.mxu0 0.0
        %4838 = vmatpush1.msra.mxu0 0.0
        %4839 = vmatprep.subr.mxu0 0.0
        %4840 = vmatpush1.msra.mxu0 0.0
        %4841 = vmatprep.subr.mxu0 0.0
        %4842 = vmatpush1.msra.mxu0 0.0
        %4843 = vmatprep.subr.mxu0 0.0
        %4844 = vmatpush1.msra.mxu0 0.0
        %4845 = vmatprep.subr.mxu0 0.0
        %4846 = vmatpush1.msra.mxu0 0.0
        %4847 = vmatprep.subr.mxu0 0.0
        %4848 = vmatpush1.msra.mxu0 0.0
        %4849 = vmatprep.subr.mxu0 0.0
        %4850 = vmatpush1.msra.mxu0 0.0
        %4851 = vmatprep.subr.mxu0 0.0
        %4852 = vmatpush1.msra.mxu0 0.0
        %4853 = vmatprep.subr.mxu0 0.0
        %4854 = vmatpush1.msra.mxu0 0.0
        %4855 = vmatprep.subr.mxu0 0.0
        %4856 = vmatpush1.msra.mxu0 0.0
        %4857 = vmatprep.subr.mxu0 0.0
        %4858 = vmatpush1.msra.mxu0 0.0
        %4859 = vmatprep.subr.mxu0 0.0
        %4860 = vmatpush1.msra.mxu0 0.0
        %4861 = vmatprep.subr.mxu0 0.0
        %4862 = vmatpush1.msra.mxu0 0.0
        %4863 = vmatprep.subr.mxu0 0.0
        %4864 = vmatpush1.msra.mxu0 0.0
        %4865 = vmatprep.subr.mxu0 0.0
        %4866 = vmatpush1.msra.mxu0 0.0
        %4867 = vmatprep.subr.mxu0 0.0
        %4868 = vmatpush1.msra.mxu0 0.0
        %4869 = vmatprep.subr.mxu0 0.0
        %4870 = vmatpush1.msra.mxu0 0.0
        %4871 = vmatprep.subr.mxu0 0.0
        %4872 = vmatpush1.msra.mxu0 0.0
        %4873 = vmatprep.subr.mxu0 0.0
        %4874 = vmatpush1.msra.mxu0 0.0
        %4875 = vmatprep.subr.mxu0 0.0
        %4876 = vmatpush1.msra.mxu0 0.0
        %4877 = vmatprep.mubr.f32.mxu0 0.0
        %4878 = vmatmul.mubr.f32.gmra.mrb[0].mxu0 %v4808
        %v4879 = vpop.f32.mrb[0].mxu0
        %v4880 = vadd.f32 0.0, %v4879
        %v4881 = vpop.f32.mrb[0].mxu0
        %4882 = vdwg.mxu0
        %v4884 = vsel %vm1695, %v3723, 0
        %v4887 = vsel %vm4353, %v4341, 0
        %4889 = vmatprep.subr.mxu0 0.0
        %4890 = vmatpush1.msra.mxu0 %v4887
        %4891 = vmatprep.subr.mxu0 0.0
        %4892 = vmatpush1.msra.mxu0 0.0
        %4893 = vmatprep.subr.mxu0 0.0
        %4894 = vmatpush1.msra.mxu0 0.0
        %4895 = vmatprep.subr.mxu0 0.0
        %4896 = vmatpush1.msra.mxu0 0.0
        %4897 = vmatprep.subr.mxu0 0.0
        %4898 = vmatpush1.msra.mxu0 0.0
        %4899 = vmatprep.subr.mxu0 0.0
        %4900 = vmatpush1.msra.mxu0 0.0
        %4901 = vmatprep.subr.mxu0 0.0
        %4902 = vmatpush1.msra.mxu0 0.0
        %4903 = vmatprep.subr.mxu0 0.0
        %4904 = vmatpush1.msra.mxu0 0.0
        %4905 = vmatprep.subr.mxu0 0.0
        %4906 = vmatpush1.msra.mxu0 0.0
        %4907 = vmatprep.subr.mxu0 0.0
        %4908 = vmatpush1.msra.mxu0 0.0
        %4909 = vmatprep.subr.mxu0 0.0
        %4910 = vmatpush1.msra.mxu0 0.0
        %4911 = vmatprep.subr.mxu0 0.0
        %4912 = vmatpush1.msra.mxu0 0.0
        %4913 = vmatprep.subr.mxu0 0.0
        %4914 = vmatpush1.msra.mxu0 0.0
        %4915 = vmatprep.subr.mxu0 0.0
        %4916 = vmatpush1.msra.mxu0 0.0
        %4917 = vmatprep.subr.mxu0 0.0
        %4918 = vmatpush1.msra.mxu0 0.0
        %4919 = vmatprep.subr.mxu0 0.0
        %4920 = vmatpush1.msra.mxu0 0.0
        %4921 = vmatprep.subr.mxu0 0.0
        %4922 = vmatpush1.msra.mxu0 0.0
        %4923 = vmatprep.subr.mxu0 0.0
        %4924 = vmatpush1.msra.mxu0 0.0
        %4925 = vmatprep.subr.mxu0 0.0
        %4926 = vmatpush1.msra.mxu0 0.0
        %4927 = vmatprep.subr.mxu0 0.0
        %4928 = vmatpush1.msra.mxu0 0.0
        %4929 = vmatprep.subr.mxu0 0.0
        %4930 = vmatpush1.msra.mxu0 0.0
        %4931 = vmatprep.subr.mxu0 0.0
        %4932 = vmatpush1.msra.mxu0 0.0
        %4933 = vmatprep.subr.mxu0 0.0
        %4934 = vmatpush1.msra.mxu0 0.0
        %4935 = vmatprep.subr.mxu0 0.0
        %4936 = vmatpush1.msra.mxu0 0.0
        %4937 = vmatprep.subr.mxu0 0.0
        %4938 = vmatpush1.msra.mxu0 0.0
        %4939 = vmatprep.subr.mxu0 0.0
        %4940 = vmatpush1.msra.mxu0 0.0
        %4941 = vmatprep.subr.mxu0 0.0
        %4942 = vmatpush1.msra.mxu0 0.0
        %4943 = vmatprep.subr.mxu0 0.0
        %4944 = vmatpush1.msra.mxu0 0.0
        %4945 = vmatprep.subr.mxu0 0.0
        %4946 = vmatpush1.msra.mxu0 0.0
        %4947 = vmatprep.subr.mxu0 0.0
        %4948 = vmatpush1.msra.mxu0 0.0
        %4949 = vmatprep.subr.mxu0 0.0
        %4950 = vmatpush1.msra.mxu0 0.0
        %4951 = vmatprep.subr.mxu0 0.0
        %4952 = vmatpush1.msra.mxu0 0.0
        %4953 = vmatprep.mubr.f32.mxu0 0.0
        %4954 = vmatmul.mubr.f32.gmra.mrb[0].mxu0 %v4884
        %v4955 = vpop.f32.mrb[0].mxu0
        %v4956 = vadd.f32 0.0, %v4955
        %v4957 = vpop.f32.mrb[0].mxu0
        %4958 = vdwg.mxu0
        %v4960 = vsel %vm1695, %v3799, 0
        %v4963 = vsel %vm4353, %v4342, 0
        %4965 = vmatprep.subr.mxu0 0.0
        %4966 = vmatpush1.msra.mxu0 %v4963
        %4967 = vmatprep.subr.mxu0 0.0
        %4968 = vmatpush1.msra.mxu0 0.0
        %4969 = vmatprep.subr.mxu0 0.0
        %4970 = vmatpush1.msra.mxu0 0.0
        %4971 = vmatprep.subr.mxu0 0.0
        %4972 = vmatpush1.msra.mxu0 0.0
        %4973 = vmatprep.subr.mxu0 0.0
        %4974 = vmatpush1.msra.mxu0 0.0
        %4975 = vmatprep.subr.mxu0 0.0
        %4976 = vmatpush1.msra.mxu0 0.0
        %4977 = vmatprep.subr.mxu0 0.0
        %4978 = vmatpush1.msra.mxu0 0.0
        %4979 = vmatprep.subr.mxu0 0.0
        %4980 = vmatpush1.msra.mxu0 0.0
        %4981 = vmatprep.subr.mxu0 0.0
        %4982 = vmatpush1.msra.mxu0 0.0
        %4983 = vmatprep.subr.mxu0 0.0
        %4984 = vmatpush1.msra.mxu0 0.0
        %4985 = vmatprep.subr.mxu0 0.0
        %4986 = vmatpush1.msra.mxu0 0.0
        %4987 = vmatprep.subr.mxu0 0.0
        %4988 = vmatpush1.msra.mxu0 0.0
        %4989 = vmatprep.subr.mxu0 0.0
        %4990 = vmatpush1.msra.mxu0 0.0
        %4991 = vmatprep.subr.mxu0 0.0
        %4992 = vmatpush1.msra.mxu0 0.0
        %4993 = vmatprep.subr.mxu0 0.0
        %4994 = vmatpush1.msra.mxu0 0.0
        %4995 = vmatprep.subr.mxu0 0.0
        %4996 = vmatpush1.msra.mxu0 0.0
        %4997 = vmatprep.subr.mxu0 0.0
        %4998 = vmatpush1.msra.mxu0 0.0
        %4999 = vmatprep.subr.mxu0 0.0
        %5000 = vmatpush1.msra.mxu0 0.0
        %5001 = vmatprep.subr.mxu0 0.0
        %5002 = vmatpush1.msra.mxu0 0.0
        %5003 = vmatprep.subr.mxu0 0.0
        %5004 = vmatpush1.msra.mxu0 0.0
        %5005 = vmatprep.subr.mxu0 0.0
        %5006 = vmatpush1.msra.mxu0 0.0
        %5007 = vmatprep.subr.mxu0 0.0
        %5008 = vmatpush1.msra.mxu0 0.0
        %5009 = vmatprep.subr.mxu0 0.0
        %5010 = vmatpush1.msra.mxu0 0.0
        %5011 = vmatprep.subr.mxu0 0.0
        %5012 = vmatpush1.msra.mxu0 0.0
        %5013 = vmatprep.subr.mxu0 0.0
        %5014 = vmatpush1.msra.mxu0 0.0
        %5015 = vmatprep.subr.mxu0 0.0
        %5016 = vmatpush1.msra.mxu0 0.0
        %5017 = vmatprep.subr.mxu0 0.0
        %5018 = vmatpush1.msra.mxu0 0.0
        %5019 = vmatprep.subr.mxu0 0.0
        %5020 = vmatpush1.msra.mxu0 0.0
        %5021 = vmatprep.subr.mxu0 0.0
        %5022 = vmatpush1.msra.mxu0 0.0
        %5023 = vmatprep.subr.mxu0 0.0
        %5024 = vmatpush1.msra.mxu0 0.0
        %5025 = vmatprep.subr.mxu0 0.0
        %5026 = vmatpush1.msra.mxu0 0.0
        %5027 = vmatprep.subr.mxu0 0.0
        %5028 = vmatpush1.msra.mxu0 0.0
        %5029 = vmatprep.mubr.f32.mxu0 0.0
        %5030 = vmatmul.mubr.f32.gmra.mrb[0].mxu0 %v4960
        %v5031 = vpop.f32.mrb[0].mxu0
        %v5032 = vadd.f32 0.0, %v5031
        %v5033 = vpop.f32.mrb[0].mxu0
        %5034 = vdwg.mxu0
        %v5036 = vsel %vm1695, %v3875, 0
        %v5039 = vsel %vm4353, %v4343, 0
        %5041 = vmatprep.subr.mxu0 0.0
        %5042 = vmatpush1.msra.mxu0 %v5039
        %5043 = vmatprep.subr.mxu0 0.0
        %5044 = vmatpush1.msra.mxu0 0.0
        %5045 = vmatprep.subr.mxu0 0.0
        %5046 = vmatpush1.msra.mxu0 0.0
        %5047 = vmatprep.subr.mxu0 0.0
        %5048 = vmatpush1.msra.mxu0 0.0
        %5049 = vmatprep.subr.mxu0 0.0
        %5050 = vmatpush1.msra.mxu0 0.0
        %5051 = vmatprep.subr.mxu0 0.0
        %5052 = vmatpush1.msra.mxu0 0.0
        %5053 = vmatprep.subr.mxu0 0.0
        %5054 = vmatpush1.msra.mxu0 0.0
        %5055 = vmatprep.subr.mxu0 0.0
        %5056 = vmatpush1.msra.mxu0 0.0
        %5057 = vmatprep.subr.mxu0 0.0
        %5058 = vmatpush1.msra.mxu0 0.0
        %5059 = vmatprep.subr.mxu0 0.0
        %5060 = vmatpush1.msra.mxu0 0.0
        %5061 = vmatprep.subr.mxu0 0.0
        %5062 = vmatpush1.msra.mxu0 0.0
        %5063 = vmatprep.subr.mxu0 0.0
        %5064 = vmatpush1.msra.mxu0 0.0
        %5065 = vmatprep.subr.mxu0 0.0
        %5066 = vmatpush1.msra.mxu0 0.0
        %5067 = vmatprep.subr.mxu0 0.0
        %5068 = vmatpush1.msra.mxu0 0.0
        %5069 = vmatprep.subr.mxu0 0.0
        %5070 = vmatpush1.msra.mxu0 0.0
        %5071 = vmatprep.subr.mxu0 0.0
        %5072 = vmatpush1.msra.mxu0 0.0
        %5073 = vmatprep.subr.mxu0 0.0
        %5074 = vmatpush1.msra.mxu0 0.0
        %5075 = vmatprep.subr.mxu0 0.0
        %5076 = vmatpush1.msra.mxu0 0.0
        %5077 = vmatprep.subr.mxu0 0.0
        %5078 = vmatpush1.msra.mxu0 0.0
        %5079 = vmatprep.subr.mxu0 0.0
        %5080 = vmatpush1.msra.mxu0 0.0
        %5081 = vmatprep.subr.mxu0 0.0
        %5082 = vmatpush1.msra.mxu0 0.0
        %5083 = vmatprep.subr.mxu0 0.0
        %5084 = vmatpush1.msra.mxu0 0.0
        %5085 = vmatprep.subr.mxu0 0.0
        %5086 = vmatpush1.msra.mxu0 0.0
        %5087 = vmatprep.subr.mxu0 0.0
        %5088 = vmatpush1.msra.mxu0 0.0
        %5089 = vmatprep.subr.mxu0 0.0
        %5090 = vmatpush1.msra.mxu0 0.0
        %5091 = vmatprep.subr.mxu0 0.0
        %5092 = vmatpush1.msra.mxu0 0.0
        %5093 = vmatprep.subr.mxu0 0.0
        %5094 = vmatpush1.msra.mxu0 0.0
        %5095 = vmatprep.subr.mxu0 0.0
        %5096 = vmatpush1.msra.mxu0 0.0
        %5097 = vmatprep.subr.mxu0 0.0
        %5098 = vmatpush1.msra.mxu0 0.0
        %5099 = vmatprep.subr.mxu0 0.0
        %5100 = vmatpush1.msra.mxu0 0.0
        %5101 = vmatprep.subr.mxu0 0.0
        %5102 = vmatpush1.msra.mxu0 0.0
        %5103 = vmatprep.subr.mxu0 0.0
        %5104 = vmatpush1.msra.mxu0 0.0
        %5105 = vmatprep.mubr.f32.mxu0 0.0
        %5106 = vmatmul.mubr.f32.gmra.mrb[0].mxu0 %v5036
        %v5107 = vpop.f32.mrb[0].mxu0
        %v5108 = vadd.f32 0.0, %v5107
        %v5109 = vpop.f32.mrb[0].mxu0
        %5110 = vdwg.mxu0
        %v5112 = vsel %vm1695, %v3951, 0
        %v5115 = vsel %vm4353, %v4344, 0
        %5117 = vmatprep.subr.mxu0 0.0
        %5118 = vmatpush1.msra.mxu0 %v5115
        %5119 = vmatprep.subr.mxu0 0.0
        %5120 = vmatpush1.msra.mxu0 0.0
        %5121 = vmatprep.subr.mxu0 0.0
        %5122 = vmatpush1.msra.mxu0 0.0
        %5123 = vmatprep.subr.mxu0 0.0
        %5124 = vmatpush1.msra.mxu0 0.0
        %5125 = vmatprep.subr.mxu0 0.0
        %5126 = vmatpush1.msra.mxu0 0.0
        %5127 = vmatprep.subr.mxu0 0.0
        %5128 = vmatpush1.msra.mxu0 0.0
        %5129 = vmatprep.subr.mxu0 0.0
        %5130 = vmatpush1.msra.mxu0 0.0
        %5131 = vmatprep.subr.mxu0 0.0
        %5132 = vmatpush1.msra.mxu0 0.0
        %5133 = vmatprep.subr.mxu0 0.0
        %5134 = vmatpush1.msra.mxu0 0.0
        %5135 = vmatprep.subr.mxu0 0.0
        %5136 = vmatpush1.msra.mxu0 0.0
        %5137 = vmatprep.subr.mxu0 0.0
        %5138 = vmatpush1.msra.mxu0 0.0
        %5139 = vmatprep.subr.mxu0 0.0
        %5140 = vmatpush1.msra.mxu0 0.0
        %5141 = vmatprep.subr.mxu0 0.0
        %5142 = vmatpush1.msra.mxu0 0.0
        %5143 = vmatprep.subr.mxu0 0.0
        %5144 = vmatpush1.msra.mxu0 0.0
        %5145 = vmatprep.subr.mxu0 0.0
        %5146 = vmatpush1.msra.mxu0 0.0
        %5147 = vmatprep.subr.mxu0 0.0
        %5148 = vmatpush1.msra.mxu0 0.0
        %5149 = vmatprep.subr.mxu0 0.0
        %5150 = vmatpush1.msra.mxu0 0.0
        %5151 = vmatprep.subr.mxu0 0.0
        %5152 = vmatpush1.msra.mxu0 0.0
        %5153 = vmatprep.subr.mxu0 0.0
        %5154 = vmatpush1.msra.mxu0 0.0
        %5155 = vmatprep.subr.mxu0 0.0
        %5156 = vmatpush1.msra.mxu0 0.0
        %5157 = vmatprep.subr.mxu0 0.0
        %5158 = vmatpush1.msra.mxu0 0.0
        %5159 = vmatprep.subr.mxu0 0.0
        %5160 = vmatpush1.msra.mxu0 0.0
        %5161 = vmatprep.subr.mxu0 0.0
        %5162 = vmatpush1.msra.mxu0 0.0
        %5163 = vmatprep.subr.mxu0 0.0
        %5164 = vmatpush1.msra.mxu0 0.0
        %5165 = vmatprep.subr.mxu0 0.0
        %5166 = vmatpush1.msra.mxu0 0.0
        %5167 = vmatprep.subr.mxu0 0.0
        %5168 = vmatpush1.msra.mxu0 0.0
        %5169 = vmatprep.subr.mxu0 0.0
        %5170 = vmatpush1.msra.mxu0 0.0
        %5171 = vmatprep.subr.mxu0 0.0
        %5172 = vmatpush1.msra.mxu0 0.0
        %5173 = vmatprep.subr.mxu0 0.0
        %5174 = vmatpush1.msra.mxu0 0.0
        %5175 = vmatprep.subr.mxu0 0.0
        %5176 = vmatpush1.msra.mxu0 0.0
        %5177 = vmatprep.subr.mxu0 0.0
        %5178 = vmatpush1.msra.mxu0 0.0
        %5179 = vmatprep.subr.mxu0 0.0
        %5180 = vmatpush1.msra.mxu0 0.0
        %5181 = vmatprep.mubr.f32.mxu0 0.0
        %5182 = vmatmul.mubr.f32.gmra.mrb[0].mxu0 %v5112
        %v5183 = vpop.f32.mrb[0].mxu0
        %v5184 = vadd.f32 0.0, %v5183
        %v5185 = vpop.f32.mrb[0].mxu0
        %5186 = vdwg.mxu0
        %v5188 = vsel %vm1695, %v4027, 0
        %v5191 = vsel %vm4353, %v4345, 0
        %5193 = vmatprep.subr.mxu0 0.0
        %5194 = vmatpush1.msra.mxu0 %v5191
        %5195 = vmatprep.subr.mxu0 0.0
        %5196 = vmatpush1.msra.mxu0 0.0
        %5197 = vmatprep.subr.mxu0 0.0
        %5198 = vmatpush1.msra.mxu0 0.0
        %5199 = vmatprep.subr.mxu0 0.0
        %5200 = vmatpush1.msra.mxu0 0.0
        %5201 = vmatprep.subr.mxu0 0.0
        %5202 = vmatpush1.msra.mxu0 0.0
        %5203 = vmatprep.subr.mxu0 0.0
        %5204 = vmatpush1.msra.mxu0 0.0
        %5205 = vmatprep.subr.mxu0 0.0
        %5206 = vmatpush1.msra.mxu0 0.0
        %5207 = vmatprep.subr.mxu0 0.0
        %5208 = vmatpush1.msra.mxu0 0.0
        %5209 = vmatprep.subr.mxu0 0.0
        %5210 = vmatpush1.msra.mxu0 0.0
        %5211 = vmatprep.subr.mxu0 0.0
        %5212 = vmatpush1.msra.mxu0 0.0
        %5213 = vmatprep.subr.mxu0 0.0
        %5214 = vmatpush1.msra.mxu0 0.0
        %5215 = vmatprep.subr.mxu0 0.0
        %5216 = vmatpush1.msra.mxu0 0.0
        %5217 = vmatprep.subr.mxu0 0.0
        %5218 = vmatpush1.msra.mxu0 0.0
        %5219 = vmatprep.subr.mxu0 0.0
        %5220 = vmatpush1.msra.mxu0 0.0
        %5221 = vmatprep.subr.mxu0 0.0
        %5222 = vmatpush1.msra.mxu0 0.0
        %5223 = vmatprep.subr.mxu0 0.0
        %5224 = vmatpush1.msra.mxu0 0.0
        %5225 = vmatprep.subr.mxu0 0.0
        %5226 = vmatpush1.msra.mxu0 0.0
        %5227 = vmatprep.subr.mxu0 0.0
        %5228 = vmatpush1.msra.mxu0 0.0
        %5229 = vmatprep.subr.mxu0 0.0
        %5230 = vmatpush1.msra.mxu0 0.0
        %5231 = vmatprep.subr.mxu0 0.0
        %5232 = vmatpush1.msra.mxu0 0.0
        %5233 = vmatprep.subr.mxu0 0.0
        %5234 = vmatpush1.msra.mxu0 0.0
        %5235 = vmatprep.subr.mxu0 0.0
        %5236 = vmatpush1.msra.mxu0 0.0
        %5237 = vmatprep.subr.mxu0 0.0
        %5238 = vmatpush1.msra.mxu0 0.0
        %5239 = vmatprep.subr.mxu0 0.0
        %5240 = vmatpush1.msra.mxu0 0.0
        %5241 = vmatprep.subr.mxu0 0.0
        %5242 = vmatpush1.msra.mxu0 0.0
        %5243 = vmatprep.subr.mxu0 0.0
        %5244 = vmatpush1.msra.mxu0 0.0
        %5245 = vmatprep.subr.mxu0 0.0
        %5246 = vmatpush1.msra.mxu0 0.0
        %5247 = vmatprep.subr.mxu0 0.0
        %5248 = vmatpush1.msra.mxu0 0.0
        %5249 = vmatprep.subr.mxu0 0.0
        %5250 = vmatpush1.msra.mxu0 0.0
        %5251 = vmatprep.subr.mxu0 0.0
        %5252 = vmatpush1.msra.mxu0 0.0
        %5253 = vmatprep.subr.mxu0 0.0
        %5254 = vmatpush1.msra.mxu0 0.0
        %5255 = vmatprep.subr.mxu0 0.0
        %5256 = vmatpush1.msra.mxu0 0.0
        %5257 = vmatprep.mubr.f32.mxu0 0.0
        %5258 = vmatmul.mubr.f32.gmra.mrb[0].mxu0 %v5188
        %v5259 = vpop.f32.mrb[0].mxu0
        %v5260 = vadd.f32 0.0, %v5259
        %v5261 = vpop.f32.mrb[0].mxu0
        %5262 = vdwg.mxu0
        %v5264 = vsel %vm1695, %v4103, 0
        %v5267 = vsel %vm4353, %v4346, 0
        %5269 = vmatprep.subr.mxu0 0.0
        %5270 = vmatpush1.msra.mxu0 %v5267
        %5271 = vmatprep.subr.mxu0 0.0
        %5272 = vmatpush1.msra.mxu0 0.0
        %5273 = vmatprep.subr.mxu0 0.0
        %5274 = vmatpush1.msra.mxu0 0.0
        %5275 = vmatprep.subr.mxu0 0.0
        %5276 = vmatpush1.msra.mxu0 0.0
        %5277 = vmatprep.subr.mxu0 0.0
        %5278 = vmatpush1.msra.mxu0 0.0
        %5279 = vmatprep.subr.mxu0 0.0
        %5280 = vmatpush1.msra.mxu0 0.0
        %5281 = vmatprep.subr.mxu0 0.0
        %5282 = vmatpush1.msra.mxu0 0.0
        %5283 = vmatprep.subr.mxu0 0.0
        %5284 = vmatpush1.msra.mxu0 0.0
        %5285 = vmatprep.subr.mxu0 0.0
        %5286 = vmatpush1.msra.mxu0 0.0
        %5287 = vmatprep.subr.mxu0 0.0
        %5288 = vmatpush1.msra.mxu0 0.0
        %5289 = vmatprep.subr.mxu0 0.0
        %5290 = vmatpush1.msra.mxu0 0.0
        %5291 = vmatprep.subr.mxu0 0.0
        %5292 = vmatpush1.msra.mxu0 0.0
        %5293 = vmatprep.subr.mxu0 0.0
        %5294 = vmatpush1.msra.mxu0 0.0
        %5295 = vmatprep.subr.mxu0 0.0
        %5296 = vmatpush1.msra.mxu0 0.0
        %5297 = vmatprep.subr.mxu0 0.0
        %5298 = vmatpush1.msra.mxu0 0.0
        %5299 = vmatprep.subr.mxu0 0.0
        %5300 = vmatpush1.msra.mxu0 0.0
        %5301 = vmatprep.subr.mxu0 0.0
        %5302 = vmatpush1.msra.mxu0 0.0
        %5303 = vmatprep.subr.mxu0 0.0
        %5304 = vmatpush1.msra.mxu0 0.0
        %5305 = vmatprep.subr.mxu0 0.0
        %5306 = vmatpush1.msra.mxu0 0.0
        %5307 = vmatprep.subr.mxu0 0.0
        %5308 = vmatpush1.msra.mxu0 0.0
        %5309 = vmatprep.subr.mxu0 0.0
        %5310 = vmatpush1.msra.mxu0 0.0
        %5311 = vmatprep.subr.mxu0 0.0
        %5312 = vmatpush1.msra.mxu0 0.0
        %5313 = vmatprep.subr.mxu0 0.0
        %5314 = vmatpush1.msra.mxu0 0.0
        %5315 = vmatprep.subr.mxu0 0.0
        %5316 = vmatpush1.msra.mxu0 0.0
        %5317 = vmatprep.subr.mxu0 0.0
        %5318 = vmatpush1.msra.mxu0 0.0
        %5319 = vmatprep.subr.mxu0 0.0
        %5320 = vmatpush1.msra.mxu0 0.0
        %5321 = vmatprep.subr.mxu0 0.0
        %5322 = vmatpush1.msra.mxu0 0.0
        %5323 = vmatprep.subr.mxu0 0.0
        %5324 = vmatpush1.msra.mxu0 0.0
        %5325 = vmatprep.subr.mxu0 0.0
        %5326 = vmatpush1.msra.mxu0 0.0
        %5327 = vmatprep.subr.mxu0 0.0
        %5328 = vmatpush1.msra.mxu0 0.0
        %5329 = vmatprep.subr.mxu0 0.0
        %5330 = vmatpush1.msra.mxu0 0.0
        %5331 = vmatprep.subr.mxu0 0.0
        %5332 = vmatpush1.msra.mxu0 0.0
        %5333 = vmatprep.mubr.f32.mxu0 0.0
        %5334 = vmatmul.mubr.f32.gmra.mrb[0].mxu0 %v5264
        %v5335 = vpop.f32.mrb[0].mxu0
        %v5336 = vadd.f32 0.0, %v5335
        %v5337 = vpop.f32.mrb[0].mxu0
        %5338 = vdwg.mxu0
        %v5340 = vsel %vm1695, %v4179, 0
        %v5343 = vsel %vm4353, %v4347, 0
        %5345 = vmatprep.subr.mxu0 0.0
        %5346 = vmatpush1.msra.mxu0 %v5343
        %5347 = vmatprep.subr.mxu0 0.0
        %5348 = vmatpush1.msra.mxu0 0.0
        %5349 = vmatprep.subr.mxu0 0.0
        %5350 = vmatpush1.msra.mxu0 0.0
        %5351 = vmatprep.subr.mxu0 0.0
        %5352 = vmatpush1.msra.mxu0 0.0
        %5353 = vmatprep.subr.mxu0 0.0
        %5354 = vmatpush1.msra.mxu0 0.0
        %5355 = vmatprep.subr.mxu0 0.0
        %5356 = vmatpush1.msra.mxu0 0.0
        %5357 = vmatprep.subr.mxu0 0.0
        %5358 = vmatpush1.msra.mxu0 0.0
        %5359 = vmatprep.subr.mxu0 0.0
        %5360 = vmatpush1.msra.mxu0 0.0
        %5361 = vmatprep.subr.mxu0 0.0
        %5362 = vmatpush1.msra.mxu0 0.0
        %5363 = vmatprep.subr.mxu0 0.0
        %5364 = vmatpush1.msra.mxu0 0.0
        %5365 = vmatprep.subr.mxu0 0.0
        %5366 = vmatpush1.msra.mxu0 0.0
        %5367 = vmatprep.subr.mxu0 0.0
        %5368 = vmatpush1.msra.mxu0 0.0
        %5369 = vmatprep.subr.mxu0 0.0
        %5370 = vmatpush1.msra.mxu0 0.0
        %5371 = vmatprep.subr.mxu0 0.0
        %5372 = vmatpush1.msra.mxu0 0.0
        %5373 = vmatprep.subr.mxu0 0.0
        %5374 = vmatpush1.msra.mxu0 0.0
        %5375 = vmatprep.subr.mxu0 0.0
        %5376 = vmatpush1.msra.mxu0 0.0
        %5377 = vmatprep.subr.mxu0 0.0
        %5378 = vmatpush1.msra.mxu0 0.0
        %5379 = vmatprep.subr.mxu0 0.0
        %5380 = vmatpush1.msra.mxu0 0.0
        %5381 = vmatprep.subr.mxu0 0.0
        %5382 = vmatpush1.msra.mxu0 0.0
        %5383 = vmatprep.subr.mxu0 0.0
        %5384 = vmatpush1.msra.mxu0 0.0
        %5385 = vmatprep.subr.mxu0 0.0
        %5386 = vmatpush1.msra.mxu0 0.0
        %5387 = vmatprep.subr.mxu0 0.0
        %5388 = vmatpush1.msra.mxu0 0.0
        %5389 = vmatprep.subr.mxu0 0.0
        %5390 = vmatpush1.msra.mxu0 0.0
        %5391 = vmatprep.subr.mxu0 0.0
        %5392 = vmatpush1.msra.mxu0 0.0
        %5393 = vmatprep.subr.mxu0 0.0
        %5394 = vmatpush1.msra.mxu0 0.0
        %5395 = vmatprep.subr.mxu0 0.0
        %5396 = vmatpush1.msra.mxu0 0.0
        %5397 = vmatprep.subr.mxu0 0.0
        %5398 = vmatpush1.msra.mxu0 0.0
        %5399 = vmatprep.subr.mxu0 0.0
        %5400 = vmatpush1.msra.mxu0 0.0
        %5401 = vmatprep.subr.mxu0 0.0
        %5402 = vmatpush1.msra.mxu0 0.0
        %5403 = vmatprep.subr.mxu0 0.0
        %5404 = vmatpush1.msra.mxu0 0.0
        %5405 = vmatprep.subr.mxu0 0.0
        %5406 = vmatpush1.msra.mxu0 0.0
        %5407 = vmatprep.subr.mxu0 0.0
        %5408 = vmatpush1.msra.mxu0 0.0
        %5409 = vmatprep.mubr.f32.mxu0 0.0
        %5410 = vmatmul.mubr.f32.gmra.mrb[0].mxu0 %v5340
        %v5411 = vpop.f32.mrb[0].mxu0
        %v5412 = vadd.f32 0.0, %v5411
        %v5413 = vpop.f32.mrb[0].mxu0
        %5414 = vdwg.mxu0
        %v5416 = vsel %vm1695, %v4255, 0
        %v5419 = vsel %vm4353, %v4348, 0
        %5421 = vmatprep.subr.mxu0 0.0
        %5422 = vmatpush1.msra.mxu0 %v5419
        %5423 = vmatprep.subr.mxu0 0.0
        %5424 = vmatpush1.msra.mxu0 0.0
        %5425 = vmatprep.subr.mxu0 0.0
        %5426 = vmatpush1.msra.mxu0 0.0
        %5427 = vmatprep.subr.mxu0 0.0
        %5428 = vmatpush1.msra.mxu0 0.0
        %5429 = vmatprep.subr.mxu0 0.0
        %5430 = vmatpush1.msra.mxu0 0.0
        %5431 = vmatprep.subr.mxu0 0.0
        %5432 = vmatpush1.msra.mxu0 0.0
        %5433 = vmatprep.subr.mxu0 0.0
        %5434 = vmatpush1.msra.mxu0 0.0
        %5435 = vmatprep.subr.mxu0 0.0
        %5436 = vmatpush1.msra.mxu0 0.0
        %5437 = vmatprep.subr.mxu0 0.0
        %5438 = vmatpush1.msra.mxu0 0.0
        %5439 = vmatprep.subr.mxu0 0.0
        %5440 = vmatpush1.msra.mxu0 0.0
        %5441 = vmatprep.subr.mxu0 0.0
        %5442 = vmatpush1.msra.mxu0 0.0
        %5443 = vmatprep.subr.mxu0 0.0
        %5444 = vmatpush1.msra.mxu0 0.0
        %5445 = vmatprep.subr.mxu0 0.0
        %5446 = vmatpush1.msra.mxu0 0.0
        %5447 = vmatprep.subr.mxu0 0.0
        %5448 = vmatpush1.msra.mxu0 0.0
        %5449 = vmatprep.subr.mxu0 0.0
        %5450 = vmatpush1.msra.mxu0 0.0
        %5451 = vmatprep.subr.mxu0 0.0
        %5452 = vmatpush1.msra.mxu0 0.0
        %5453 = vmatprep.subr.mxu0 0.0
        %5454 = vmatpush1.msra.mxu0 0.0
        %5455 = vmatprep.subr.mxu0 0.0
        %5456 = vmatpush1.msra.mxu0 0.0
        %5457 = vmatprep.subr.mxu0 0.0
        %5458 = vmatpush1.msra.mxu0 0.0
        %5459 = vmatprep.subr.mxu0 0.0
        %5460 = vmatpush1.msra.mxu0 0.0
        %5461 = vmatprep.subr.mxu0 0.0
        %5462 = vmatpush1.msra.mxu0 0.0
        %5463 = vmatprep.subr.mxu0 0.0
        %5464 = vmatpush1.msra.mxu0 0.0
        %5465 = vmatprep.subr.mxu0 0.0
        %5466 = vmatpush1.msra.mxu0 0.0
        %5467 = vmatprep.subr.mxu0 0.0
        %5468 = vmatpush1.msra.mxu0 0.0
        %5469 = vmatprep.subr.mxu0 0.0
        %5470 = vmatpush1.msra.mxu0 0.0
        %5471 = vmatprep.subr.mxu0 0.0
        %5472 = vmatpush1.msra.mxu0 0.0
        %5473 = vmatprep.subr.mxu0 0.0
        %5474 = vmatpush1.msra.mxu0 0.0
        %5475 = vmatprep.subr.mxu0 0.0
        %5476 = vmatpush1.msra.mxu0 0.0
        %5477 = vmatprep.subr.mxu0 0.0
        %5478 = vmatpush1.msra.mxu0 0.0
        %5479 = vmatprep.subr.mxu0 0.0
        %5480 = vmatpush1.msra.mxu0 0.0
        %5481 = vmatprep.subr.mxu0 0.0
        %5482 = vmatpush1.msra.mxu0 0.0
        %5483 = vmatprep.subr.mxu0 0.0
        %5484 = vmatpush1.msra.mxu0 0.0
        %5485 = vmatprep.mubr.f32.mxu0 0.0
        %5486 = vmatmul.mubr.f32.gmra.mrb[0].mxu0 %v5416
        %v5487 = vpop.f32.mrb[0].mxu0
        %v5488 = vadd.f32 0.0, %v5487
        %v5489 = vpop.f32.mrb[0].mxu0
        %5490 = vdwg.mxu0
        %v5492 = vsel %vm1695, %v4331, 0
        %v5495 = vsel %vm4353, %v4349, 0
        %5497 = vmatprep.subr.mxu0 0.0
        %5498 = vmatpush1.msra.mxu0 %v5495
        %5499 = vmatprep.subr.mxu0 0.0
        %5500 = vmatpush1.msra.mxu0 0.0
        %5501 = vmatprep.subr.mxu0 0.0
        %5502 = vmatpush1.msra.mxu0 0.0
        %5503 = vmatprep.subr.mxu0 0.0
        %5504 = vmatpush1.msra.mxu0 0.0
        %5505 = vmatprep.subr.mxu0 0.0
        %5506 = vmatpush1.msra.mxu0 0.0
        %5507 = vmatprep.subr.mxu0 0.0
        %5508 = vmatpush1.msra.mxu0 0.0
        %5509 = vmatprep.subr.mxu0 0.0
        %5510 = vmatpush1.msra.mxu0 0.0
        %5511 = vmatprep.subr.mxu0 0.0
        %5512 = vmatpush1.msra.mxu0 0.0
        %5513 = vmatprep.subr.mxu0 0.0
        %5514 = vmatpush1.msra.mxu0 0.0
        %5515 = vmatprep.subr.mxu0 0.0
        %5516 = vmatpush1.msra.mxu0 0.0
        %5517 = vmatprep.subr.mxu0 0.0
        %5518 = vmatpush1.msra.mxu0 0.0
        %5519 = vmatprep.subr.mxu0 0.0
        %5520 = vmatpush1.msra.mxu0 0.0
        %5521 = vmatprep.subr.mxu0 0.0
        %5522 = vmatpush1.msra.mxu0 0.0
        %5523 = vmatprep.subr.mxu0 0.0
        %5524 = vmatpush1.msra.mxu0 0.0
        %5525 = vmatprep.subr.mxu0 0.0
        %5526 = vmatpush1.msra.mxu0 0.0
        %5527 = vmatprep.subr.mxu0 0.0
        %5528 = vmatpush1.msra.mxu0 0.0
        %5529 = vmatprep.subr.mxu0 0.0
        %5530 = vmatpush1.msra.mxu0 0.0
        %5531 = vmatprep.subr.mxu0 0.0
        %5532 = vmatpush1.msra.mxu0 0.0
        %5533 = vmatprep.subr.mxu0 0.0
        %5534 = vmatpush1.msra.mxu0 0.0
        %5535 = vmatprep.subr.mxu0 0.0
        %5536 = vmatpush1.msra.mxu0 0.0
        %5537 = vmatprep.subr.mxu0 0.0
        %5538 = vmatpush1.msra.mxu0 0.0
        %5539 = vmatprep.subr.mxu0 0.0
        %5540 = vmatpush1.msra.mxu0 0.0
        %5541 = vmatprep.subr.mxu0 0.0
        %5542 = vmatpush1.msra.mxu0 0.0
        %5543 = vmatprep.subr.mxu0 0.0
        %5544 = vmatpush1.msra.mxu0 0.0
        %5545 = vmatprep.subr.mxu0 0.0
        %5546 = vmatpush1.msra.mxu0 0.0
        %5547 = vmatprep.subr.mxu0 0.0
        %5548 = vmatpush1.msra.mxu0 0.0
        %5549 = vmatprep.subr.mxu0 0.0
        %5550 = vmatpush1.msra.mxu0 0.0
        %5551 = vmatprep.subr.mxu0 0.0
        %5552 = vmatpush1.msra.mxu0 0.0
        %5553 = vmatprep.subr.mxu0 0.0
        %5554 = vmatpush1.msra.mxu0 0.0
        %5555 = vmatprep.subr.mxu0 0.0
        %5556 = vmatpush1.msra.mxu0 0.0
        %5557 = vmatprep.subr.mxu0 0.0
        %5558 = vmatpush1.msra.mxu0 0.0
        %5559 = vmatprep.subr.mxu0 0.0
        %5560 = vmatpush1.msra.mxu0 0.0
        %5561 = vmatprep.mubr.f32.mxu0 0.0
        %5562 = vmatmul.mubr.f32.gmra.mrb[0].mxu0 %v5492
        %v5563 = vpop.f32.mrb[0].mxu0
        %v5564 = vadd.f32 0.0, %v5563
        %v5565 = vpop.f32.mrb[0].mxu0
        %5566 = vdwg.mxu0
        %v5567 = vsel %vm412, %v4424, 0.0
        %v5568 = vsel %vm412, %v4500, 0.0
        %v5569 = vadd.f32 %v5567, %v5568
        %v5570 = vsel %vm412, %v4576, 0.0
        %v5571 = vadd.f32 %v5569, %v5570
        %v5572 = vsel %vm412, %v4652, 0.0
        %v5573 = vadd.f32 %v5571, %v5572
        %v5574 = vsel %vm412, %v4728, 0.0
        %v5575 = vadd.f32 %v5573, %v5574
        %v5576 = vsel %vm412, %v4804, 0.0
        %v5577 = vadd.f32 %v5575, %v5576
        %v5578 = vsel %vm412, %v4880, 0.0
        %v5579 = vadd.f32 %v5577, %v5578
        %v5580 = vsel %vm412, %v4956, 0.0
        %v5581 = vadd.f32 %v5579, %v5580
        %v5582 = vsel %vm412, %v5032, 0.0
        %v5583 = vadd.f32 %v5581, %v5582
        %v5584 = vsel %vm412, %v5108, 0.0
        %v5585 = vadd.f32 %v5583, %v5584
        %v5586 = vsel %vm412, %v5184, 0.0
        %v5587 = vadd.f32 %v5585, %v5586
        %v5588 = vsel %vm412, %v5260, 0.0
        %v5589 = vadd.f32 %v5587, %v5588
        %v5590 = vsel %vm412, %v5336, 0.0
        %v5591 = vadd.f32 %v5589, %v5590
        %v5592 = vsel %vm412, %v5412, 0.0
        %v5593 = vadd.f32 %v5591, %v5592
        %v5594 = vsel %vm412, %v5488, 0.0
        %v5595 = vadd.f32 %v5593, %v5594
        %v5596 = vsel %vm412, %v5564, 0.0
        %v5597 = vadd.f32 %v5595, %v5596
        %v5598 = vld [vmem:[%s3] sm:$0x1]
        %v5600 = vlaneseq
        %v5601 = vshrl.u32 %v5600, 7
        %v5602 = vsub.s32 0, %v5601
        %v5603 = vrot.slane %v5598, %v5602
        %v5605 = vadd.f32 %v5597, %v5603
        %v5606 = vadd.f32 %v409, %v440
        %v5607 = vadd.f32 %v5606, %v5605
        %v5608 = vld [vmem:[%s6] sm:$0x1]
        %v5609 = vld [vmem:[%s7] sm:$0x1]
        %v5610 = vsel %vm412, %v5607, 0.0
        %5611 = vadd.xlane.f32.xlu0 %v5610
        %v5612 = vpop.xlane.xlu0 %5611
        %v5613 = vmul.f32 %v5612, %v416
        %v5614 = vsub.f32 %v5607, %v5613
        %v5615 = vmul.f32 %v5614, %v5614
        %v5616 = vsel %vm412, %v5615, 0.0
        %5617 = vadd.xlane.f32.xlu0 %v5616
        %v5618 = vpop.xlane.xlu0 %5617
        %v5619 = vmul.f32 %v5618, %v416
        %v5620 = vadd.f32 %v5619, 1e-05
        %v5621 = vrsqrt.pop %v5620
        %v5622 = vmul.f32 %v5614, %v5621
        %v5624 = vlaneseq
        %v5625 = vshrl.u32 %v5624, 7
        %v5626 = vsub.s32 0, %v5625
        %v5627 = vrot.slane %v5608, %v5626
        %v5629 = vmul.f32 %v5622, %v5627
        %v5631 = vlaneseq
        %v5632 = vshrl.u32 %v5631, 7
        %v5633 = vsub.s32 0, %v5632
        %v5634 = vrot.slane %v5609, %v5633
        %v5636 = vadd.f32 %v5629, %v5634
        %v5637 = vld [vmem:[%s8] sm:$0xff]
        %v5638 = vld [vmem:[%s8 + $0x8] sm:$0xff]
        %v5639 = vld [vmem:[%s8 + $0x10] sm:$0xff]
        %v5640 = vld [vmem:[%s8 + $0x18] sm:$0xff]
        %v5641 = vld [vmem:[%s8 + $0x20] sm:$0xff]
        %v5642 = vld [vmem:[%s8 + $0x28] sm:$0xff]
        %v5643 = vld [vmem:[%s8 + $0x30] sm:$0xff]
        %v5644 = vld [vmem:[%s8 + $0x38] sm:$0xff]
        %v5645 = vld [vmem:[%s9] sm:$0x1]
        %v5647 = vlaneseq
        %v5648 = vshrl.u32 %v5647, 7
        %v5649 = vsub.s32 0, %v5648
        %v5650 = vrot.slane %v5645, %v5649
        %v5653 = vsel %vm412, %v5636, 0
        %5655 = vmatprep.subr.mxu0 0.0
        %5656 = vmatpush1.msra.mxu0 %v5637
        %5657 = vmatprep.subr.mxu0 0.0
        %5658 = vmatpush1.msra.mxu0 %v5638
        %5659 = vmatprep.subr.mxu0 0.0
        %5660 = vmatpush1.msra.mxu0 %v5639
        %5661 = vmatprep.subr.mxu0 0.0
        %5662 = vmatpush1.msra.mxu0 %v5640
        %5663 = vmatprep.subr.mxu0 0.0
        %5664 = vmatpush1.msra.mxu0 %v5641
        %5665 = vmatprep.subr.mxu0 0.0
        %5666 = vmatpush1.msra.mxu0 %v5642
        %5667 = vmatprep.subr.mxu0 0.0
        %5668 = vmatpush1.msra.mxu0 %v5643
        %5669 = vmatprep.subr.mxu0 0.0
        %5670 = vmatpush1.msra.mxu0 %v5644
        %5671 = vmatprep.subr.mxu0 0.0
        %5672 = vmatpush1.msra.mxu0 0.0
        %5673 = vmatprep.subr.mxu0 0.0
        %5674 = vmatpush1.msra.mxu0 0.0
        %5675 = vmatprep.subr.mxu0 0.0
        %5676 = vmatpush1.msra.mxu0 0.0
        %5677 = vmatprep.subr.mxu0 0.0
        %5678 = vmatpush1.msra.mxu0 0.0
        %5679 = vmatprep.subr.mxu0 0.0
        %5680 = vmatpush1.msra.mxu0 0.0
        %5681 = vmatprep.subr.mxu0 0.0
        %5682 = vmatpush1.msra.mxu0 0.0
        %5683 = vmatprep.subr.mxu0 0.0
        %5684 = vmatpush1.msra.mxu0 0.0
        %5685 = vmatprep.subr.mxu0 0.0
        %5686 = vmatpush1.msra.mxu0 0.0
        %5687 = vmatprep.subr.mxu0 0.0
        %5688 = vmatpush1.msra.mxu0 0.0
        %5689 = vmatprep.subr.mxu0 0.0
        %5690 = vmatpush1.msra.mxu0 0.0
        %5691 = vmatprep.subr.mxu0 0.0
        %5692 = vmatpush1.msra.mxu0 0.0
        %5693 = vmatprep.subr.mxu0 0.0
        %5694 = vmatpush1.msra.mxu0 0.0
        %5695 = vmatprep.subr.mxu0 0.0
        %5696 = vmatpush1.msra.mxu0 0.0
        %5697 = vmatprep.subr.mxu0 0.0
        %5698 = vmatpush1.msra.mxu0 0.0
        %5699 = vmatprep.subr.mxu0 0.0
        %5700 = vmatpush1.msra.mxu0 0.0
        %5701 = vmatprep.subr.mxu0 0.0
        %5702 = vmatpush1.msra.mxu0 0.0
        %5703 = vmatprep.subr.mxu0 0.0
        %5704 = vmatpush1.msra.mxu0 0.0
        %5705 = vmatprep.subr.mxu0 0.0
        %5706 = vmatpush1.msra.mxu0 0.0
        %5707 = vmatprep.subr.mxu0 0.0
        %5708 = vmatpush1.msra.mxu0 0.0
        %5709 = vmatprep.subr.mxu0 0.0
        %5710 = vmatpush1.msra.mxu0 0.0
        %5711 = vmatprep.subr.mxu0 0.0
        %5712 = vmatpush1.msra.mxu0 0.0
        %5713 = vmatprep.subr.mxu0 0.0
        %5714 = vmatpush1.msra.mxu0 0.0
        %5715 = vmatprep.subr.mxu0 0.0
        %5716 = vmatpush1.msra.mxu0 0.0
        %5717 = vmatprep.subr.mxu0 0.0
        %5718 = vmatpush1.msra.mxu0 0.0
        %5719 = vmatprep.mubr.f32.mxu0 0.0
        %5720 = vmatmul.mubr.f32.gmra.mrb[0].mxu0 %v5653
        %v5721 = vpop.f32.mrb[0].mxu0
        %v5722 = vadd.f32 %v5650, %v5721
        %v5723 = vpop.f32.mrb[0].mxu0
        %5724 = vdwg.mxu0
        %v5725 = vld [vmem:[%s10] sm:$0xff]
        %v5726 = vld [vmem:[%s10 + $0x8] sm:$0xff]
        %v5727 = vld [vmem:[%s10 + $0x10] sm:$0xff]
        %v5728 = vld [vmem:[%s10 + $0x18] sm:$0xff]
        %v5729 = vld [vmem:[%s10 + $0x20] sm:$0xff]
        %v5730 = vld [vmem:[%s10 + $0x28] sm:$0xff]
        %v5731 = vld [vmem:[%s10 + $0x30] sm:$0xff]
        %v5732 = vld [vmem:[%s10 + $0x38] sm:$0xff]
        %v5733 = vld [vmem:[%s11] sm:$0x1]
        %v5735 = vlaneseq
        %v5736 = vshrl.u32 %v5735, 7
        %v5737 = vsub.s32 0, %v5736
        %v5738 = vrot.slane %v5733, %v5737
        %5740 = vmatprep.subr.mxu0 0.0
        %5741 = vmatpush1.msra.mxu0 %v5725
        %5742 = vmatprep.subr.mxu0 0.0
        %5743 = vmatpush1.msra.mxu0 %v5726
        %5744 = vmatprep.subr.mxu0 0.0
        %5745 = vmatpush1.msra.mxu0 %v5727
        %5746 = vmatprep.subr.mxu0 0.0
        %5747 = vmatpush1.msra.mxu0 %v5728
        %5748 = vmatprep.subr.mxu0 0.0
        %5749 = vmatpush1.msra.mxu0 %v5729
        %5750 = vmatprep.subr.mxu0 0.0
        %5751 = vmatpush1.msra.mxu0 %v5730
        %5752 = vmatprep.subr.mxu0 0.0
        %5753 = vmatpush1.msra.mxu0 %v5731
        %5754 = vmatprep.subr.mxu0 0.0
        %5755 = vmatpush1.msra.mxu0 %v5732
        %5756 = vmatprep.subr.mxu0 0.0
        %5757 = vmatpush1.msra.mxu0 0.0
        %5758 = vmatprep.subr.mxu0 0.0
        %5759 = vmatpush1.msra.mxu0 0.0
        %5760 = vmatprep.subr.mxu0 0.0
        %5761 = vmatpush1.msra.mxu0 0.0
        %5762 = vmatprep.subr.mxu0 0.0
        %5763 = vmatpush1.msra.mxu0 0.0
        %5764 = vmatprep.subr.mxu0 0.0
        %5765 = vmatpush1.msra.mxu0 0.0
        %5766 = vmatprep.subr.mxu0 0.0
        %5767 = vmatpush1.msra.mxu0 0.0
        %5768 = vmatprep.subr.mxu0 0.0
        %5769 = vmatpush1.msra.mxu0 0.0
        %5770 = vmatprep.subr.mxu0 0.0
        %5771 = vmatpush1.msra.mxu0 0.0
        %5772 = vmatprep.subr.mxu0 0.0
        %5773 = vmatpush1.msra.mxu0 0.0
        %5774 = vmatprep.subr.mxu0 0.0
        %5775 = vmatpush1.msra.mxu0 0.0
        %5776 = vmatprep.subr.mxu0 0.0
        %5777 = vmatpush1.msra.mxu0 0.0
        %5778 = vmatprep.subr.mxu0 0.0
        %5779 = vmatpush1.msra.mxu0 0.0
        %5780 = vmatprep.subr.mxu0 0.0
        %5781 = vmatpush1.msra.mxu0 0.0
        %5782 = vmatprep.subr.mxu0 0.0
        %5783 = vmatpush1.msra.mxu0 0.0
        %5784 = vmatprep.subr.mxu0 0.0
        %5785 = vmatpush1.msra.mxu0 0.0
        %5786 = vmatprep.subr.mxu0 0.0
        %5787 = vmatpush1.msra.mxu0 0.0
        %5788 = vmatprep.subr.mxu0 0.0
        %5789 = vmatpush1.msra.mxu0 0.0
        %5790 = vmatprep.subr.mxu0 0.0
        %5791 = vmatpush1.msra.mxu0 0.0
        %5792 = vmatprep.subr.mxu0 0.0
        %5793 = vmatpush1.msra.mxu0 0.0
        %5794 = vmatprep.subr.mxu0 0.0
        %5795 = vmatpush1.msra.mxu0 0.0
        %5796 = vmatprep.subr.mxu0 0.0
        %5797 = vmatpush1.msra.mxu0 0.0
        %5798 = vmatprep.subr.mxu0 0.0
        %5799 = vmatpush1.msra.mxu0 0.0
        %5800 = vmatprep.subr.mxu0 0.0
        %5801 = vmatpush1.msra.mxu0 0.0
        %5802 = vmatprep.subr.mxu0 0.0
        %5803 = vmatpush1.msra.mxu0 0.0
        %5804 = vmatprep.mubr.f32.mxu0 0.0
        %5805 = vmatmul.mubr.f32.gmra.mrb[0].mxu0 %v5653
        %v5806 = vpop.f32.mrb[0].mxu0
        %v5807 = vadd.f32 %v5738, %v5806
        %v5808 = vpop.f32.mrb[0].mxu0
        %5809 = vdwg.mxu0
        %v5810 = vmul.f32 %v5807, 0.5
        %v5811 = vmul.f32 %v5807, 0.70710677
        %v5812 = verf.f32.pop %v5811
        %v5813 = vadd.f32 %v5812, 1.0
        %v5814 = vmul.f32 %v5810, %v5813
        %v5815 = vmul.f32 %v5722, %v5814
        %v5816 = vadd.f32 %v5607, %v5815
        %5817 = vst.msk [vmem:[%s404] sm:$0xff] %vm412, %v5816
        %s5818 = sand.u32 %s291, 1
        %s5819 = scalar_lea.sflag [#allocation3], %s5818
        %s5820 = sand.u32 %s291, 1
        %s5821 = smul.addr %s5820, 8
        %s5822 = scalar_lea.vmem [#allocation2], %s5821
        // Predicated region
        $region69: #{tpu_custom_call.1} parent=67 // pred_check
          %p5823 = pneg %p301
        $region70: #{tpu_custom_call.1} parent=67 // pred_check_branch
          %5825 = sbr.rel (%p5823) target = $region72
        $region71: #{tpu_custom_call.1} parent=67 // pred_region
          %s5827 = ssub.s32 128, 128
          %5828 = vsyncadd %s5819, %s5827
          %s5829 = smul.addr %s26, 128
          %s5830 = scalar_lea.hbm %s12, %s5829
          %s5832 = sshll.u32 %s5822, 4
          %s5833 = int_to_ptr.vmem [resolvable:$true] %s5832
          %5835 = dma.vmem_to_hbm [thread:$0]  %s5833, 128, %s5830, %s5819
        $region72: #{tpu_custom_call.1} parent=67 // pred_fallthru
          _
      $region68: #{tpu_custom_call.1} parent=5 // pred_fallthru
        _
      %p5836 = scmp.le.s32.totalorder 2, %s21
      // Predicated region
      $region73: #{tpu_custom_call.1} parent=5 // pred_check
        %p5837 = pneg %p5836
      $region74: #{tpu_custom_call.1} parent=5 // pred_check_branch
        %5839 = sbr.rel (%p5837) target = $region76
      $region75: #{tpu_custom_call.1} parent=5 // pred_region
        %s5840 = ssub.s32 %s21, 2
        // Predicated region
        $region77: #{tpu_custom_call.1} parent=75 // pred_check
          %p5841 = pneg %p307
        $region78: #{tpu_custom_call.1} parent=75 // pred_check_branch
          %5843 = sbr.rel (%p5841) target = $region80
        $region79: #{tpu_custom_call.1} parent=75 // pred_region
          %s5844 = sand.u32 %s292, 1
          %s5845 = scalar_lea.sflag [#allocation3], %s5844
          %s5846 = sand.u32 %s292, 1
          %s5847 = smul.addr %s5846, 8
          %s5848 = scalar_lea.vmem [#allocation2], %s5847
          %5849 = dma.done %s5845, 128
        $region80: #{tpu_custom_call.1} parent=75 // pred_fallthru
          _
      $region76: #{tpu_custom_call.1} parent=5 // pred_fallthru
        _
    $region6: #{tpu_custom_call.1} parent=1 // loop_footer
      %s25 = sadd.s32 1, %s21
    $region7: #{tpu_custom_call.1} parent=1 // loop_footer_branch
      %20 = sbr.rel target = $region3
    $region8: #{tpu_custom_call.1} parent=1 // loop_exit
      _
    %5850 = vsyncpa [#allocation3], 1
    %s5851 = scalar_lea.sflag [#allocation3], 1
    %5852 = vsyncpa %s5851, 1

</llo_original>
